<compile_context>
chip_gen: v6e
topology: v6e:2x2x1
jax: 0.10.0
libtpu: 0.0.40
codegen_flags: <defaults>
</compile_context>

<pallas_src>
import functools

import jax
import jax.numpy as jnp
import numpy as np
from jax import lax
from jax.experimental import pallas as pl
from jax.experimental.pallas import tpu as pltpu


def _round_up(x, m):
    return (x + m - 1) // m * m


def _device_vmem_bytes():
    try:
        return int(pltpu.get_tpu_info().vmem_capacity_bytes)
    except Exception:
        return 64 << 20  # conservative fallback (v7x per-TC VMEM)


# ----------------------------- Pallas kernel ------------------------------- #
def _bigru_heads_kernel(gi_ref,        # (T*Bp, 6*Hp) precomputed x-proj (+ folded biases)
                        whh_ref,       # (2*Hp, 6*Hp) block-diag [Whh_f 0; 0 Whh_b]
                        bhhn_ref,      # (1, 2*Hp)    [b_hh_n fwd | b_hh_n bwd]
                        whead_ref,     # (2*Hp, Cp)   fused pos|tag head
                        bhead_ref,     # (1, Cp)
                        out_ref,       # (T*Bp, Cp)
                        h_scr,         # (T*Bp, 2*Hp) scratch: [h_fwd | h_bwd] per step
                        *, T, Bp, Hp):
    # Hoisted bias broadcasts (only the n-gate hidden bias survives folding).
    bhhn_f = jnp.broadcast_to(bhhn_ref[0:1, 0:Hp], (Bp, Hp))
    bhhn_b = jnp.broadcast_to(bhhn_ref[0:1, Hp:2 * Hp], (Bp, Hp))

    h0 = jnp.zeros((Bp, 2 * Hp), jnp.float32)

    # Fused fwd/bwd recurrence: fwd advances t = s, bwd advances t = T-1-s.
    # One block-diagonal MXU dot per step; everything else is VPU/EUP.
    def body(s, h_cat):
        rf = pl.multiple_of(s * Bp, Bp)
        rb = pl.multiple_of((T - 1 - s) * Bp, Bp)

        # Single recurrent matmul for both directions (RHS read from VMEM ref,
        # not held across the unrolled loop -> no register-file spill).
        gh = jnp.dot(h_cat, whh_ref[...], preferred_element_type=jnp.float32)  # (Bp, 6Hp)

        gi_f = gi_ref[pl.ds(rf, Bp), pl.ds(0, 3 * Hp)]          # (Bp, 3Hp)
        gi_b = gi_ref[pl.ds(rb, Bp), pl.ds(3 * Hp, 3 * Hp)]     # (Bp, 3Hp)

        # Forward direction (gate order r, z, n; r/z hidden biases pre-folded).
        r_f = jax.nn.sigmoid(gi_f[:, 0:Hp] + gh[:, 0:Hp])
        z_f = jax.nn.sigmoid(gi_f[:, Hp:2 * Hp] + gh[:, Hp:2 * Hp])
        n_f = jnp.tanh(gi_f[:, 2 * Hp:3 * Hp] + r_f * (gh[:, 2 * Hp:3 * Hp] + bhhn_f))
        h_f = (1.0 - z_f) * n_f + z_f * h_cat[:, 0:Hp]

        # Backward direction.
        r_b = jax.nn.sigmoid(gi_b[:, 0:Hp] + gh[:, 3 * Hp:4 * Hp])
        z_b = jax.nn.sigmoid(gi_b[:, Hp:2 * Hp] + gh[:, 4 * Hp:5 * Hp])
        n_b = jnp.tanh(gi_b[:, 2 * Hp:3 * Hp] + r_b * (gh[:, 5 * Hp:6 * Hp] + bhhn_b))
        h_b = (1.0 - z_b) * n_b + z_b * h_cat[:, Hp:2 * Hp]

        # Lane-aligned (128-boundary) stores into the packed hidden scratch.
        h_scr[pl.ds(rf, Bp), pl.ds(0, Hp)] = h_f
        h_scr[pl.ds(rb, Bp), pl.ds(Hp, Hp)] = h_b
        return jnp.concatenate([h_f, h_b], axis=-1)

    lax.fori_loop(0, T, body, h0, unroll=True)

    # Fused heads (off the serial path): one lane-dense (T*Bp,2Hp)@(2Hp,Cp) matmul.
    out_ref[...] = (
        jnp.dot(h_scr[...], whead_ref[...], preferred_element_type=jnp.float32)
        + bhead_ref[...]
    )


# --------------------------- One-time param packing ------------------------- #
def _pad_gate_cols(w, H, Hp):
    """(rows, 3H) with gates [r|z|n] -> (rows, 3*Hp), each gate lane-aligned."""
    pad = [(0, 0)] * (w.ndim - 1) + [(0, Hp - H)]
    return jnp.concatenate(
        [jnp.pad(w[..., k * H:(k + 1) * H], pad) for k in range(3)], axis=-1)


def pack_params(params):
    """Hoists ALL padding/packing/bias-folding out of the per-call hot path."""
    H = params["whh_f"].shape[0]
    P = params["wpos"].shape[1]
    Q = params["wtag"].shape[1]
    Hp = _round_up(H, 128)           # lane-aligned hidden (gate slabs full-vreg)
    Cp = _round_up(P + Q, 128)       # lane-dense fused head output

    wih_f = _pad_gate_cols(params["wih_f"], H, Hp)   # (E, 3Hp)
    wih_b = _pad_gate_cols(params["wih_b"], H, Hp)
    bih_f = _pad_gate_cols(params["bih_f"], H, Hp)   # (1, 3Hp)
    bih_b = _pad_gate_cols(params["bih_b"], H, Hp)
    bhh_f = _pad_gate_cols(params["bhh_f"], H, Hp)
    bhh_b = _pad_gate_cols(params["bhh_b"], H, Hp)

    # Fold b_hh_r and b_hh_z into the input-side bias (b_hh_n stays: it is
    # inside the r * (.) term).
    def rz_only(b):
        return jnp.concatenate([b[:, :2 * Hp], jnp.zeros((1, Hp), jnp.float32)], axis=-1)

    bias = jnp.concatenate([bih_f + rz_only(bhh_f), bih_b + rz_only(bhh_b)], axis=-1)  # (1, 6Hp)
    wih = jnp.concatenate([wih_f, wih_b], axis=-1)                                      # (E, 6Hp)

    # Fused projection table: row v == embedding[v] @ W_ih + folded biases (exact).
    emb_proj = params["embedding"].astype(jnp.float32) @ wih + bias                     # (V, 6Hp)

    def pad_whh(w):
        w = _pad_gate_cols(w, H, Hp)                  # (H, 3Hp)
        return jnp.pad(w, ((0, Hp - H), (0, 0)))      # (Hp, 3Hp)

    zeros_blk = jnp.zeros((Hp, 3 * Hp), jnp.float32)
    whh_bd = jnp.concatenate(
        [jnp.concatenate([pad_whh(params["whh_f"]), zeros_blk], axis=1),
         jnp.concatenate([zeros_blk, pad_whh(params["whh_b"])], axis=1)], axis=0)  # (2Hp, 6Hp)

    bhh_n = jnp.concatenate([bhh_f[:, 2 * Hp:3 * Hp], bhh_b[:, 2 * Hp:3 * Hp]], axis=-1)  # (1, 2Hp)

    whead = jnp.concatenate([params["wpos"], params["wtag"]], axis=1)    # (2H, P+Q)
    whead = jnp.pad(whead, ((0, 0), (0, Cp - (P + Q))))                  # (2H, Cp)
    whead_cat = jnp.concatenate(
        [jnp.pad(whead[:H], ((0, Hp - H), (0, 0))),
         jnp.pad(whead[H:], ((0, Hp - H), (0, 0)))], axis=0)             # (2Hp, Cp)
    bhead = jnp.pad(jnp.concatenate([params["bpos"], params["btag"]], axis=1),
                    ((0, 0), (0, Cp - (P + Q))))                         # (1, Cp)

    return {
        "emb_proj": emb_proj,
        "whh_bd": whh_bd,
        "bhh_n": bhh_n,
        "whead": whead_cat,
        "bhead": bhead,
    }


# ------------------------------ Forward ------------------------------------- #
@functools.partial(jax.jit, static_argnames=("num_pos", "num_tag"))
def lstm_model_forward(x_ids, packed, *, num_pos, num_tag):
    """Forward pass of LSTMModel (GRU), batch_first like PyTorch.

    x_ids: (B, T) int32 token ids.  packed: output of pack_params().
    Returns (pos_out, tag_out) with shapes (B, T, num_pos) and (B, T, num_tag).
    """
    B, T = x_ids.shape
    G6 = packed["emb_proj"].shape[1]     # 6*Hp
    Hp = G6 // 6
    Cp = packed["whead"].shape[1]
    Bp = _round_up(B, 8)                 # sublane-aligned batch

    # Only per-call glue: gather the fused table time-major, pad batch, flatten.
    gi = packed["emb_proj"][x_ids.T]                       # (T, B, 6Hp)
    gi = jnp.pad(gi, ((0, 0), (0, Bp - B), (0, 0)))        # (T, Bp, 6Hp)
    gi2d = gi.reshape(T * Bp, G6)                          # (T*Bp, 6Hp)

    # VMEM budget (f32 bytes) with 2x headroom, clamped to device capacity.
    total_bytes = 4 * (
        T * Bp * (G6 + 2 * Hp + Cp)            # gi, h scratch, out
        + 2 * Hp * G6 + 2 * Hp * Cp            # whh_bd, whead
        + 2 * Hp + Cp                          # biases
    )
    vmem_cap = _device_vmem_bytes()
    vmem_limit = int(min(max(2 * total_bytes, 8 << 20),
                         max(vmem_cap - (8 << 20), 16 << 20)))

    vmem = pl.BlockSpec(memory_space=pltpu.MemorySpace.VMEM)
    kernel = functools.partial(_bigru_heads_kernel, T=T, Bp=Bp, Hp=Hp)

    out2d = pl.pallas_call(
        kernel,
        out_shape=jax.ShapeDtypeStruct((T * Bp, Cp), jnp.float32),
        in_specs=[vmem] * 5,
        out_specs=vmem,
        scratch_shapes=[pltpu.VMEM((T * Bp, 2 * Hp), jnp.float32)],  # packed [hf|hb]
        compiler_params=pltpu.CompilerParams(vmem_limit_bytes=vmem_limit),
    )(gi2d, packed["whh_bd"], packed["bhh_n"], packed["whead"], packed["bhead"])

    out = out2d.reshape(T, Bp, Cp)[:, :B, :]     # (T, B, Cp)
    out = jnp.transpose(out, (1, 0, 2))          # (B, T, Cp)
    return out[..., :num_pos], out[..., num_pos:num_pos + num_tag]


# --------------------------- Pure-JAX reference ----------------------------- #
def _gru_dir_ref(x, wih, whh, bih, bhh, reverse):
    H = whh.shape[0]

    def step(h, x_t):
        gi = x_t @ wih + bih
        gh = h @ whh + bhh
        r = jax.nn.sigmoid(gi[:, :H] + gh[:, :H])
        z = jax.nn.sigmoid(gi[:, H:2 * H] + gh[:, H:2 * H])
        n = jnp.tanh(gi[:, 2 * H:] + r * gh[:, 2 * H:])
        h = (1.0 - z) * n + z * h
        return h, h

    xs = jnp.transpose(x, (1, 0, 2))
    if reverse:
        xs = xs[::-1]
    h0 = jnp.zeros((x.shape[0], H), jnp.float32)
    _, hs = lax.scan(step, h0, xs)
    if reverse:
        hs = hs[::-1]
    return jnp.transpose(hs, (1, 0, 2))


def reference_forward(x_ids, params):
    emb = params["embedding"][x_ids].astype(jnp.float32)
    hf = _gru_dir_ref(emb, params["wih_f"], params["whh_f"],
                      params["bih_f"], params["bhh_f"], reverse=False)
    hb = _gru_dir_ref(emb, params["wih_b"], params["whh_b"],
                      params["bih_b"], params["bhh_b"], reverse=True)
    h = jnp.concatenate([hf, hb], axis=-1)
    pos = h @ params["wpos"] + params["bpos"]
    tag = h @ params["wtag"] + params["btag"]
    return pos, tag


# ------------------------------ Param init ---------------------------------- #
def init_params(key, vocab_size, embed_dims, hidden_dims, num_pos_class, num_tag_class):
    ks = jax.random.split(key, 16)
    H, E = hidden_dims, embed_dims
    bound = 1.0 / np.sqrt(H)

    def u(k, shape):
        return jax.random.uniform(k, shape, jnp.float32, -bound, bound)

    return {
        "embedding": jax.random.normal(ks[0], (vocab_size, E), jnp.float32),
        # PyTorch stores (3H, E)/(3H, H); we store the transpose for x @ W.
        "wih_f": u(ks[1], (E, 3 * H)),
        "whh_f": u(ks[2], (H, 3 * H)),
        "bih_f": u(ks[3], (1, 3 * H)),
        "bhh_f": u(ks[4], (1, 3 * H)),
        "wih_b": u(ks[5], (E, 3 * H)),
        "whh_b": u(ks[6], (H, 3 * H)),
        "bih_b": u(ks[7], (1, 3 * H)),
        "bhh_b": u(ks[8], (1, 3 * H)),
        "wpos": u(ks[9], (2 * H, num_pos_class)),
        "bpos": u(ks[10], (1, num_pos_class)),
        "wtag": u(ks[11], (2 * H, num_tag_class)),
        "btag": u(ks[12], (1, num_tag_class)),
    }


# --------------------------------- Main ------------------------------------- #
if __name__ == "__main__":
    # Config: vocab=50, embed=32, hidden=32, num_layers=1, bidirectional=True.
    # TODO(synk): dropout is a no-op (inference semantics); num_layers > 1 GRU
    # stacking is not instantiated (num_layers=1).
    VOCAB, EMBED, HIDDEN = 50, 32, 32
    NUM_POS, NUM_TAG = 12, 9
    B, T = 2, 8

    key = jax.random.PRNGKey(0)
    k_param, k_x = jax.random.split(key)
    params = init_params(k_param, VOCAB, EMBED, HIDDEN, NUM_POS, NUM_TAG)
    x_ids = jax.random.randint(k_x, (B, T), 0, VOCAB, dtype=jnp.int32)

    packed = jax.tree_util.tree_map(jax.block_until_ready, pack_params(params))

    pos_out, tag_out = lstm_model_forward(x_ids, packed, num_pos=NUM_POS, num_tag=NUM_TAG)
    pos_out = jax.block_until_ready(pos_out)
    tag_out = jax.block_until_ready(tag_out)

    pos_ref, tag_ref = reference_forward(x_ids, params)
    assert pos_out.shape == (B, T, NUM_POS) and tag_out.shape == (B, T, NUM_TAG)
    np.testing.assert_allclose(np.asarray(pos_out), np.asarray(pos_ref), rtol=1e-5, atol=1e-5)
    np.testing.assert_allclose(np.asarray(tag_out), np.asarray(tag_ref), rtol=1e-5, atol=1e-5)

    print("KERNEL_OK")
</pallas_src>

<mosaic_0001>
module attributes {stable_mosaic.version = 11 : i64} {
  func.func @_bigru_heads_kernel(%arg0: memref<64x768xf32, #tpu.memory_space<vmem>>, %arg1: memref<256x768xf32, #tpu.memory_space<vmem>>, %arg2: memref<1x256xf32, #tpu.memory_space<vmem>>, %arg3: memref<256x128xf32, #tpu.memory_space<vmem>>, %arg4: memref<1x128xf32, #tpu.memory_space<vmem>>, %arg5: memref<64x128xf32, #tpu.memory_space<vmem>>, %arg6: memref<64x256xf32, #tpu.memory_space<vmem>>) attributes {dimension_semantics = [], scalar_prefetch = 0 : i64, scratch_operands = 1 : i64, tpu.core_type = #tpu.core_type<tc>} {
    %c0 = arith.constant 0 : index
    %c0_0 = arith.constant 0 : index
    %0 = vector.load %arg2[%c0, %c0_0] : memref<1x256xf32, #tpu.memory_space<vmem>>, vector<1x128xf32>
    %1 = vector.shape_cast %0 : vector<1x128xf32> to vector<1x128xf32>
    %2 = vector.broadcast %1 : vector<1x128xf32> to vector<8x128xf32>
    %c0_1 = arith.constant 0 : index
    %c128 = arith.constant 128 : index
    %3 = vector.load %arg2[%c0_1, %c128] : memref<1x256xf32, #tpu.memory_space<vmem>>, vector<1x128xf32>
    %4 = vector.shape_cast %3 : vector<1x128xf32> to vector<1x128xf32>
    %5 = vector.broadcast %4 : vector<1x128xf32> to vector<8x128xf32>
    %cst = arith.constant 0.000000e+00 : f32
    %6 = vector.broadcast %cst : f32 to vector<8x256xf32>
    %c0_i32 = arith.constant 0 : i32
    %c8_i32 = arith.constant 8 : i32
    %7 = arith.muli %c0_i32, %c8_i32 : i32
    %8 = tpu.assume_multiple %7, 8 : i32
    %c7_i32 = arith.constant 7 : i32
    %9 = arith.subi %c7_i32, %c0_i32 : i32
    %c8_i32_2 = arith.constant 8 : i32
    %10 = arith.muli %9, %c8_i32_2 : i32
    %11 = tpu.assume_multiple %10, 8 : i32
    %c0_3 = arith.constant 0 : index
    %c0_4 = arith.constant 0 : index
    %12 = vector.load %arg1[%c0_3, %c0_4] : memref<256x768xf32, #tpu.memory_space<vmem>>, vector<256x768xf32>
    %cst_5 = arith.constant dense<0.000000e+00> : vector<8x768xf32>
    %13 = tpu.matmul %6, %12, %cst_5 {dimension_numbers = #tpu.dot_dimension_numbers<[1], [0], [0], [1], [0, 0, 1, 1], [], []>} : vector<8x256xf32>, vector<256x768xf32>, vector<8x768xf32> -> vector<8x768xf32>
    %14 = arith.index_cast %8 : i32 to index
    %c0_6 = arith.constant 0 : index
    %15 = vector.load %arg0[%14, %c0_6] : memref<64x768xf32, #tpu.memory_space<vmem>>, vector<8x384xf32>
    %16 = arith.index_cast %11 : i32 to index
    %c384 = arith.constant 384 : index
    %17 = vector.load %arg0[%16, %c384] : memref<64x768xf32, #tpu.memory_space<vmem>>, vector<8x384xf32>
    %18 = vector.extract_strided_slice %15 {offsets = [0, 0], sizes = [8, 128], strides = [1, 1]} : vector<8x384xf32> to vector<8x128xf32>
    %19 = vector.extract_strided_slice %13 {offsets = [0, 0], sizes = [8, 128], strides = [1, 1]} : vector<8x768xf32> to vector<8x128xf32>
    %20 = arith.addf %18, %19 : vector<8x128xf32>
    %21 = arith.negf %20 : vector<8x128xf32>
    %22 = math.exp %21 : vector<8x128xf32>
    %cst_7 = arith.constant 1.000000e+00 : f32
    %23 = vector.broadcast %cst_7 : f32 to vector<8x128xf32>
    %24 = arith.addf %23, %22 : vector<8x128xf32>
    %25 = arith.divf %23, %24 : vector<8x128xf32>
    %26 = vector.extract_strided_slice %15 {offsets = [0, 128], sizes = [8, 128], strides = [1, 1]} : vector<8x384xf32> to vector<8x128xf32>
    %27 = vector.extract_strided_slice %13 {offsets = [0, 128], sizes = [8, 128], strides = [1, 1]} : vector<8x768xf32> to vector<8x128xf32>
    %28 = arith.addf %26, %27 : vector<8x128xf32>
    %29 = arith.negf %28 : vector<8x128xf32>
    %30 = math.exp %29 : vector<8x128xf32>
    %cst_8 = arith.constant 1.000000e+00 : f32
    %31 = vector.broadcast %cst_8 : f32 to vector<8x128xf32>
    %32 = arith.addf %31, %30 : vector<8x128xf32>
    %33 = arith.divf %31, %32 : vector<8x128xf32>
    %34 = vector.extract_strided_slice %15 {offsets = [0, 256], sizes = [8, 128], strides = [1, 1]} : vector<8x384xf32> to vector<8x128xf32>
    %35 = vector.extract_strided_slice %13 {offsets = [0, 256], sizes = [8, 128], strides = [1, 1]} : vector<8x768xf32> to vector<8x128xf32>
    %36 = arith.addf %35, %2 : vector<8x128xf32>
    %37 = arith.mulf %25, %36 : vector<8x128xf32>
    %38 = arith.addf %34, %37 : vector<8x128xf32>
    %39 = math.tanh %38 : vector<8x128xf32>
    %cst_9 = arith.constant 1.000000e+00 : f32
    %40 = vector.broadcast %cst_9 : f32 to vector<8x128xf32>
    %41 = arith.subf %40, %33 : vector<8x128xf32>
    %42 = arith.mulf %41, %39 : vector<8x128xf32>
    %43 = vector.extract_strided_slice %6 {offsets = [0, 0], sizes = [8, 128], strides = [1, 1]} : vector<8x256xf32> to vector<8x128xf32>
    %44 = arith.mulf %33, %43 : vector<8x128xf32>
    %45 = arith.addf %42, %44 : vector<8x128xf32>
    %46 = vector.extract_strided_slice %17 {offsets = [0, 0], sizes = [8, 128], strides = [1, 1]} : vector<8x384xf32> to vector<8x128xf32>
    %47 = vector.extract_strided_slice %13 {offsets = [0, 384], sizes = [8, 128], strides = [1, 1]} : vector<8x768xf32> to vector<8x128xf32>
    %48 = arith.addf %46, %47 : vector<8x128xf32>
    %49 = arith.negf %48 : vector<8x128xf32>
    %50 = math.exp %49 : vector<8x128xf32>
    %cst_10 = arith.constant 1.000000e+00 : f32
    %51 = vector.broadcast %cst_10 : f32 to vector<8x128xf32>
    %52 = arith.addf %51, %50 : vector<8x128xf32>
    %53 = arith.divf %51, %52 : vector<8x128xf32>
    %54 = vector.extract_strided_slice %17 {offsets = [0, 128], sizes = [8, 128], strides = [1, 1]} : vector<8x384xf32> to vector<8x128xf32>
    %55 = vector.extract_strided_slice %13 {offsets = [0, 512], sizes = [8, 128], strides = [1, 1]} : vector<8x768xf32> to vector<8x128xf32>
    %56 = arith.addf %54, %55 : vector<8x128xf32>
    %57 = arith.negf %56 : vector<8x128xf32>
    %58 = math.exp %57 : vector<8x128xf32>
    %cst_11 = arith.constant 1.000000e+00 : f32
    %59 = vector.broadcast %cst_11 : f32 to vector<8x128xf32>
    %60 = arith.addf %59, %58 : vector<8x128xf32>
    %61 = arith.divf %59, %60 : vector<8x128xf32>
    %62 = vector.extract_strided_slice %17 {offsets = [0, 256], sizes = [8, 128], strides = [1, 1]} : vector<8x384xf32> to vector<8x128xf32>
    %63 = vector.extract_strided_slice %13 {offsets = [0, 640], sizes = [8, 128], strides = [1, 1]} : vector<8x768xf32> to vector<8x128xf32>
    %64 = arith.addf %63, %5 : vector<8x128xf32>
    %65 = arith.mulf %53, %64 : vector<8x128xf32>
    %66 = arith.addf %62, %65 : vector<8x128xf32>
    %67 = math.tanh %66 : vector<8x128xf32>
    %cst_12 = arith.constant 1.000000e+00 : f32
    %68 = vector.broadcast %cst_12 : f32 to vector<8x128xf32>
    %69 = arith.subf %68, %61 : vector<8x128xf32>
    %70 = arith.mulf %69, %67 : vector<8x128xf32>
    %71 = vector.extract_strided_slice %6 {offsets = [0, 128], sizes = [8, 128], strides = [1, 1]} : vector<8x256xf32> to vector<8x128xf32>
    %72 = arith.mulf %61, %71 : vector<8x128xf32>
    %73 = arith.addf %70, %72 : vector<8x128xf32>
    %74 = arith.index_cast %8 : i32 to index
    %c0_13 = arith.constant 0 : index
    %75 = vector.load %arg6[%74, %c0_13] : memref<64x256xf32, #tpu.memory_space<vmem>>, vector<8x128xf32>
    tpu.vector_store %arg6[%74, %c0_13], %45 {strides = array<i32>} : memref<64x256xf32, #tpu.memory_space<vmem>>, vector<8x128xf32>,
    %76 = arith.index_cast %11 : i32 to index
    %c128_14 = arith.constant 128 : index
    %77 = vector.load %arg6[%76, %c128_14] : memref<64x256xf32, #tpu.memory_space<vmem>>, vector<8x128xf32>
    tpu.vector_store %arg6[%76, %c128_14], %73 {strides = array<i32>} : memref<64x256xf32, #tpu.memory_space<vmem>>, vector<8x128xf32>,
    %78 = tpu.concatenate %45, %73 in 1 : vector<8x128xf32>, vector<8x128xf32> -> vector<8x256xf32>
    %c1_i32 = arith.constant 1 : i32
    %c8_i32_15 = arith.constant 8 : i32
    %79 = arith.muli %c1_i32, %c8_i32_15 : i32
    %80 = tpu.assume_multiple %79, 8 : i32
    %c7_i32_16 = arith.constant 7 : i32
    %81 = arith.subi %c7_i32_16, %c1_i32 : i32
    %c8_i32_17 = arith.constant 8 : i32
    %82 = arith.muli %81, %c8_i32_17 : i32
    %83 = tpu.assume_multiple %82, 8 : i32
    %c0_18 = arith.constant 0 : index
    %c0_19 = arith.constant 0 : index
    %84 = vector.load %arg1[%c0_18, %c0_19] : memref<256x768xf32, #tpu.memory_space<vmem>>, vector<256x768xf32>
    %cst_20 = arith.constant dense<0.000000e+00> : vector<8x768xf32>
    %85 = tpu.matmul %78, %84, %cst_20 {dimension_numbers = #tpu.dot_dimension_numbers<[1], [0], [0], [1], [0, 0, 1, 1], [], []>} : vector<8x256xf32>, vector<256x768xf32>, vector<8x768xf32> -> vector<8x768xf32>
    %86 = arith.index_cast %80 : i32 to index
    %c0_21 = arith.constant 0 : index
    %87 = vector.load %arg0[%86, %c0_21] : memref<64x768xf32, #tpu.memory_space<vmem>>, vector<8x384xf32>
    %88 = arith.index_cast %83 : i32 to index
    %c384_22 = arith.constant 384 : index
    %89 = vector.load %arg0[%88, %c384_22] : memref<64x768xf32, #tpu.memory_space<vmem>>, vector<8x384xf32>
    %90 = vector.extract_strided_slice %87 {offsets = [0, 0], sizes = [8, 128], strides = [1, 1]} : vector<8x384xf32> to vector<8x128xf32>
    %91 = vector.extract_strided_slice %85 {offsets = [0, 0], sizes = [8, 128], strides = [1, 1]} : vector<8x768xf32> to vector<8x128xf32>
    %92 = arith.addf %90, %91 : vector<8x128xf32>
    %93 = arith.negf %92 : vector<8x128xf32>
    %94 = math.exp %93 : vector<8x128xf32>
    %cst_23 = arith.constant 1.000000e+00 : f32
    %95 = vector.broadcast %cst_23 : f32 to vector<8x128xf32>
    %96 = arith.addf %95, %94 : vector<8x128xf32>
    %97 = arith.divf %95, %96 : vector<8x128xf32>
    %98 = vector.extract_strided_slice %87 {offsets = [0, 128], sizes = [8, 128], strides = [1, 1]} : vector<8x384xf32> to vector<8x128xf32>
    %99 = vector.extract_strided_slice %85 {offsets = [0, 128], sizes = [8, 128], strides = [1, 1]} : vector<8x768xf32> to vector<8x128xf32>
    %100 = arith.addf %98, %99 : vector<8x128xf32>
    %101 = arith.negf %100 : vector<8x128xf32>
    %102 = math.exp %101 : vector<8x128xf32>
    %cst_24 = arith.constant 1.000000e+00 : f32
    %103 = vector.broadcast %cst_24 : f32 to vector<8x128xf32>
    %104 = arith.addf %103, %102 : vector<8x128xf32>
    %105 = arith.divf %103, %104 : vector<8x128xf32>
    %106 = vector.extract_strided_slice %87 {offsets = [0, 256], sizes = [8, 128], strides = [1, 1]} : vector<8x384xf32> to vector<8x128xf32>
    %107 = vector.extract_strided_slice %85 {offsets = [0, 256], sizes = [8, 128], strides = [1, 1]} : vector<8x768xf32> to vector<8x128xf32>
    %108 = arith.addf %107, %2 : vector<8x128xf32>
    %109 = arith.mulf %97, %108 : vector<8x128xf32>
    %110 = arith.addf %106, %109 : vector<8x128xf32>
    %111 = math.tanh %110 : vector<8x128xf32>
    %cst_25 = arith.constant 1.000000e+00 : f32
    %112 = vector.broadcast %cst_25 : f32 to vector<8x128xf32>
    %113 = arith.subf %112, %105 : vector<8x128xf32>
    %114 = arith.mulf %113, %111 : vector<8x128xf32>
    %115 = vector.extract_strided_slice %78 {offsets = [0, 0], sizes = [8, 128], strides = [1, 1]} : vector<8x256xf32> to vector<8x128xf32>
    %116 = arith.mulf %105, %115 : vector<8x128xf32>
    %117 = arith.addf %114, %116 : vector<8x128xf32>
    %118 = vector.extract_strided_slice %89 {offsets = [0, 0], sizes = [8, 128], strides = [1, 1]} : vector<8x384xf32> to vector<8x128xf32>
    %119 = vector.extract_strided_slice %85 {offsets = [0, 384], sizes = [8, 128], strides = [1, 1]} : vector<8x768xf32> to vector<8x128xf32>
    %120 = arith.addf %118, %119 : vector<8x128xf32>
    %121 = arith.negf %120 : vector<8x128xf32>
    %122 = math.exp %121 : vector<8x128xf32>
    %cst_26 = arith.constant 1.000000e+00 : f32
    %123 = vector.broadcast %cst_26 : f32 to vector<8x128xf32>
    %124 = arith.addf %123, %122 : vector<8x128xf32>
    %125 = arith.divf %123, %124 : vector<8x128xf32>
    %126 = vector.extract_strided_slice %89 {offsets = [0, 128], sizes = [8, 128], strides = [1, 1]} : vector<8x384xf32> to vector<8x128xf32>
    %127 = vector.extract_strided_slice %85 {offsets = [0, 512], sizes = [8, 128], strides = [1, 1]} : vector<8x768xf32> to vector<8x128xf32>
    %128 = arith.addf %126, %127 : vector<8x128xf32>
    %129 = arith.negf %128 : vector<8x128xf32>
    %130 = math.exp %129 : vector<8x128xf32>
    %cst_27 = arith.constant 1.000000e+00 : f32
    %131 = vector.broadcast %cst_27 : f32 to vector<8x128xf32>
    %132 = arith.addf %131, %130 : vector<8x128xf32>
    %133 = arith.divf %131, %132 : vector<8x128xf32>
    %134 = vector.extract_strided_slice %89 {offsets = [0, 256], sizes = [8, 128], strides = [1, 1]} : vector<8x384xf32> to vector<8x128xf32>
    %135 = vector.extract_strided_slice %85 {offsets = [0, 640], sizes = [8, 128], strides = [1, 1]} : vector<8x768xf32> to vector<8x128xf32>
    %136 = arith.addf %135, %5 : vector<8x128xf32>
    %137 = arith.mulf %125, %136 : vector<8x128xf32>
    %138 = arith.addf %134, %137 : vector<8x128xf32>
    %139 = math.tanh %138 : vector<8x128xf32>
    %cst_28 = arith.constant 1.000000e+00 : f32
    %140 = vector.broadcast %cst_28 : f32 to vector<8x128xf32>
    %141 = arith.subf %140, %133 : vector<8x128xf32>
    %142 = arith.mulf %141, %139 : vector<8x128xf32>
    %143 = vector.extract_strided_slice %78 {offsets = [0, 128], sizes = [8, 128], strides = [1, 1]} : vector<8x256xf32> to vector<8x128xf32>
    %144 = arith.mulf %133, %143 : vector<8x128xf32>
    %145 = arith.addf %142, %144 : vector<8x128xf32>
    %146 = arith.index_cast %80 : i32 to index
    %c0_29 = arith.constant 0 : index
    %147 = vector.load %arg6[%146, %c0_29] : memref<64x256xf32, #tpu.memory_space<vmem>>, vector<8x128xf32>
    tpu.vector_store %arg6[%146, %c0_29], %117 {strides = array<i32>} : memref<64x256xf32, #tpu.memory_space<vmem>>, vector<8x128xf32>,
    %148 = arith.index_cast %83 : i32 to index
    %c128_30 = arith.constant 128 : index
    %149 = vector.load %arg6[%148, %c128_30] : memref<64x256xf32, #tpu.memory_space<vmem>>, vector<8x128xf32>
    tpu.vector_store %arg6[%148, %c128_30], %145 {strides = array<i32>} : memref<64x256xf32, #tpu.memory_space<vmem>>, vector<8x128xf32>,
    %150 = tpu.concatenate %117, %145 in 1 : vector<8x128xf32>, vector<8x128xf32> -> vector<8x256xf32>
    %c2_i32 = arith.constant 2 : i32
    %c8_i32_31 = arith.constant 8 : i32
    %151 = arith.muli %c2_i32, %c8_i32_31 : i32
    %152 = tpu.assume_multiple %151, 8 : i32
    %c7_i32_32 = arith.constant 7 : i32
    %153 = arith.subi %c7_i32_32, %c2_i32 : i32
    %c8_i32_33 = arith.constant 8 : i32
    %154 = arith.muli %153, %c8_i32_33 : i32
    %155 = tpu.assume_multiple %154, 8 : i32
    %c0_34 = arith.constant 0 : index
    %c0_35 = arith.constant 0 : index
    %156 = vector.load %arg1[%c0_34, %c0_35] : memref<256x768xf32, #tpu.memory_space<vmem>>, vector<256x768xf32>
    %cst_36 = arith.constant dense<0.000000e+00> : vector<8x768xf32>
    %157 = tpu.matmul %150, %156, %cst_36 {dimension_numbers = #tpu.dot_dimension_numbers<[1], [0], [0], [1], [0, 0, 1, 1], [], []>} : vector<8x256xf32>, vector<256x768xf32>, vector<8x768xf32> -> vector<8x768xf32>
    %158 = arith.index_cast %152 : i32 to index
    %c0_37 = arith.constant 0 : index
    %159 = vector.load %arg0[%158, %c0_37] : memref<64x768xf32, #tpu.memory_space<vmem>>, vector<8x384xf32>
    %160 = arith.index_cast %155 : i32 to index
    %c384_38 = arith.constant 384 : index
    %161 = vector.load %arg0[%160, %c384_38] : memref<64x768xf32, #tpu.memory_space<vmem>>, vector<8x384xf32>
    %162 = vector.extract_strided_slice %159 {offsets = [0, 0], sizes = [8, 128], strides = [1, 1]} : vector<8x384xf32> to vector<8x128xf32>
    %163 = vector.extract_strided_slice %157 {offsets = [0, 0], sizes = [8, 128], strides = [1, 1]} : vector<8x768xf32> to vector<8x128xf32>
    %164 = arith.addf %162, %163 : vector<8x128xf32>
    %165 = arith.negf %164 : vector<8x128xf32>
    %166 = math.exp %165 : vector<8x128xf32>
    %cst_39 = arith.constant 1.000000e+00 : f32
    %167 = vector.broadcast %cst_39 : f32 to vector<8x128xf32>
    %168 = arith.addf %167, %166 : vector<8x128xf32>
    %169 = arith.divf %167, %168 : vector<8x128xf32>
    %170 = vector.extract_strided_slice %159 {offsets = [0, 128], sizes = [8, 128], strides = [1, 1]} : vector<8x384xf32> to vector<8x128xf32>
    %171 = vector.extract_strided_slice %157 {offsets = [0, 128], sizes = [8, 128], strides = [1, 1]} : vector<8x768xf32> to vector<8x128xf32>
    %172 = arith.addf %170, %171 : vector<8x128xf32>
    %173 = arith.negf %172 : vector<8x128xf32>
    %174 = math.exp %173 : vector<8x128xf32>
    %cst_40 = arith.constant 1.000000e+00 : f32
    %175 = vector.broadcast %cst_40 : f32 to vector<8x128xf32>
    %176 = arith.addf %175, %174 : vector<8x128xf32>
    %177 = arith.divf %175, %176 : vector<8x128xf32>
    %178 = vector.extract_strided_slice %159 {offsets = [0, 256], sizes = [8, 128], strides = [1, 1]} : vector<8x384xf32> to vector<8x128xf32>
    %179 = vector.extract_strided_slice %157 {offsets = [0, 256], sizes = [8, 128], strides = [1, 1]} : vector<8x768xf32> to vector<8x128xf32>
    %180 = arith.addf %179, %2 : vector<8x128xf32>
    %181 = arith.mulf %169, %180 : vector<8x128xf32>
    %182 = arith.addf %178, %181 : vector<8x128xf32>
    %183 = math.tanh %182 : vector<8x128xf32>
    %cst_41 = arith.constant 1.000000e+00 : f32
    %184 = vector.broadcast %cst_41 : f32 to vector<8x128xf32>
    %185 = arith.subf %184, %177 : vector<8x128xf32>
    %186 = arith.mulf %185, %183 : vector<8x128xf32>
    %187 = vector.extract_strided_slice %150 {offsets = [0, 0], sizes = [8, 128], strides = [1, 1]} : vector<8x256xf32> to vector<8x128xf32>
    %188 = arith.mulf %177, %187 : vector<8x128xf32>
    %189 = arith.addf %186, %188 : vector<8x128xf32>
    %190 = vector.extract_strided_slice %161 {offsets = [0, 0], sizes = [8, 128], strides = [1, 1]} : vector<8x384xf32> to vector<8x128xf32>
    %191 = vector.extract_strided_slice %157 {offsets = [0, 384], sizes = [8, 128], strides = [1, 1]} : vector<8x768xf32> to vector<8x128xf32>
    %192 = arith.addf %190, %191 : vector<8x128xf32>
    %193 = arith.negf %192 : vector<8x128xf32>
    %194 = math.exp %193 : vector<8x128xf32>
    %cst_42 = arith.constant 1.000000e+00 : f32
    %195 = vector.broadcast %cst_42 : f32 to vector<8x128xf32>
    %196 = arith.addf %195, %194 : vector<8x128xf32>
    %197 = arith.divf %195, %196 : vector<8x128xf32>
    %198 = vector.extract_strided_slice %161 {offsets = [0, 128], sizes = [8, 128], strides = [1, 1]} : vector<8x384xf32> to vector<8x128xf32>
    %199 = vector.extract_strided_slice %157 {offsets = [0, 512], sizes = [8, 128], strides = [1, 1]} : vector<8x768xf32> to vector<8x128xf32>
    %200 = arith.addf %198, %199 : vector<8x128xf32>
    %201 = arith.negf %200 : vector<8x128xf32>
    %202 = math.exp %201 : vector<8x128xf32>
    %cst_43 = arith.constant 1.000000e+00 : f32
    %203 = vector.broadcast %cst_43 : f32 to vector<8x128xf32>
    %204 = arith.addf %203, %202 : vector<8x128xf32>
    %205 = arith.divf %203, %204 : vector<8x128xf32>
    %206 = vector.extract_strided_slice %161 {offsets = [0, 256], sizes = [8, 128], strides = [1, 1]} : vector<8x384xf32> to vector<8x128xf32>
    %207 = vector.extract_strided_slice %157 {offsets = [0, 640], sizes = [8, 128], strides = [1, 1]} : vector<8x768xf32> to vector<8x128xf32>
    %208 = arith.addf %207, %5 : vector<8x128xf32>
    %209 = arith.mulf %197, %208 : vector<8x128xf32>
    %210 = arith.addf %206, %209 : vector<8x128xf32>
    %211 = math.tanh %210 : vector<8x128xf32>
    %cst_44 = arith.constant 1.000000e+00 : f32
    %212 = vector.broadcast %cst_44 : f32 to vector<8x128xf32>
    %213 = arith.subf %212, %205 : vector<8x128xf32>
    %214 = arith.mulf %213, %211 : vector<8x128xf32>
    %215 = vector.extract_strided_slice %150 {offsets = [0, 128], sizes = [8, 128], strides = [1, 1]} : vector<8x256xf32> to vector<8x128xf32>
    %216 = arith.mulf %205, %215 : vector<8x128xf32>
    %217 = arith.addf %214, %216 : vector<8x128xf32>
    %218 = arith.index_cast %152 : i32 to index
    %c0_45 = arith.constant 0 : index
    %219 = vector.load %arg6[%218, %c0_45] : memref<64x256xf32, #tpu.memory_space<vmem>>, vector<8x128xf32>
    tpu.vector_store %arg6[%218, %c0_45], %189 {strides = array<i32>} : memref<64x256xf32, #tpu.memory_space<vmem>>, vector<8x128xf32>,
    %220 = arith.index_cast %155 : i32 to index
    %c128_46 = arith.constant 128 : index
    %221 = vector.load %arg6[%220, %c128_46] : memref<64x256xf32, #tpu.memory_space<vmem>>, vector<8x128xf32>
    tpu.vector_store %arg6[%220, %c128_46], %217 {strides = array<i32>} : memref<64x256xf32, #tpu.memory_space<vmem>>, vector<8x128xf32>,
    %222 = tpu.concatenate %189, %217 in 1 : vector<8x128xf32>, vector<8x128xf32> -> vector<8x256xf32>
    %c3_i32 = arith.constant 3 : i32
    %c8_i32_47 = arith.constant 8 : i32
    %223 = arith.muli %c3_i32, %c8_i32_47 : i32
    %224 = tpu.assume_multiple %223, 8 : i32
    %c7_i32_48 = arith.constant 7 : i32
    %225 = arith.subi %c7_i32_48, %c3_i32 : i32
    %c8_i32_49 = arith.constant 8 : i32
    %226 = arith.muli %225, %c8_i32_49 : i32
    %227 = tpu.assume_multiple %226, 8 : i32
    %c0_50 = arith.constant 0 : index
    %c0_51 = arith.constant 0 : index
    %228 = vector.load %arg1[%c0_50, %c0_51] : memref<256x768xf32, #tpu.memory_space<vmem>>, vector<256x768xf32>
    %cst_52 = arith.constant dense<0.000000e+00> : vector<8x768xf32>
    %229 = tpu.matmul %222, %228, %cst_52 {dimension_numbers = #tpu.dot_dimension_numbers<[1], [0], [0], [1], [0, 0, 1, 1], [], []>} : vector<8x256xf32>, vector<256x768xf32>, vector<8x768xf32> -> vector<8x768xf32>
    %230 = arith.index_cast %224 : i32 to index
    %c0_53 = arith.constant 0 : index
    %231 = vector.load %arg0[%230, %c0_53] : memref<64x768xf32, #tpu.memory_space<vmem>>, vector<8x384xf32>
    %232 = arith.index_cast %227 : i32 to index
    %c384_54 = arith.constant 384 : index
    %233 = vector.load %arg0[%232, %c384_54] : memref<64x768xf32, #tpu.memory_space<vmem>>, vector<8x384xf32>
    %234 = vector.extract_strided_slice %231 {offsets = [0, 0], sizes = [8, 128], strides = [1, 1]} : vector<8x384xf32> to vector<8x128xf32>
    %235 = vector.extract_strided_slice %229 {offsets = [0, 0], sizes = [8, 128], strides = [1, 1]} : vector<8x768xf32> to vector<8x128xf32>
    %236 = arith.addf %234, %235 : vector<8x128xf32>
    %237 = arith.negf %236 : vector<8x128xf32>
    %238 = math.exp %237 : vector<8x128xf32>
    %cst_55 = arith.constant 1.000000e+00 : f32
    %239 = vector.broadcast %cst_55 : f32 to vector<8x128xf32>
    %240 = arith.addf %239, %238 : vector<8x128xf32>
    %241 = arith.divf %239, %240 : vector<8x128xf32>
    %242 = vector.extract_strided_slice %231 {offsets = [0, 128], sizes = [8, 128], strides = [1, 1]} : vector<8x384xf32> to vector<8x128xf32>
    %243 = vector.extract_strided_slice %229 {offsets = [0, 128], sizes = [8, 128], strides = [1, 1]} : vector<8x768xf32> to vector<8x128xf32>
    %244 = arith.addf %242, %243 : vector<8x128xf32>
    %245 = arith.negf %244 : vector<8x128xf32>
    %246 = math.exp %245 : vector<8x128xf32>
    %cst_56 = arith.constant 1.000000e+00 : f32
    %247 = vector.broadcast %cst_56 : f32 to vector<8x128xf32>
    %248 = arith.addf %247, %246 : vector<8x128xf32>
    %249 = arith.divf %247, %248 : vector<8x128xf32>
    %250 = vector.extract_strided_slice %231 {offsets = [0, 256], sizes = [8, 128], strides = [1, 1]} : vector<8x384xf32> to vector<8x128xf32>
    %251 = vector.extract_strided_slice %229 {offsets = [0, 256], sizes = [8, 128], strides = [1, 1]} : vector<8x768xf32> to vector<8x128xf32>
    %252 = arith.addf %251, %2 : vector<8x128xf32>
    %253 = arith.mulf %241, %252 : vector<8x128xf32>
    %254 = arith.addf %250, %253 : vector<8x128xf32>
    %255 = math.tanh %254 : vector<8x128xf32>
    %cst_57 = arith.constant 1.000000e+00 : f32
    %256 = vector.broadcast %cst_57 : f32 to vector<8x128xf32>
    %257 = arith.subf %256, %249 : vector<8x128xf32>
    %258 = arith.mulf %257, %255 : vector<8x128xf32>
    %259 = vector.extract_strided_slice %222 {offsets = [0, 0], sizes = [8, 128], strides = [1, 1]} : vector<8x256xf32> to vector<8x128xf32>
    %260 = arith.mulf %249, %259 : vector<8x128xf32>
    %261 = arith.addf %258, %260 : vector<8x128xf32>
    %262 = vector.extract_strided_slice %233 {offsets = [0, 0], sizes = [8, 128], strides = [1, 1]} : vector<8x384xf32> to vector<8x128xf32>
    %263 = vector.extract_strided_slice %229 {offsets = [0, 384], sizes = [8, 128], strides = [1, 1]} : vector<8x768xf32> to vector<8x128xf32>
    %264 = arith.addf %262, %263 : vector<8x128xf32>
    %265 = arith.negf %264 : vector<8x128xf32>
    %266 = math.exp %265 : vector<8x128xf32>
    %cst_58 = arith.constant 1.000000e+00 : f32
    %267 = vector.broadcast %cst_58 : f32 to vector<8x128xf32>
    %268 = arith.addf %267, %266 : vector<8x128xf32>
    %269 = arith.divf %267, %268 : vector<8x128xf32>
    %270 = vector.extract_strided_slice %233 {offsets = [0, 128], sizes = [8, 128], strides = [1, 1]} : vector<8x384xf32> to vector<8x128xf32>
    %271 = vector.extract_strided_slice %229 {offsets = [0, 512], sizes = [8, 128], strides = [1, 1]} : vector<8x768xf32> to vector<8x128xf32>
    %272 = arith.addf %270, %271 : vector<8x128xf32>
    %273 = arith.negf %272 : vector<8x128xf32>
    %274 = math.exp %273 : vector<8x128xf32>
    %cst_59 = arith.constant 1.000000e+00 : f32
    %275 = vector.broadcast %cst_59 : f32 to vector<8x128xf32>
    %276 = arith.addf %275, %274 : vector<8x128xf32>
    %277 = arith.divf %275, %276 : vector<8x128xf32>
    %278 = vector.extract_strided_slice %233 {offsets = [0, 256], sizes = [8, 128], strides = [1, 1]} : vector<8x384xf32> to vector<8x128xf32>
    %279 = vector.extract_strided_slice %229 {offsets = [0, 640], sizes = [8, 128], strides = [1, 1]} : vector<8x768xf32> to vector<8x128xf32>
    %280 = arith.addf %279, %5 : vector<8x128xf32>
    %281 = arith.mulf %269, %280 : vector<8x128xf32>
    %282 = arith.addf %278, %281 : vector<8x128xf32>
    %283 = math.tanh %282 : vector<8x128xf32>
    %cst_60 = arith.constant 1.000000e+00 : f32
    %284 = vector.broadcast %cst_60 : f32 to vector<8x128xf32>
    %285 = arith.subf %284, %277 : vector<8x128xf32>
    %286 = arith.mulf %285, %283 : vector<8x128xf32>
    %287 = vector.extract_strided_slice %222 {offsets = [0, 128], sizes = [8, 128], strides = [1, 1]} : vector<8x256xf32> to vector<8x128xf32>
    %288 = arith.mulf %277, %287 : vector<8x128xf32>
    %289 = arith.addf %286, %288 : vector<8x128xf32>
    %290 = arith.index_cast %224 : i32 to index
    %c0_61 = arith.constant 0 : index
    %291 = vector.load %arg6[%290, %c0_61] : memref<64x256xf32, #tpu.memory_space<vmem>>, vector<8x128xf32>
    tpu.vector_store %arg6[%290, %c0_61], %261 {strides = array<i32>} : memref<64x256xf32, #tpu.memory_space<vmem>>, vector<8x128xf32>,
    %292 = arith.index_cast %227 : i32 to index
    %c128_62 = arith.constant 128 : index
    %293 = vector.load %arg6[%292, %c128_62] : memref<64x256xf32, #tpu.memory_space<vmem>>, vector<8x128xf32>
    tpu.vector_store %arg6[%292, %c128_62], %289 {strides = array<i32>} : memref<64x256xf32, #tpu.memory_space<vmem>>, vector<8x128xf32>,
    %294 = tpu.concatenate %261, %289 in 1 : vector<8x128xf32>, vector<8x128xf32> -> vector<8x256xf32>
    %c4_i32 = arith.constant 4 : i32
    %c8_i32_63 = arith.constant 8 : i32
    %295 = arith.muli %c4_i32, %c8_i32_63 : i32
    %296 = tpu.assume_multiple %295, 8 : i32
    %c7_i32_64 = arith.constant 7 : i32
    %297 = arith.subi %c7_i32_64, %c4_i32 : i32
    %c8_i32_65 = arith.constant 8 : i32
    %298 = arith.muli %297, %c8_i32_65 : i32
    %299 = tpu.assume_multiple %298, 8 : i32
    %c0_66 = arith.constant 0 : index
    %c0_67 = arith.constant 0 : index
    %300 = vector.load %arg1[%c0_66, %c0_67] : memref<256x768xf32, #tpu.memory_space<vmem>>, vector<256x768xf32>
    %cst_68 = arith.constant dense<0.000000e+00> : vector<8x768xf32>
    %301 = tpu.matmul %294, %300, %cst_68 {dimension_numbers = #tpu.dot_dimension_numbers<[1], [0], [0], [1], [0, 0, 1, 1], [], []>} : vector<8x256xf32>, vector<256x768xf32>, vector<8x768xf32> -> vector<8x768xf32>
    %302 = arith.index_cast %296 : i32 to index
    %c0_69 = arith.constant 0 : index
    %303 = vector.load %arg0[%302, %c0_69] : memref<64x768xf32, #tpu.memory_space<vmem>>, vector<8x384xf32>
    %304 = arith.index_cast %299 : i32 to index
    %c384_70 = arith.constant 384 : index
    %305 = vector.load %arg0[%304, %c384_70] : memref<64x768xf32, #tpu.memory_space<vmem>>, vector<8x384xf32>
    %306 = vector.extract_strided_slice %303 {offsets = [0, 0], sizes = [8, 128], strides = [1, 1]} : vector<8x384xf32> to vector<8x128xf32>
    %307 = vector.extract_strided_slice %301 {offsets = [0, 0], sizes = [8, 128], strides = [1, 1]} : vector<8x768xf32> to vector<8x128xf32>
    %308 = arith.addf %306, %307 : vector<8x128xf32>
    %309 = arith.negf %308 : vector<8x128xf32>
    %310 = math.exp %309 : vector<8x128xf32>
    %cst_71 = arith.constant 1.000000e+00 : f32
    %311 = vector.broadcast %cst_71 : f32 to vector<8x128xf32>
    %312 = arith.addf %311, %310 : vector<8x128xf32>
    %313 = arith.divf %311, %312 : vector<8x128xf32>
    %314 = vector.extract_strided_slice %303 {offsets = [0, 128], sizes = [8, 128], strides = [1, 1]} : vector<8x384xf32> to vector<8x128xf32>
    %315 = vector.extract_strided_slice %301 {offsets = [0, 128], sizes = [8, 128], strides = [1, 1]} : vector<8x768xf32> to vector<8x128xf32>
    %316 = arith.addf %314, %315 : vector<8x128xf32>
    %317 = arith.negf %316 : vector<8x128xf32>
    %318 = math.exp %317 : vector<8x128xf32>
    %cst_72 = arith.constant 1.000000e+00 : f32
    %319 = vector.broadcast %cst_72 : f32 to vector<8x128xf32>
    %320 = arith.addf %319, %318 : vector<8x128xf32>
    %321 = arith.divf %319, %320 : vector<8x128xf32>
    %322 = vector.extract_strided_slice %303 {offsets = [0, 256], sizes = [8, 128], strides = [1, 1]} : vector<8x384xf32> to vector<8x128xf32>
    %323 = vector.extract_strided_slice %301 {offsets = [0, 256], sizes = [8, 128], strides = [1, 1]} : vector<8x768xf32> to vector<8x128xf32>
    %324 = arith.addf %323, %2 : vector<8x128xf32>
    %325 = arith.mulf %313, %324 : vector<8x128xf32>
    %326 = arith.addf %322, %325 : vector<8x128xf32>
    %327 = math.tanh %326 : vector<8x128xf32>
    %cst_73 = arith.constant 1.000000e+00 : f32
    %328 = vector.broadcast %cst_73 : f32 to vector<8x128xf32>
    %329 = arith.subf %328, %321 : vector<8x128xf32>
    %330 = arith.mulf %329, %327 : vector<8x128xf32>
    %331 = vector.extract_strided_slice %294 {offsets = [0, 0], sizes = [8, 128], strides = [1, 1]} : vector<8x256xf32> to vector<8x128xf32>
    %332 = arith.mulf %321, %331 : vector<8x128xf32>
    %333 = arith.addf %330, %332 : vector<8x128xf32>
    %334 = vector.extract_strided_slice %305 {offsets = [0, 0], sizes = [8, 128], strides = [1, 1]} : vector<8x384xf32> to vector<8x128xf32>
    %335 = vector.extract_strided_slice %301 {offsets = [0, 384], sizes = [8, 128], strides = [1, 1]} : vector<8x768xf32> to vector<8x128xf32>
    %336 = arith.addf %334, %335 : vector<8x128xf32>
    %337 = arith.negf %336 : vector<8x128xf32>
    %338 = math.exp %337 : vector<8x128xf32>
    %cst_74 = arith.constant 1.000000e+00 : f32
    %339 = vector.broadcast %cst_74 : f32 to vector<8x128xf32>
    %340 = arith.addf %339, %338 : vector<8x128xf32>
    %341 = arith.divf %339, %340 : vector<8x128xf32>
    %342 = vector.extract_strided_slice %305 {offsets = [0, 128], sizes = [8, 128], strides = [1, 1]} : vector<8x384xf32> to vector<8x128xf32>
    %343 = vector.extract_strided_slice %301 {offsets = [0, 512], sizes = [8, 128], strides = [1, 1]} : vector<8x768xf32> to vector<8x128xf32>
    %344 = arith.addf %342, %343 : vector<8x128xf32>
    %345 = arith.negf %344 : vector<8x128xf32>
    %346 = math.exp %345 : vector<8x128xf32>
    %cst_75 = arith.constant 1.000000e+00 : f32
    %347 = vector.broadcast %cst_75 : f32 to vector<8x128xf32>
    %348 = arith.addf %347, %346 : vector<8x128xf32>
    %349 = arith.divf %347, %348 : vector<8x128xf32>
    %350 = vector.extract_strided_slice %305 {offsets = [0, 256], sizes = [8, 128], strides = [1, 1]} : vector<8x384xf32> to vector<8x128xf32>
    %351 = vector.extract_strided_slice %301 {offsets = [0, 640], sizes = [8, 128], strides = [1, 1]} : vector<8x768xf32> to vector<8x128xf32>
    %352 = arith.addf %351, %5 : vector<8x128xf32>
    %353 = arith.mulf %341, %352 : vector<8x128xf32>
    %354 = arith.addf %350, %353 : vector<8x128xf32>
    %355 = math.tanh %354 : vector<8x128xf32>
    %cst_76 = arith.constant 1.000000e+00 : f32
    %356 = vector.broadcast %cst_76 : f32 to vector<8x128xf32>
    %357 = arith.subf %356, %349 : vector<8x128xf32>
    %358 = arith.mulf %357, %355 : vector<8x128xf32>
    %359 = vector.extract_strided_slice %294 {offsets = [0, 128], sizes = [8, 128], strides = [1, 1]} : vector<8x256xf32> to vector<8x128xf32>
    %360 = arith.mulf %349, %359 : vector<8x128xf32>
    %361 = arith.addf %358, %360 : vector<8x128xf32>
    %362 = arith.index_cast %296 : i32 to index
    %c0_77 = arith.constant 0 : index
    %363 = vector.load %arg6[%362, %c0_77] : memref<64x256xf32, #tpu.memory_space<vmem>>, vector<8x128xf32>
    tpu.vector_store %arg6[%362, %c0_77], %333 {strides = array<i32>} : memref<64x256xf32, #tpu.memory_space<vmem>>, vector<8x128xf32>,
    %364 = arith.index_cast %299 : i32 to index
    %c128_78 = arith.constant 128 : index
    %365 = vector.load %arg6[%364, %c128_78] : memref<64x256xf32, #tpu.memory_space<vmem>>, vector<8x128xf32>
    tpu.vector_store %arg6[%364, %c128_78], %361 {strides = array<i32>} : memref<64x256xf32, #tpu.memory_space<vmem>>, vector<8x128xf32>,
    %366 = tpu.concatenate %333, %361 in 1 : vector<8x128xf32>, vector<8x128xf32> -> vector<8x256xf32>
    %c5_i32 = arith.constant 5 : i32
    %c8_i32_79 = arith.constant 8 : i32
    %367 = arith.muli %c5_i32, %c8_i32_79 : i32
    %368 = tpu.assume_multiple %367, 8 : i32
    %c7_i32_80 = arith.constant 7 : i32
    %369 = arith.subi %c7_i32_80, %c5_i32 : i32
    %c8_i32_81 = arith.constant 8 : i32
    %370 = arith.muli %369, %c8_i32_81 : i32
    %371 = tpu.assume_multiple %370, 8 : i32
    %c0_82 = arith.constant 0 : index
    %c0_83 = arith.constant 0 : index
    %372 = vector.load %arg1[%c0_82, %c0_83] : memref<256x768xf32, #tpu.memory_space<vmem>>, vector<256x768xf32>
    %cst_84 = arith.constant dense<0.000000e+00> : vector<8x768xf32>
    %373 = tpu.matmul %366, %372, %cst_84 {dimension_numbers = #tpu.dot_dimension_numbers<[1], [0], [0], [1], [0, 0, 1, 1], [], []>} : vector<8x256xf32>, vector<256x768xf32>, vector<8x768xf32> -> vector<8x768xf32>
    %374 = arith.index_cast %368 : i32 to index
    %c0_85 = arith.constant 0 : index
    %375 = vector.load %arg0[%374, %c0_85] : memref<64x768xf32, #tpu.memory_space<vmem>>, vector<8x384xf32>
    %376 = arith.index_cast %371 : i32 to index
    %c384_86 = arith.constant 384 : index
    %377 = vector.load %arg0[%376, %c384_86] : memref<64x768xf32, #tpu.memory_space<vmem>>, vector<8x384xf32>
    %378 = vector.extract_strided_slice %375 {offsets = [0, 0], sizes = [8, 128], strides = [1, 1]} : vector<8x384xf32> to vector<8x128xf32>
    %379 = vector.extract_strided_slice %373 {offsets = [0, 0], sizes = [8, 128], strides = [1, 1]} : vector<8x768xf32> to vector<8x128xf32>
    %380 = arith.addf %378, %379 : vector<8x128xf32>
    %381 = arith.negf %380 : vector<8x128xf32>
    %382 = math.exp %381 : vector<8x128xf32>
    %cst_87 = arith.constant 1.000000e+00 : f32
    %383 = vector.broadcast %cst_87 : f32 to vector<8x128xf32>
    %384 = arith.addf %383, %382 : vector<8x128xf32>
    %385 = arith.divf %383, %384 : vector<8x128xf32>
    %386 = vector.extract_strided_slice %375 {offsets = [0, 128], sizes = [8, 128], strides = [1, 1]} : vector<8x384xf32> to vector<8x128xf32>
    %387 = vector.extract_strided_slice %373 {offsets = [0, 128], sizes = [8, 128], strides = [1, 1]} : vector<8x768xf32> to vector<8x128xf32>
    %388 = arith.addf %386, %387 : vector<8x128xf32>
    %389 = arith.negf %388 : vector<8x128xf32>
    %390 = math.exp %389 : vector<8x128xf32>
    %cst_88 = arith.constant 1.000000e+00 : f32
    %391 = vector.broadcast %cst_88 : f32 to vector<8x128xf32>
    %392 = arith.addf %391, %390 : vector<8x128xf32>
    %393 = arith.divf %391, %392 : vector<8x128xf32>
    %394 = vector.extract_strided_slice %375 {offsets = [0, 256], sizes = [8, 128], strides = [1, 1]} : vector<8x384xf32> to vector<8x128xf32>
    %395 = vector.extract_strided_slice %373 {offsets = [0, 256], sizes = [8, 128], strides = [1, 1]} : vector<8x768xf32> to vector<8x128xf32>
    %396 = arith.addf %395, %2 : vector<8x128xf32>
    %397 = arith.mulf %385, %396 : vector<8x128xf32>
    %398 = arith.addf %394, %397 : vector<8x128xf32>
    %399 = math.tanh %398 : vector<8x128xf32>
    %cst_89 = arith.constant 1.000000e+00 : f32
    %400 = vector.broadcast %cst_89 : f32 to vector<8x128xf32>
    %401 = arith.subf %400, %393 : vector<8x128xf32>
    %402 = arith.mulf %401, %399 : vector<8x128xf32>
    %403 = vector.extract_strided_slice %366 {offsets = [0, 0], sizes = [8, 128], strides = [1, 1]} : vector<8x256xf32> to vector<8x128xf32>
    %404 = arith.mulf %393, %403 : vector<8x128xf32>
    %405 = arith.addf %402, %404 : vector<8x128xf32>
    %406 = vector.extract_strided_slice %377 {offsets = [0, 0], sizes = [8, 128], strides = [1, 1]} : vector<8x384xf32> to vector<8x128xf32>
    %407 = vector.extract_strided_slice %373 {offsets = [0, 384], sizes = [8, 128], strides = [1, 1]} : vector<8x768xf32> to vector<8x128xf32>
    %408 = arith.addf %406, %407 : vector<8x128xf32>
    %409 = arith.negf %408 : vector<8x128xf32>
    %410 = math.exp %409 : vector<8x128xf32>
    %cst_90 = arith.constant 1.000000e+00 : f32
    %411 = vector.broadcast %cst_90 : f32 to vector<8x128xf32>
    %412 = arith.addf %411, %410 : vector<8x128xf32>
    %413 = arith.divf %411, %412 : vector<8x128xf32>
    %414 = vector.extract_strided_slice %377 {offsets = [0, 128], sizes = [8, 128], strides = [1, 1]} : vector<8x384xf32> to vector<8x128xf32>
    %415 = vector.extract_strided_slice %373 {offsets = [0, 512], sizes = [8, 128], strides = [1, 1]} : vector<8x768xf32> to vector<8x128xf32>
    %416 = arith.addf %414, %415 : vector<8x128xf32>
    %417 = arith.negf %416 : vector<8x128xf32>
    %418 = math.exp %417 : vector<8x128xf32>
    %cst_91 = arith.constant 1.000000e+00 : f32
    %419 = vector.broadcast %cst_91 : f32 to vector<8x128xf32>
    %420 = arith.addf %419, %418 : vector<8x128xf32>
    %421 = arith.divf %419, %420 : vector<8x128xf32>
    %422 = vector.extract_strided_slice %377 {offsets = [0, 256], sizes = [8, 128], strides = [1, 1]} : vector<8x384xf32> to vector<8x128xf32>
    %423 = vector.extract_strided_slice %373 {offsets = [0, 640], sizes = [8, 128], strides = [1, 1]} : vector<8x768xf32> to vector<8x128xf32>
    %424 = arith.addf %423, %5 : vector<8x128xf32>
    %425 = arith.mulf %413, %424 : vector<8x128xf32>
    %426 = arith.addf %422, %425 : vector<8x128xf32>
    %427 = math.tanh %426 : vector<8x128xf32>
    %cst_92 = arith.constant 1.000000e+00 : f32
    %428 = vector.broadcast %cst_92 : f32 to vector<8x128xf32>
    %429 = arith.subf %428, %421 : vector<8x128xf32>
    %430 = arith.mulf %429, %427 : vector<8x128xf32>
    %431 = vector.extract_strided_slice %366 {offsets = [0, 128], sizes = [8, 128], strides = [1, 1]} : vector<8x256xf32> to vector<8x128xf32>
    %432 = arith.mulf %421, %431 : vector<8x128xf32>
    %433 = arith.addf %430, %432 : vector<8x128xf32>
    %434 = arith.index_cast %368 : i32 to index
    %c0_93 = arith.constant 0 : index
    %435 = vector.load %arg6[%434, %c0_93] : memref<64x256xf32, #tpu.memory_space<vmem>>, vector<8x128xf32>
    tpu.vector_store %arg6[%434, %c0_93], %405 {strides = array<i32>} : memref<64x256xf32, #tpu.memory_space<vmem>>, vector<8x128xf32>,
    %436 = arith.index_cast %371 : i32 to index
    %c128_94 = arith.constant 128 : index
    %437 = vector.load %arg6[%436, %c128_94] : memref<64x256xf32, #tpu.memory_space<vmem>>, vector<8x128xf32>
    tpu.vector_store %arg6[%436, %c128_94], %433 {strides = array<i32>} : memref<64x256xf32, #tpu.memory_space<vmem>>, vector<8x128xf32>,
    %438 = tpu.concatenate %405, %433 in 1 : vector<8x128xf32>, vector<8x128xf32> -> vector<8x256xf32>
    %c6_i32 = arith.constant 6 : i32
    %c8_i32_95 = arith.constant 8 : i32
    %439 = arith.muli %c6_i32, %c8_i32_95 : i32
    %440 = tpu.assume_multiple %439, 8 : i32
    %c7_i32_96 = arith.constant 7 : i32
    %441 = arith.subi %c7_i32_96, %c6_i32 : i32
    %c8_i32_97 = arith.constant 8 : i32
    %442 = arith.muli %441, %c8_i32_97 : i32
    %443 = tpu.assume_multiple %442, 8 : i32
    %c0_98 = arith.constant 0 : index
    %c0_99 = arith.constant 0 : index
    %444 = vector.load %arg1[%c0_98, %c0_99] : memref<256x768xf32, #tpu.memory_space<vmem>>, vector<256x768xf32>
    %cst_100 = arith.constant dense<0.000000e+00> : vector<8x768xf32>
    %445 = tpu.matmul %438, %444, %cst_100 {dimension_numbers = #tpu.dot_dimension_numbers<[1], [0], [0], [1], [0, 0, 1, 1], [], []>} : vector<8x256xf32>, vector<256x768xf32>, vector<8x768xf32> -> vector<8x768xf32>
    %446 = arith.index_cast %440 : i32 to index
    %c0_101 = arith.constant 0 : index
    %447 = vector.load %arg0[%446, %c0_101] : memref<64x768xf32, #tpu.memory_space<vmem>>, vector<8x384xf32>
    %448 = arith.index_cast %443 : i32 to index
    %c384_102 = arith.constant 384 : index
    %449 = vector.load %arg0[%448, %c384_102] : memref<64x768xf32, #tpu.memory_space<vmem>>, vector<8x384xf32>
    %450 = vector.extract_strided_slice %447 {offsets = [0, 0], sizes = [8, 128], strides = [1, 1]} : vector<8x384xf32> to vector<8x128xf32>
    %451 = vector.extract_strided_slice %445 {offsets = [0, 0], sizes = [8, 128], strides = [1, 1]} : vector<8x768xf32> to vector<8x128xf32>
    %452 = arith.addf %450, %451 : vector<8x128xf32>
    %453 = arith.negf %452 : vector<8x128xf32>
    %454 = math.exp %453 : vector<8x128xf32>
    %cst_103 = arith.constant 1.000000e+00 : f32
    %455 = vector.broadcast %cst_103 : f32 to vector<8x128xf32>
    %456 = arith.addf %455, %454 : vector<8x128xf32>
    %457 = arith.divf %455, %456 : vector<8x128xf32>
    %458 = vector.extract_strided_slice %447 {offsets = [0, 128], sizes = [8, 128], strides = [1, 1]} : vector<8x384xf32> to vector<8x128xf32>
    %459 = vector.extract_strided_slice %445 {offsets = [0, 128], sizes = [8, 128], strides = [1, 1]} : vector<8x768xf32> to vector<8x128xf32>
    %460 = arith.addf %458, %459 : vector<8x128xf32>
    %461 = arith.negf %460 : vector<8x128xf32>
    %462 = math.exp %461 : vector<8x128xf32>
    %cst_104 = arith.constant 1.000000e+00 : f32
    %463 = vector.broadcast %cst_104 : f32 to vector<8x128xf32>
    %464 = arith.addf %463, %462 : vector<8x128xf32>
    %465 = arith.divf %463, %464 : vector<8x128xf32>
    %466 = vector.extract_strided_slice %447 {offsets = [0, 256], sizes = [8, 128], strides = [1, 1]} : vector<8x384xf32> to vector<8x128xf32>
    %467 = vector.extract_strided_slice %445 {offsets = [0, 256], sizes = [8, 128], strides = [1, 1]} : vector<8x768xf32> to vector<8x128xf32>
    %468 = arith.addf %467, %2 : vector<8x128xf32>
    %469 = arith.mulf %457, %468 : vector<8x128xf32>
    %470 = arith.addf %466, %469 : vector<8x128xf32>
    %471 = math.tanh %470 : vector<8x128xf32>
    %cst_105 = arith.constant 1.000000e+00 : f32
    %472 = vector.broadcast %cst_105 : f32 to vector<8x128xf32>
    %473 = arith.subf %472, %465 : vector<8x128xf32>
    %474 = arith.mulf %473, %471 : vector<8x128xf32>
    %475 = vector.extract_strided_slice %438 {offsets = [0, 0], sizes = [8, 128], strides = [1, 1]} : vector<8x256xf32> to vector<8x128xf32>
    %476 = arith.mulf %465, %475 : vector<8x128xf32>
    %477 = arith.addf %474, %476 : vector<8x128xf32>
    %478 = vector.extract_strided_slice %449 {offsets = [0, 0], sizes = [8, 128], strides = [1, 1]} : vector<8x384xf32> to vector<8x128xf32>
    %479 = vector.extract_strided_slice %445 {offsets = [0, 384], sizes = [8, 128], strides = [1, 1]} : vector<8x768xf32> to vector<8x128xf32>
    %480 = arith.addf %478, %479 : vector<8x128xf32>
    %481 = arith.negf %480 : vector<8x128xf32>
    %482 = math.exp %481 : vector<8x128xf32>
    %cst_106 = arith.constant 1.000000e+00 : f32
    %483 = vector.broadcast %cst_106 : f32 to vector<8x128xf32>
    %484 = arith.addf %483, %482 : vector<8x128xf32>
    %485 = arith.divf %483, %484 : vector<8x128xf32>
    %486 = vector.extract_strided_slice %449 {offsets = [0, 128], sizes = [8, 128], strides = [1, 1]} : vector<8x384xf32> to vector<8x128xf32>
    %487 = vector.extract_strided_slice %445 {offsets = [0, 512], sizes = [8, 128], strides = [1, 1]} : vector<8x768xf32> to vector<8x128xf32>
    %488 = arith.addf %486, %487 : vector<8x128xf32>
    %489 = arith.negf %488 : vector<8x128xf32>
    %490 = math.exp %489 : vector<8x128xf32>
    %cst_107 = arith.constant 1.000000e+00 : f32
    %491 = vector.broadcast %cst_107 : f32 to vector<8x128xf32>
    %492 = arith.addf %491, %490 : vector<8x128xf32>
    %493 = arith.divf %491, %492 : vector<8x128xf32>
    %494 = vector.extract_strided_slice %449 {offsets = [0, 256], sizes = [8, 128], strides = [1, 1]} : vector<8x384xf32> to vector<8x128xf32>
    %495 = vector.extract_strided_slice %445 {offsets = [0, 640], sizes = [8, 128], strides = [1, 1]} : vector<8x768xf32> to vector<8x128xf32>
    %496 = arith.addf %495, %5 : vector<8x128xf32>
    %497 = arith.mulf %485, %496 : vector<8x128xf32>
    %498 = arith.addf %494, %497 : vector<8x128xf32>
    %499 = math.tanh %498 : vector<8x128xf32>
    %cst_108 = arith.constant 1.000000e+00 : f32
    %500 = vector.broadcast %cst_108 : f32 to vector<8x128xf32>
    %501 = arith.subf %500, %493 : vector<8x128xf32>
    %502 = arith.mulf %501, %499 : vector<8x128xf32>
    %503 = vector.extract_strided_slice %438 {offsets = [0, 128], sizes = [8, 128], strides = [1, 1]} : vector<8x256xf32> to vector<8x128xf32>
    %504 = arith.mulf %493, %503 : vector<8x128xf32>
    %505 = arith.addf %502, %504 : vector<8x128xf32>
    %506 = arith.index_cast %440 : i32 to index
    %c0_109 = arith.constant 0 : index
    %507 = vector.load %arg6[%506, %c0_109] : memref<64x256xf32, #tpu.memory_space<vmem>>, vector<8x128xf32>
    tpu.vector_store %arg6[%506, %c0_109], %477 {strides = array<i32>} : memref<64x256xf32, #tpu.memory_space<vmem>>, vector<8x128xf32>,
    %508 = arith.index_cast %443 : i32 to index
    %c128_110 = arith.constant 128 : index
    %509 = vector.load %arg6[%508, %c128_110] : memref<64x256xf32, #tpu.memory_space<vmem>>, vector<8x128xf32>
    tpu.vector_store %arg6[%508, %c128_110], %505 {strides = array<i32>} : memref<64x256xf32, #tpu.memory_space<vmem>>, vector<8x128xf32>,
    %510 = tpu.concatenate %477, %505 in 1 : vector<8x128xf32>, vector<8x128xf32> -> vector<8x256xf32>
    %c7_i32_111 = arith.constant 7 : i32
    %c8_i32_112 = arith.constant 8 : i32
    %511 = arith.muli %c7_i32_111, %c8_i32_112 : i32
    %512 = tpu.assume_multiple %511, 8 : i32
    %c7_i32_113 = arith.constant 7 : i32
    %513 = arith.subi %c7_i32_113, %c7_i32_111 : i32
    %c8_i32_114 = arith.constant 8 : i32
    %514 = arith.muli %513, %c8_i32_114 : i32
    %515 = tpu.assume_multiple %514, 8 : i32
    %c0_115 = arith.constant 0 : index
    %c0_116 = arith.constant 0 : index
    %516 = vector.load %arg1[%c0_115, %c0_116] : memref<256x768xf32, #tpu.memory_space<vmem>>, vector<256x768xf32>
    %cst_117 = arith.constant dense<0.000000e+00> : vector<8x768xf32>
    %517 = tpu.matmul %510, %516, %cst_117 {dimension_numbers = #tpu.dot_dimension_numbers<[1], [0], [0], [1], [0, 0, 1, 1], [], []>} : vector<8x256xf32>, vector<256x768xf32>, vector<8x768xf32> -> vector<8x768xf32>
    %518 = arith.index_cast %512 : i32 to index
    %c0_118 = arith.constant 0 : index
    %519 = vector.load %arg0[%518, %c0_118] : memref<64x768xf32, #tpu.memory_space<vmem>>, vector<8x384xf32>
    %520 = arith.index_cast %515 : i32 to index
    %c384_119 = arith.constant 384 : index
    %521 = vector.load %arg0[%520, %c384_119] : memref<64x768xf32, #tpu.memory_space<vmem>>, vector<8x384xf32>
    %522 = vector.extract_strided_slice %519 {offsets = [0, 0], sizes = [8, 128], strides = [1, 1]} : vector<8x384xf32> to vector<8x128xf32>
    %523 = vector.extract_strided_slice %517 {offsets = [0, 0], sizes = [8, 128], strides = [1, 1]} : vector<8x768xf32> to vector<8x128xf32>
    %524 = arith.addf %522, %523 : vector<8x128xf32>
    %525 = arith.negf %524 : vector<8x128xf32>
    %526 = math.exp %525 : vector<8x128xf32>
    %cst_120 = arith.constant 1.000000e+00 : f32
    %527 = vector.broadcast %cst_120 : f32 to vector<8x128xf32>
    %528 = arith.addf %527, %526 : vector<8x128xf32>
    %529 = arith.divf %527, %528 : vector<8x128xf32>
    %530 = vector.extract_strided_slice %519 {offsets = [0, 128], sizes = [8, 128], strides = [1, 1]} : vector<8x384xf32> to vector<8x128xf32>
    %531 = vector.extract_strided_slice %517 {offsets = [0, 128], sizes = [8, 128], strides = [1, 1]} : vector<8x768xf32> to vector<8x128xf32>
    %532 = arith.addf %530, %531 : vector<8x128xf32>
    %533 = arith.negf %532 : vector<8x128xf32>
    %534 = math.exp %533 : vector<8x128xf32>
    %cst_121 = arith.constant 1.000000e+00 : f32
    %535 = vector.broadcast %cst_121 : f32 to vector<8x128xf32>
    %536 = arith.addf %535, %534 : vector<8x128xf32>
    %537 = arith.divf %535, %536 : vector<8x128xf32>
    %538 = vector.extract_strided_slice %519 {offsets = [0, 256], sizes = [8, 128], strides = [1, 1]} : vector<8x384xf32> to vector<8x128xf32>
    %539 = vector.extract_strided_slice %517 {offsets = [0, 256], sizes = [8, 128], strides = [1, 1]} : vector<8x768xf32> to vector<8x128xf32>
    %540 = arith.addf %539, %2 : vector<8x128xf32>
    %541 = arith.mulf %529, %540 : vector<8x128xf32>
    %542 = arith.addf %538, %541 : vector<8x128xf32>
    %543 = math.tanh %542 : vector<8x128xf32>
    %cst_122 = arith.constant 1.000000e+00 : f32
    %544 = vector.broadcast %cst_122 : f32 to vector<8x128xf32>
    %545 = arith.subf %544, %537 : vector<8x128xf32>
    %546 = arith.mulf %545, %543 : vector<8x128xf32>
    %547 = vector.extract_strided_slice %510 {offsets = [0, 0], sizes = [8, 128], strides = [1, 1]} : vector<8x256xf32> to vector<8x128xf32>
    %548 = arith.mulf %537, %547 : vector<8x128xf32>
    %549 = arith.addf %546, %548 : vector<8x128xf32>
    %550 = vector.extract_strided_slice %521 {offsets = [0, 0], sizes = [8, 128], strides = [1, 1]} : vector<8x384xf32> to vector<8x128xf32>
    %551 = vector.extract_strided_slice %517 {offsets = [0, 384], sizes = [8, 128], strides = [1, 1]} : vector<8x768xf32> to vector<8x128xf32>
    %552 = arith.addf %550, %551 : vector<8x128xf32>
    %553 = arith.negf %552 : vector<8x128xf32>
    %554 = math.exp %553 : vector<8x128xf32>
    %cst_123 = arith.constant 1.000000e+00 : f32
    %555 = vector.broadcast %cst_123 : f32 to vector<8x128xf32>
    %556 = arith.addf %555, %554 : vector<8x128xf32>
    %557 = arith.divf %555, %556 : vector<8x128xf32>
    %558 = vector.extract_strided_slice %521 {offsets = [0, 128], sizes = [8, 128], strides = [1, 1]} : vector<8x384xf32> to vector<8x128xf32>
    %559 = vector.extract_strided_slice %517 {offsets = [0, 512], sizes = [8, 128], strides = [1, 1]} : vector<8x768xf32> to vector<8x128xf32>
    %560 = arith.addf %558, %559 : vector<8x128xf32>
    %561 = arith.negf %560 : vector<8x128xf32>
    %562 = math.exp %561 : vector<8x128xf32>
    %cst_124 = arith.constant 1.000000e+00 : f32
    %563 = vector.broadcast %cst_124 : f32 to vector<8x128xf32>
    %564 = arith.addf %563, %562 : vector<8x128xf32>
    %565 = arith.divf %563, %564 : vector<8x128xf32>
    %566 = vector.extract_strided_slice %521 {offsets = [0, 256], sizes = [8, 128], strides = [1, 1]} : vector<8x384xf32> to vector<8x128xf32>
    %567 = vector.extract_strided_slice %517 {offsets = [0, 640], sizes = [8, 128], strides = [1, 1]} : vector<8x768xf32> to vector<8x128xf32>
    %568 = arith.addf %567, %5 : vector<8x128xf32>
    %569 = arith.mulf %557, %568 : vector<8x128xf32>
    %570 = arith.addf %566, %569 : vector<8x128xf32>
    %571 = math.tanh %570 : vector<8x128xf32>
    %cst_125 = arith.constant 1.000000e+00 : f32
    %572 = vector.broadcast %cst_125 : f32 to vector<8x128xf32>
    %573 = arith.subf %572, %565 : vector<8x128xf32>
    %574 = arith.mulf %573, %571 : vector<8x128xf32>
    %575 = vector.extract_strided_slice %510 {offsets = [0, 128], sizes = [8, 128], strides = [1, 1]} : vector<8x256xf32> to vector<8x128xf32>
    %576 = arith.mulf %565, %575 : vector<8x128xf32>
    %577 = arith.addf %574, %576 : vector<8x128xf32>
    %578 = arith.index_cast %512 : i32 to index
    %c0_126 = arith.constant 0 : index
    %579 = vector.load %arg6[%578, %c0_126] : memref<64x256xf32, #tpu.memory_space<vmem>>, vector<8x128xf32>
    tpu.vector_store %arg6[%578, %c0_126], %549 {strides = array<i32>} : memref<64x256xf32, #tpu.memory_space<vmem>>, vector<8x128xf32>,
    %580 = arith.index_cast %515 : i32 to index
    %c128_127 = arith.constant 128 : index
    %581 = vector.load %arg6[%580, %c128_127] : memref<64x256xf32, #tpu.memory_space<vmem>>, vector<8x128xf32>
    tpu.vector_store %arg6[%580, %c128_127], %577 {strides = array<i32>} : memref<64x256xf32, #tpu.memory_space<vmem>>, vector<8x128xf32>,
    %582 = tpu.concatenate %549, %577 in 1 : vector<8x128xf32>, vector<8x128xf32> -> vector<8x256xf32>
    %c8_i32_128 = arith.constant 8 : i32
    %c0_129 = arith.constant 0 : index
    %c0_130 = arith.constant 0 : index
    %583 = vector.load %arg6[%c0_129, %c0_130] : memref<64x256xf32, #tpu.memory_space<vmem>>, vector<64x256xf32>
    %c0_131 = arith.constant 0 : index
    %c0_132 = arith.constant 0 : index
    %584 = vector.load %arg3[%c0_131, %c0_132] : memref<256x128xf32, #tpu.memory_space<vmem>>, vector<256x128xf32>
    %cst_133 = arith.constant dense<0.000000e+00> : vector<64x128xf32>
    %585 = tpu.matmul %583, %584, %cst_133 {dimension_numbers = #tpu.dot_dimension_numbers<[1], [0], [0], [1], [0, 0, 1, 1], [], []>} : vector<64x256xf32>, vector<256x128xf32>, vector<64x128xf32> -> vector<64x128xf32>
    %c0_134 = arith.constant 0 : index
    %c0_135 = arith.constant 0 : index
    %586 = vector.load %arg4[%c0_134, %c0_135] : memref<1x128xf32, #tpu.memory_space<vmem>>, vector<1x128xf32>
    %587 = vector.broadcast %586 : vector<1x128xf32> to vector<64x128xf32>
    %588 = arith.addf %585, %587 : vector<64x128xf32>
    %c0_136 = arith.constant 0 : index
    %c0_137 = arith.constant 0 : index
    %589 = vector.load %arg5[%c0_136, %c0_137] : memref<64x128xf32, #tpu.memory_space<vmem>>, vector<64x128xf32>
    tpu.vector_store %arg5[%c0_136, %c0_137], %588 {strides = array<i32>} : memref<64x128xf32, #tpu.memory_space<vmem>>, vector<64x128xf32>,
    return
  }
}

</mosaic_0001>

<llo_original>
// kernel: lstm_model_forward.1
$region0: #{lstm_model_forward.1}
  #allocation0 [shape = 'u32[]', space=smem, size = 0x4, offset = 0x4, fixed_abs, tag = 'smem constant byte address 0x4 - core index']
  #allocation1 [shape = 'u32[144,128]{1,0:T(1,128)}', space=vmem, size = 0x12000, scoped, tag = 'internal scratch']
  #allocation2 [shape = 'f32[64,256]{1,0:T(8,128)}', space=vmem, size = 0x10000, scoped, tag = 'scratch operand']
  %s0 = inlined_call_operand.vmem [shape: f32[64,768], index: 0, kind: input, shape index: {}]
  %s1 = inlined_call_operand.vmem [shape: f32[256,768], index: 1, kind: input, shape index: {}]
  %s2 = inlined_call_operand.vmem [shape: f32[1,256], index: 2, kind: input, shape index: {}]
  %s3 = inlined_call_operand.hbm [shape: f32[256,128], index: 3, kind: input, shape index: {}]
  %s4 = inlined_call_operand.vmem [shape: f32[1,128], index: 4, kind: input, shape index: {}]
  %s5 = inlined_call_operand.vmem [shape: f32[64,128], index: 5, kind: output, shape index: {}]
  %s6 = sld [smem:[#allocation0]]
  $region34: #{lstm_model_forward.1} parent=0
    _
  %s8 = ssub.s32 1, %s6
  %s9 = scalar_select 0, %s8, %s6
  $region1: #{lstm_model_forward.1} parent=0
    #allocation3 [shape = 'u8[131072]{0}', space=vmem, size = 0x20000, scoped, tag = 'input window, operand 3, single buffered']
    #allocation4 [shape = 's32[1]{0}', space=sflag, size = 0x4, scoped, tag = 'scoped memory for lstm_model_forward.1']
    %10 = vsyncpa [#allocation4], 0
    // Predicated region
    $region2: #{lstm_model_forward.1} parent=1 // pred_check
      _
    $region3: #{lstm_model_forward.1} parent=1 // pred_check_branch
      %12 = sbr.rel (0) target = $region5
    $region4: #{lstm_model_forward.1} parent=1 // pred_region
      _
    $region5: #{lstm_model_forward.1} parent=1 // pred_fallthru
      _
    // Predicated region
    $region6: #{lstm_model_forward.1} parent=1 // pred_check
      _
    $region7: #{lstm_model_forward.1} parent=1 // pred_check_branch
      %14 = sbr.rel (0) target = $region9
    $region8: #{lstm_model_forward.1} parent=1 // pred_region
      _
    $region9: #{lstm_model_forward.1} parent=1 // pred_fallthru
      _
    // Predicated region
    $region10: #{lstm_model_forward.1} parent=1 // pred_check
      _
    $region11: #{lstm_model_forward.1} parent=1 // pred_check_branch
      %16 = sbr.rel (0) target = $region13
    $region12: #{lstm_model_forward.1} parent=1 // pred_region
      _
    $region13: #{lstm_model_forward.1} parent=1 // pred_fallthru
      _
    // Predicated region
    $region14: #{lstm_model_forward.1} parent=1 // pred_check
      _
    $region15: #{lstm_model_forward.1} parent=1 // pred_check_branch
      %18 = sbr.rel (0) target = $region17
    $region16: #{lstm_model_forward.1} parent=1 // pred_region
      %s20 = ssub.s32 4096, 4096
      %21 = vsyncadd [#allocation4], %s20
      %s22 = sshll.u32 [#allocation3], 4
      %s23 = int_to_ptr.vmem [resolvable:$true] %s22
      %28 = dma.hbm_to_vmem [thread:$0]  %s3, 4096, %s23, [#allocation4], 128, 128, 8
    $region17: #{lstm_model_forward.1} parent=1 // pred_fallthru
      _
    // Predicated region
    $region18: #{lstm_model_forward.1} parent=1 // pred_check
      _
    $region19: #{lstm_model_forward.1} parent=1 // pred_check_branch
      %30 = sbr.rel (0) target = $region21
    $region20: #{lstm_model_forward.1} parent=1 // pred_region
      _
    $region21: #{lstm_model_forward.1} parent=1 // pred_fallthru
      _
    // Predicated region
    $region22: #{lstm_model_forward.1} parent=1 // pred_check
      _
    $region23: #{lstm_model_forward.1} parent=1 // pred_check_branch
      %32 = sbr.rel (0) target = $region25
    $region24: #{lstm_model_forward.1} parent=1 // pred_region
      %33 = dma.done [#allocation4], 4096
    $region25: #{lstm_model_forward.1} parent=1 // pred_fallthru
      _
    %v34 = vld [vmem:[%s2] sm:$0x1]
    %v36 = vlaneseq
    %v37 = vshrl.u32 %v36, 7
    %v38 = vsub.s32 0, %v37
    %v39 = vrot.slane %v34, %v38
    %v41 = vld [vmem:[%s2 + $0x1] sm:$0x1]
    %v43 = vlaneseq
    %v44 = vshrl.u32 %v43, 7
    %v45 = vsub.s32 0, %v44
    %v46 = vrot.slane %v41, %v45
    %v48 = vld [vmem:[%s1] sm:$0xff]
    %v49 = vld [vmem:[%s1 + $0x8] sm:$0xff]
    %v50 = vld [vmem:[%s1 + $0x10] sm:$0xff]
    %v51 = vld [vmem:[%s1 + $0x18] sm:$0xff]
    %v52 = vld [vmem:[%s1 + $0x20] sm:$0xff]
    %v53 = vld [vmem:[%s1 + $0x28] sm:$0xff]
    %v54 = vld [vmem:[%s1 + $0x30] sm:$0xff]
    %v55 = vld [vmem:[%s1 + $0x38] sm:$0xff]
    %v56 = vld [vmem:[%s1 + $0x40] sm:$0xff]
    %v57 = vld [vmem:[%s1 + $0x48] sm:$0xff]
    %v58 = vld [vmem:[%s1 + $0x50] sm:$0xff]
    %v59 = vld [vmem:[%s1 + $0x58] sm:$0xff]
    %v60 = vld [vmem:[%s1 + $0x60] sm:$0xff]
    %v61 = vld [vmem:[%s1 + $0x68] sm:$0xff]
    %v62 = vld [vmem:[%s1 + $0x70] sm:$0xff]
    %v63 = vld [vmem:[%s1 + $0x78] sm:$0xff]
    %v64 = vld [vmem:[%s1 + $0x80] sm:$0xff]
    %v65 = vld [vmem:[%s1 + $0x88] sm:$0xff]
    %v66 = vld [vmem:[%s1 + $0x90] sm:$0xff]
    %v67 = vld [vmem:[%s1 + $0x98] sm:$0xff]
    %v68 = vld [vmem:[%s1 + $0xa0] sm:$0xff]
    %v69 = vld [vmem:[%s1 + $0xa8] sm:$0xff]
    %v70 = vld [vmem:[%s1 + $0xb0] sm:$0xff]
    %v71 = vld [vmem:[%s1 + $0xb8] sm:$0xff]
    %v72 = vld [vmem:[%s1 + $0xc0] sm:$0xff]
    %v73 = vld [vmem:[%s1 + $0xc8] sm:$0xff]
    %v74 = vld [vmem:[%s1 + $0xd0] sm:$0xff]
    %v75 = vld [vmem:[%s1 + $0xd8] sm:$0xff]
    %v76 = vld [vmem:[%s1 + $0xe0] sm:$0xff]
    %v77 = vld [vmem:[%s1 + $0xe8] sm:$0xff]
    %v78 = vld [vmem:[%s1 + $0xf0] sm:$0xff]
    %v79 = vld [vmem:[%s1 + $0xf8] sm:$0xff]
    %v80 = vld [vmem:[%s1 + $0x100] sm:$0xff]
    %v81 = vld [vmem:[%s1 + $0x108] sm:$0xff]
    %v82 = vld [vmem:[%s1 + $0x110] sm:$0xff]
    %v83 = vld [vmem:[%s1 + $0x118] sm:$0xff]
    %v84 = vld [vmem:[%s1 + $0x120] sm:$0xff]
    %v85 = vld [vmem:[%s1 + $0x128] sm:$0xff]
    %v86 = vld [vmem:[%s1 + $0x130] sm:$0xff]
    %v87 = vld [vmem:[%s1 + $0x138] sm:$0xff]
    %v88 = vld [vmem:[%s1 + $0x140] sm:$0xff]
    %v89 = vld [vmem:[%s1 + $0x148] sm:$0xff]
    %v90 = vld [vmem:[%s1 + $0x150] sm:$0xff]
    %v91 = vld [vmem:[%s1 + $0x158] sm:$0xff]
    %v92 = vld [vmem:[%s1 + $0x160] sm:$0xff]
    %v93 = vld [vmem:[%s1 + $0x168] sm:$0xff]
    %v94 = vld [vmem:[%s1 + $0x170] sm:$0xff]
    %v95 = vld [vmem:[%s1 + $0x178] sm:$0xff]
    %v96 = vld [vmem:[%s1 + $0x180] sm:$0xff]
    %v97 = vld [vmem:[%s1 + $0x188] sm:$0xff]
    %v98 = vld [vmem:[%s1 + $0x190] sm:$0xff]
    %v99 = vld [vmem:[%s1 + $0x198] sm:$0xff]
    %v100 = vld [vmem:[%s1 + $0x1a0] sm:$0xff]
    %v101 = vld [vmem:[%s1 + $0x1a8] sm:$0xff]
    %v102 = vld [vmem:[%s1 + $0x1b0] sm:$0xff]
    %v103 = vld [vmem:[%s1 + $0x1b8] sm:$0xff]
    %v104 = vld [vmem:[%s1 + $0x1c0] sm:$0xff]
    %v105 = vld [vmem:[%s1 + $0x1c8] sm:$0xff]
    %v106 = vld [vmem:[%s1 + $0x1d0] sm:$0xff]
    %v107 = vld [vmem:[%s1 + $0x1d8] sm:$0xff]
    %v108 = vld [vmem:[%s1 + $0x1e0] sm:$0xff]
    %v109 = vld [vmem:[%s1 + $0x1e8] sm:$0xff]
    %v110 = vld [vmem:[%s1 + $0x1f0] sm:$0xff]
    %v111 = vld [vmem:[%s1 + $0x1f8] sm:$0xff]
    %v112 = vld [vmem:[%s1 + $0x200] sm:$0xff]
    %v113 = vld [vmem:[%s1 + $0x208] sm:$0xff]
    %v114 = vld [vmem:[%s1 + $0x210] sm:$0xff]
    %v115 = vld [vmem:[%s1 + $0x218] sm:$0xff]
    %v116 = vld [vmem:[%s1 + $0x220] sm:$0xff]
    %v117 = vld [vmem:[%s1 + $0x228] sm:$0xff]
    %v118 = vld [vmem:[%s1 + $0x230] sm:$0xff]
    %v119 = vld [vmem:[%s1 + $0x238] sm:$0xff]
    %v120 = vld [vmem:[%s1 + $0x240] sm:$0xff]
    %v121 = vld [vmem:[%s1 + $0x248] sm:$0xff]
    %v122 = vld [vmem:[%s1 + $0x250] sm:$0xff]
    %v123 = vld [vmem:[%s1 + $0x258] sm:$0xff]
    %v124 = vld [vmem:[%s1 + $0x260] sm:$0xff]
    %v125 = vld [vmem:[%s1 + $0x268] sm:$0xff]
    %v126 = vld [vmem:[%s1 + $0x270] sm:$0xff]
    %v127 = vld [vmem:[%s1 + $0x278] sm:$0xff]
    %v128 = vld [vmem:[%s1 + $0x280] sm:$0xff]
    %v129 = vld [vmem:[%s1 + $0x288] sm:$0xff]
    %v130 = vld [vmem:[%s1 + $0x290] sm:$0xff]
    %v131 = vld [vmem:[%s1 + $0x298] sm:$0xff]
    %v132 = vld [vmem:[%s1 + $0x2a0] sm:$0xff]
    %v133 = vld [vmem:[%s1 + $0x2a8] sm:$0xff]
    %v134 = vld [vmem:[%s1 + $0x2b0] sm:$0xff]
    %v135 = vld [vmem:[%s1 + $0x2b8] sm:$0xff]
    %v136 = vld [vmem:[%s1 + $0x2c0] sm:$0xff]
    %v137 = vld [vmem:[%s1 + $0x2c8] sm:$0xff]
    %v138 = vld [vmem:[%s1 + $0x2d0] sm:$0xff]
    %v139 = vld [vmem:[%s1 + $0x2d8] sm:$0xff]
    %v140 = vld [vmem:[%s1 + $0x2e0] sm:$0xff]
    %v141 = vld [vmem:[%s1 + $0x2e8] sm:$0xff]
    %v142 = vld [vmem:[%s1 + $0x2f0] sm:$0xff]
    %v143 = vld [vmem:[%s1 + $0x2f8] sm:$0xff]
    %v144 = vld [vmem:[%s1 + $0x300] sm:$0xff]
    %v145 = vld [vmem:[%s1 + $0x308] sm:$0xff]
    %v146 = vld [vmem:[%s1 + $0x310] sm:$0xff]
    %v147 = vld [vmem:[%s1 + $0x318] sm:$0xff]
    %v148 = vld [vmem:[%s1 + $0x320] sm:$0xff]
    %v149 = vld [vmem:[%s1 + $0x328] sm:$0xff]
    %v150 = vld [vmem:[%s1 + $0x330] sm:$0xff]
    %v151 = vld [vmem:[%s1 + $0x338] sm:$0xff]
    %v152 = vld [vmem:[%s1 + $0x340] sm:$0xff]
    %v153 = vld [vmem:[%s1 + $0x348] sm:$0xff]
    %v154 = vld [vmem:[%s1 + $0x350] sm:$0xff]
    %v155 = vld [vmem:[%s1 + $0x358] sm:$0xff]
    %v156 = vld [vmem:[%s1 + $0x360] sm:$0xff]
    %v157 = vld [vmem:[%s1 + $0x368] sm:$0xff]
    %v158 = vld [vmem:[%s1 + $0x370] sm:$0xff]
    %v159 = vld [vmem:[%s1 + $0x378] sm:$0xff]
    %v160 = vld [vmem:[%s1 + $0x380] sm:$0xff]
    %v161 = vld [vmem:[%s1 + $0x388] sm:$0xff]
    %v162 = vld [vmem:[%s1 + $0x390] sm:$0xff]
    %v163 = vld [vmem:[%s1 + $0x398] sm:$0xff]
    %v164 = vld [vmem:[%s1 + $0x3a0] sm:$0xff]
    %v165 = vld [vmem:[%s1 + $0x3a8] sm:$0xff]
    %v166 = vld [vmem:[%s1 + $0x3b0] sm:$0xff]
    %v167 = vld [vmem:[%s1 + $0x3b8] sm:$0xff]
    %v168 = vld [vmem:[%s1 + $0x3c0] sm:$0xff]
    %v169 = vld [vmem:[%s1 + $0x3c8] sm:$0xff]
    %v170 = vld [vmem:[%s1 + $0x3d0] sm:$0xff]
    %v171 = vld [vmem:[%s1 + $0x3d8] sm:$0xff]
    %v172 = vld [vmem:[%s1 + $0x3e0] sm:$0xff]
    %v173 = vld [vmem:[%s1 + $0x3e8] sm:$0xff]
    %v174 = vld [vmem:[%s1 + $0x3f0] sm:$0xff]
    %v175 = vld [vmem:[%s1 + $0x3f8] sm:$0xff]
    %v176 = vld [vmem:[%s1 + $0x400] sm:$0xff]
    %v177 = vld [vmem:[%s1 + $0x408] sm:$0xff]
    %v178 = vld [vmem:[%s1 + $0x410] sm:$0xff]
    %v179 = vld [vmem:[%s1 + $0x418] sm:$0xff]
    %v180 = vld [vmem:[%s1 + $0x420] sm:$0xff]
    %v181 = vld [vmem:[%s1 + $0x428] sm:$0xff]
    %v182 = vld [vmem:[%s1 + $0x430] sm:$0xff]
    %v183 = vld [vmem:[%s1 + $0x438] sm:$0xff]
    %v184 = vld [vmem:[%s1 + $0x440] sm:$0xff]
    %v185 = vld [vmem:[%s1 + $0x448] sm:$0xff]
    %v186 = vld [vmem:[%s1 + $0x450] sm:$0xff]
    %v187 = vld [vmem:[%s1 + $0x458] sm:$0xff]
    %v188 = vld [vmem:[%s1 + $0x460] sm:$0xff]
    %v189 = vld [vmem:[%s1 + $0x468] sm:$0xff]
    %v190 = vld [vmem:[%s1 + $0x470] sm:$0xff]
    %v191 = vld [vmem:[%s1 + $0x478] sm:$0xff]
    %v192 = vld [vmem:[%s1 + $0x480] sm:$0xff]
    %v193 = vld [vmem:[%s1 + $0x488] sm:$0xff]
    %v194 = vld [vmem:[%s1 + $0x490] sm:$0xff]
    %v195 = vld [vmem:[%s1 + $0x498] sm:$0xff]
    %v196 = vld [vmem:[%s1 + $0x4a0] sm:$0xff]
    %v197 = vld [vmem:[%s1 + $0x4a8] sm:$0xff]
    %v198 = vld [vmem:[%s1 + $0x4b0] sm:$0xff]
    %v199 = vld [vmem:[%s1 + $0x4b8] sm:$0xff]
    %v200 = vld [vmem:[%s1 + $0x4c0] sm:$0xff]
    %v201 = vld [vmem:[%s1 + $0x4c8] sm:$0xff]
    %v202 = vld [vmem:[%s1 + $0x4d0] sm:$0xff]
    %v203 = vld [vmem:[%s1 + $0x4d8] sm:$0xff]
    %v204 = vld [vmem:[%s1 + $0x4e0] sm:$0xff]
    %v205 = vld [vmem:[%s1 + $0x4e8] sm:$0xff]
    %v206 = vld [vmem:[%s1 + $0x4f0] sm:$0xff]
    %v207 = vld [vmem:[%s1 + $0x4f8] sm:$0xff]
    %v208 = vld [vmem:[%s1 + $0x500] sm:$0xff]
    %v209 = vld [vmem:[%s1 + $0x508] sm:$0xff]
    %v210 = vld [vmem:[%s1 + $0x510] sm:$0xff]
    %v211 = vld [vmem:[%s1 + $0x518] sm:$0xff]
    %v212 = vld [vmem:[%s1 + $0x520] sm:$0xff]
    %v213 = vld [vmem:[%s1 + $0x528] sm:$0xff]
    %v214 = vld [vmem:[%s1 + $0x530] sm:$0xff]
    %v215 = vld [vmem:[%s1 + $0x538] sm:$0xff]
    %v216 = vld [vmem:[%s1 + $0x540] sm:$0xff]
    %v217 = vld [vmem:[%s1 + $0x548] sm:$0xff]
    %v218 = vld [vmem:[%s1 + $0x550] sm:$0xff]
    %v219 = vld [vmem:[%s1 + $0x558] sm:$0xff]
    %v220 = vld [vmem:[%s1 + $0x560] sm:$0xff]
    %v221 = vld [vmem:[%s1 + $0x568] sm:$0xff]
    %v222 = vld [vmem:[%s1 + $0x570] sm:$0xff]
    %v223 = vld [vmem:[%s1 + $0x578] sm:$0xff]
    %v224 = vld [vmem:[%s1 + $0x580] sm:$0xff]
    %v225 = vld [vmem:[%s1 + $0x588] sm:$0xff]
    %v226 = vld [vmem:[%s1 + $0x590] sm:$0xff]
    %v227 = vld [vmem:[%s1 + $0x598] sm:$0xff]
    %v228 = vld [vmem:[%s1 + $0x5a0] sm:$0xff]
    %v229 = vld [vmem:[%s1 + $0x5a8] sm:$0xff]
    %v230 = vld [vmem:[%s1 + $0x5b0] sm:$0xff]
    %v231 = vld [vmem:[%s1 + $0x5b8] sm:$0xff]
    %v232 = vld [vmem:[%s1 + $0x5c0] sm:$0xff]
    %v233 = vld [vmem:[%s1 + $0x5c8] sm:$0xff]
    %v234 = vld [vmem:[%s1 + $0x5d0] sm:$0xff]
    %v235 = vld [vmem:[%s1 + $0x5d8] sm:$0xff]
    %v236 = vld [vmem:[%s1 + $0x5e0] sm:$0xff]
    %v237 = vld [vmem:[%s1 + $0x5e8] sm:$0xff]
    %v238 = vld [vmem:[%s1 + $0x5f0] sm:$0xff]
    %v239 = vld [vmem:[%s1 + $0x5f8] sm:$0xff]
    %240 = vmatprep.subr.mxu0 %v139
    %241 = vmatpush1.msra.mxu0 %v138
    %242 = vmatprep.subr.mxu0 %v133
    %243 = vmatpush1.msra.mxu0 %v132
    %244 = vmatprep.subr.mxu0 %v127
    %245 = vmatpush1.msra.mxu0 %v126
    %246 = vmatprep.subr.mxu0 %v121
    %247 = vmatpush1.msra.mxu0 %v120
    %248 = vmatprep.subr.mxu0 %v115
    %249 = vmatpush1.msra.mxu0 %v114
    %250 = vmatprep.subr.mxu0 %v109
    %251 = vmatpush1.msra.mxu0 %v108
    %252 = vmatprep.subr.mxu0 %v103
    %253 = vmatpush1.msra.mxu0 %v102
    %254 = vmatprep.subr.mxu0 %v97
    %255 = vmatpush1.msra.mxu0 %v96
    %256 = vmatprep.subr.mxu0 %v91
    %257 = vmatpush1.msra.mxu0 %v90
    %258 = vmatprep.subr.mxu0 %v85
    %259 = vmatpush1.msra.mxu0 %v84
    %260 = vmatprep.subr.mxu0 %v79
    %261 = vmatpush1.msra.mxu0 %v78
    %262 = vmatprep.subr.mxu0 %v73
    %263 = vmatpush1.msra.mxu0 %v72
    %264 = vmatprep.subr.mxu0 %v67
    %265 = vmatpush1.msra.mxu0 %v66
    %266 = vmatprep.subr.mxu0 %v61
    %267 = vmatpush1.msra.mxu0 %v60
    %268 = vmatprep.subr.mxu0 %v55
    %269 = vmatpush1.msra.mxu0 %v54
    %270 = vmatprep.subr.mxu0 %v49
    %271 = vmatpush1.msra.mxu0 %v48
    %272 = vmatprep.subr.mxu0 %v235
    %273 = vmatpush2.msra.mxu0 %v234
    %274 = vmatprep.subr.mxu0 %v229
    %275 = vmatpush2.msra.mxu0 %v228
    %276 = vmatprep.subr.mxu0 %v223
    %277 = vmatpush2.msra.mxu0 %v222
    %278 = vmatprep.subr.mxu0 %v217
    %279 = vmatpush2.msra.mxu0 %v216
    %280 = vmatprep.subr.mxu0 %v211
    %281 = vmatpush2.msra.mxu0 %v210
    %282 = vmatprep.subr.mxu0 %v205
    %283 = vmatpush2.msra.mxu0 %v204
    %284 = vmatprep.subr.mxu0 %v199
    %285 = vmatpush2.msra.mxu0 %v198
    %286 = vmatprep.subr.mxu0 %v193
    %287 = vmatpush2.msra.mxu0 %v192
    %288 = vmatprep.subr.mxu0 %v187
    %289 = vmatpush2.msra.mxu0 %v186
    %290 = vmatprep.subr.mxu0 %v181
    %291 = vmatpush2.msra.mxu0 %v180
    %292 = vmatprep.subr.mxu0 %v175
    %293 = vmatpush2.msra.mxu0 %v174
    %294 = vmatprep.subr.mxu0 %v169
    %295 = vmatpush2.msra.mxu0 %v168
    %296 = vmatprep.subr.mxu0 %v163
    %297 = vmatpush2.msra.mxu0 %v162
    %298 = vmatprep.subr.mxu0 %v157
    %299 = vmatpush2.msra.mxu0 %v156
    %300 = vmatprep.subr.mxu0 %v151
    %301 = vmatpush2.msra.mxu0 %v150
    %302 = vmatprep.subr.mxu0 %v145
    %303 = vmatpush2.msra.mxu0 %v144
    %304 = vmatprep.mubr.f32.mxu0 0.0
    %305 = vmatmul.mubr.f32.gmra.mxu0 0.0
    %v306 = vpop.f32.mrf.mxu0
    %v307 = vadd.f32 0.0, %v306
    %v308 = vpop.f32.mrf.mxu0
    %v309 = vadd.f32 0.0, %v308
    %310 = vdwg.mxu0
    %311 = vmatprep.subr.mxu0 %v141
    %312 = vmatpush1.msra.mxu0 %v140
    %313 = vmatprep.subr.mxu0 %v135
    %314 = vmatpush1.msra.mxu0 %v134
    %315 = vmatprep.subr.mxu0 %v129
    %316 = vmatpush1.msra.mxu0 %v128
    %317 = vmatprep.subr.mxu0 %v123
    %318 = vmatpush1.msra.mxu0 %v122
    %319 = vmatprep.subr.mxu0 %v117
    %320 = vmatpush1.msra.mxu0 %v116
    %321 = vmatprep.subr.mxu0 %v111
    %322 = vmatpush1.msra.mxu0 %v110
    %323 = vmatprep.subr.mxu0 %v105
    %324 = vmatpush1.msra.mxu0 %v104
    %325 = vmatprep.subr.mxu0 %v99
    %326 = vmatpush1.msra.mxu0 %v98
    %327 = vmatprep.subr.mxu0 %v93
    %328 = vmatpush1.msra.mxu0 %v92
    %329 = vmatprep.subr.mxu0 %v87
    %330 = vmatpush1.msra.mxu0 %v86
    %331 = vmatprep.subr.mxu0 %v81
    %332 = vmatpush1.msra.mxu0 %v80
    %333 = vmatprep.subr.mxu0 %v75
    %334 = vmatpush1.msra.mxu0 %v74
    %335 = vmatprep.subr.mxu0 %v69
    %336 = vmatpush1.msra.mxu0 %v68
    %337 = vmatprep.subr.mxu0 %v63
    %338 = vmatpush1.msra.mxu0 %v62
    %339 = vmatprep.subr.mxu0 %v57
    %340 = vmatpush1.msra.mxu0 %v56
    %341 = vmatprep.subr.mxu0 %v51
    %342 = vmatpush1.msra.mxu0 %v50
    %343 = vmatprep.subr.mxu0 %v237
    %344 = vmatpush2.msra.mxu0 %v236
    %345 = vmatprep.subr.mxu0 %v231
    %346 = vmatpush2.msra.mxu0 %v230
    %347 = vmatprep.subr.mxu0 %v225
    %348 = vmatpush2.msra.mxu0 %v224
    %349 = vmatprep.subr.mxu0 %v219
    %350 = vmatpush2.msra.mxu0 %v218
    %351 = vmatprep.subr.mxu0 %v213
    %352 = vmatpush2.msra.mxu0 %v212
    %353 = vmatprep.subr.mxu0 %v207
    %354 = vmatpush2.msra.mxu0 %v206
    %355 = vmatprep.subr.mxu0 %v201
    %356 = vmatpush2.msra.mxu0 %v200
    %357 = vmatprep.subr.mxu0 %v195
    %358 = vmatpush2.msra.mxu0 %v194
    %359 = vmatprep.subr.mxu0 %v189
    %360 = vmatpush2.msra.mxu0 %v188
    %361 = vmatprep.subr.mxu0 %v183
    %362 = vmatpush2.msra.mxu0 %v182
    %363 = vmatprep.subr.mxu0 %v177
    %364 = vmatpush2.msra.mxu0 %v176
    %365 = vmatprep.subr.mxu0 %v171
    %366 = vmatpush2.msra.mxu0 %v170
    %367 = vmatprep.subr.mxu0 %v165
    %368 = vmatpush2.msra.mxu0 %v164
    %369 = vmatprep.subr.mxu0 %v159
    %370 = vmatpush2.msra.mxu0 %v158
    %371 = vmatprep.subr.mxu0 %v153
    %372 = vmatpush2.msra.mxu0 %v152
    %373 = vmatprep.subr.mxu0 %v147
    %374 = vmatpush2.msra.mxu0 %v146
    %375 = vmatprep.mubr.f32.mxu0 0.0
    %376 = vmatmul.mubr.f32.gmra.mxu0 0.0
    %v377 = vpop.f32.mrf.mxu0
    %v378 = vadd.f32 0.0, %v377
    %v379 = vpop.f32.mrf.mxu0
    %v380 = vadd.f32 0.0, %v379
    %381 = vdwg.mxu0
    %382 = vmatprep.subr.mxu0 %v143
    %383 = vmatpush1.msra.mxu0 %v142
    %384 = vmatprep.subr.mxu0 %v137
    %385 = vmatpush1.msra.mxu0 %v136
    %386 = vmatprep.subr.mxu0 %v131
    %387 = vmatpush1.msra.mxu0 %v130
    %388 = vmatprep.subr.mxu0 %v125
    %389 = vmatpush1.msra.mxu0 %v124
    %390 = vmatprep.subr.mxu0 %v119
    %391 = vmatpush1.msra.mxu0 %v118
    %392 = vmatprep.subr.mxu0 %v113
    %393 = vmatpush1.msra.mxu0 %v112
    %394 = vmatprep.subr.mxu0 %v107
    %395 = vmatpush1.msra.mxu0 %v106
    %396 = vmatprep.subr.mxu0 %v101
    %397 = vmatpush1.msra.mxu0 %v100
    %398 = vmatprep.subr.mxu0 %v95
    %399 = vmatpush1.msra.mxu0 %v94
    %400 = vmatprep.subr.mxu0 %v89
    %401 = vmatpush1.msra.mxu0 %v88
    %402 = vmatprep.subr.mxu0 %v83
    %403 = vmatpush1.msra.mxu0 %v82
    %404 = vmatprep.subr.mxu0 %v77
    %405 = vmatpush1.msra.mxu0 %v76
    %406 = vmatprep.subr.mxu0 %v71
    %407 = vmatpush1.msra.mxu0 %v70
    %408 = vmatprep.subr.mxu0 %v65
    %409 = vmatpush1.msra.mxu0 %v64
    %410 = vmatprep.subr.mxu0 %v59
    %411 = vmatpush1.msra.mxu0 %v58
    %412 = vmatprep.subr.mxu0 %v53
    %413 = vmatpush1.msra.mxu0 %v52
    %414 = vmatprep.subr.mxu0 %v239
    %415 = vmatpush2.msra.mxu0 %v238
    %416 = vmatprep.subr.mxu0 %v233
    %417 = vmatpush2.msra.mxu0 %v232
    %418 = vmatprep.subr.mxu0 %v227
    %419 = vmatpush2.msra.mxu0 %v226
    %420 = vmatprep.subr.mxu0 %v221
    %421 = vmatpush2.msra.mxu0 %v220
    %422 = vmatprep.subr.mxu0 %v215
    %423 = vmatpush2.msra.mxu0 %v214
    %424 = vmatprep.subr.mxu0 %v209
    %425 = vmatpush2.msra.mxu0 %v208
    %426 = vmatprep.subr.mxu0 %v203
    %427 = vmatpush2.msra.mxu0 %v202
    %428 = vmatprep.subr.mxu0 %v197
    %429 = vmatpush2.msra.mxu0 %v196
    %430 = vmatprep.subr.mxu0 %v191
    %431 = vmatpush2.msra.mxu0 %v190
    %432 = vmatprep.subr.mxu0 %v185
    %433 = vmatpush2.msra.mxu0 %v184
    %434 = vmatprep.subr.mxu0 %v179
    %435 = vmatpush2.msra.mxu0 %v178
    %436 = vmatprep.subr.mxu0 %v173
    %437 = vmatpush2.msra.mxu0 %v172
    %438 = vmatprep.subr.mxu0 %v167
    %439 = vmatpush2.msra.mxu0 %v166
    %440 = vmatprep.subr.mxu0 %v161
    %441 = vmatpush2.msra.mxu0 %v160
    %442 = vmatprep.subr.mxu0 %v155
    %443 = vmatpush2.msra.mxu0 %v154
    %444 = vmatprep.subr.mxu0 %v149
    %445 = vmatpush2.msra.mxu0 %v148
    %446 = vmatprep.mubr.f32.mxu0 0.0
    %447 = vmatmul.mubr.f32.gmra.mxu0 0.0
    %v448 = vpop.f32.mrf.mxu0
    %v449 = vadd.f32 0.0, %v448
    %v450 = vpop.f32.mrf.mxu0
    %v451 = vadd.f32 0.0, %v450
    %452 = vdwg.mxu0
    %s453 = smul.u32 0, 6
    %s454 = smul.addr %s453, 8
    %s455 = scalar_lea.vmem %s0, %s454
    %v456 = vld [vmem:[%s455] sm:$0xff]
    %v457 = vld [vmem:[%s455 + $0x8] sm:$0xff]
    %v458 = vld [vmem:[%s455 + $0x10] sm:$0xff]
    %s459 = smul.u32 7, 6
    %s460 = smul.addr %s459, 8
    %s461 = scalar_lea.vmem %s0, %s460
    %v462 = vld [vmem:[%s461 + $0x18] sm:$0xff]
    %v463 = vld [vmem:[%s461 + $0x20] sm:$0xff]
    %v464 = vld [vmem:[%s461 + $0x28] sm:$0xff]
    %v465 = vadd.f32 %v456, %v307
    %v466 = vxor.u32 %v465, 2147483648
    %v467 = vmul.f32 %v466, 1.442695
    %v468 = vpow.pop %v467
    %v469 = vadd.f32 %v468, 1.0
    %v470 = vrcp.pop %v469
    %v471 = vmul.f32 1.0, %v470
    %v472 = vadd.f32 %v457, %v309
    %v473 = vxor.u32 %v472, 2147483648
    %v474 = vmul.f32 %v473, 1.442695
    %v475 = vpow.pop %v474
    %v476 = vadd.f32 %v475, 1.0
    %v477 = vrcp.pop %v476
    %v478 = vmul.f32 1.0, %v477
    %v479 = vadd.f32 %v378, %v39
    %v480 = vmul.f32 %v471, %v479
    %v481 = vadd.f32 %v458, %v480
    %v482 = vtanh.pop %v481
    %v483 = vsub.f32 1.0, %v478
    %v484 = vmul.f32 %v483, %v482
    %v485 = vmul.f32 %v478, 0.0
    %v486 = vadd.f32 %v484, %v485
    %v487 = vadd.f32 %v462, %v380
    %v488 = vxor.u32 %v487, 2147483648
    %v489 = vmul.f32 %v488, 1.442695
    %v490 = vpow.pop %v489
    %v491 = vadd.f32 %v490, 1.0
    %v492 = vrcp.pop %v491
    %v493 = vmul.f32 1.0, %v492
    %v494 = vadd.f32 %v463, %v449
    %v495 = vxor.u32 %v494, 2147483648
    %v496 = vmul.f32 %v495, 1.442695
    %v497 = vpow.pop %v496
    %v498 = vadd.f32 %v497, 1.0
    %v499 = vrcp.pop %v498
    %v500 = vmul.f32 1.0, %v499
    %v501 = vadd.f32 %v451, %v46
    %v502 = vmul.f32 %v493, %v501
    %v503 = vadd.f32 %v464, %v502
    %v504 = vtanh.pop %v503
    %v505 = vsub.f32 1.0, %v500
    %v506 = vmul.f32 %v505, %v504
    %v507 = vmul.f32 %v500, 0.0
    %v508 = vadd.f32 %v506, %v507
    %s509 = smul.u32 0, 2
    %s510 = smul.addr %s509, 8
    %s511 = scalar_lea.vmem [#allocation2], %s510
    %512 = vst [vmem:[%s511] sm:$0xff] %v486
    %s513 = smul.u32 7, 2
    %s514 = smul.addr %s513, 8
    %s515 = scalar_lea.vmem [#allocation2], %s514
    %516 = vst [vmem:[%s515 + $0x8] sm:$0xff] %v508
    %v517 = vld [vmem:[%s1] sm:$0xff]
    %v518 = vld [vmem:[%s1 + $0x8] sm:$0xff]
    %v519 = vld [vmem:[%s1 + $0x10] sm:$0xff]
    %v520 = vld [vmem:[%s1 + $0x18] sm:$0xff]
    %v521 = vld [vmem:[%s1 + $0x20] sm:$0xff]
    %v522 = vld [vmem:[%s1 + $0x28] sm:$0xff]
    %v523 = vld [vmem:[%s1 + $0x30] sm:$0xff]
    %v524 = vld [vmem:[%s1 + $0x38] sm:$0xff]
    %v525 = vld [vmem:[%s1 + $0x40] sm:$0xff]
    %v526 = vld [vmem:[%s1 + $0x48] sm:$0xff]
    %v527 = vld [vmem:[%s1 + $0x50] sm:$0xff]
    %v528 = vld [vmem:[%s1 + $0x58] sm:$0xff]
    %v529 = vld [vmem:[%s1 + $0x60] sm:$0xff]
    %v530 = vld [vmem:[%s1 + $0x68] sm:$0xff]
    %v531 = vld [vmem:[%s1 + $0x70] sm:$0xff]
    %v532 = vld [vmem:[%s1 + $0x78] sm:$0xff]
    %v533 = vld [vmem:[%s1 + $0x80] sm:$0xff]
    %v534 = vld [vmem:[%s1 + $0x88] sm:$0xff]
    %v535 = vld [vmem:[%s1 + $0x90] sm:$0xff]
    %v536 = vld [vmem:[%s1 + $0x98] sm:$0xff]
    %v537 = vld [vmem:[%s1 + $0xa0] sm:$0xff]
    %v538 = vld [vmem:[%s1 + $0xa8] sm:$0xff]
    %v539 = vld [vmem:[%s1 + $0xb0] sm:$0xff]
    %v540 = vld [vmem:[%s1 + $0xb8] sm:$0xff]
    %v541 = vld [vmem:[%s1 + $0xc0] sm:$0xff]
    %v542 = vld [vmem:[%s1 + $0xc8] sm:$0xff]
    %v543 = vld [vmem:[%s1 + $0xd0] sm:$0xff]
    %v544 = vld [vmem:[%s1 + $0xd8] sm:$0xff]
    %v545 = vld [vmem:[%s1 + $0xe0] sm:$0xff]
    %v546 = vld [vmem:[%s1 + $0xe8] sm:$0xff]
    %v547 = vld [vmem:[%s1 + $0xf0] sm:$0xff]
    %v548 = vld [vmem:[%s1 + $0xf8] sm:$0xff]
    %v549 = vld [vmem:[%s1 + $0x100] sm:$0xff]
    %v550 = vld [vmem:[%s1 + $0x108] sm:$0xff]
    %v551 = vld [vmem:[%s1 + $0x110] sm:$0xff]
    %v552 = vld [vmem:[%s1 + $0x118] sm:$0xff]
    %v553 = vld [vmem:[%s1 + $0x120] sm:$0xff]
    %v554 = vld [vmem:[%s1 + $0x128] sm:$0xff]
    %v555 = vld [vmem:[%s1 + $0x130] sm:$0xff]
    %v556 = vld [vmem:[%s1 + $0x138] sm:$0xff]
    %v557 = vld [vmem:[%s1 + $0x140] sm:$0xff]
    %v558 = vld [vmem:[%s1 + $0x148] sm:$0xff]
    %v559 = vld [vmem:[%s1 + $0x150] sm:$0xff]
    %v560 = vld [vmem:[%s1 + $0x158] sm:$0xff]
    %v561 = vld [vmem:[%s1 + $0x160] sm:$0xff]
    %v562 = vld [vmem:[%s1 + $0x168] sm:$0xff]
    %v563 = vld [vmem:[%s1 + $0x170] sm:$0xff]
    %v564 = vld [vmem:[%s1 + $0x178] sm:$0xff]
    %v565 = vld [vmem:[%s1 + $0x180] sm:$0xff]
    %v566 = vld [vmem:[%s1 + $0x188] sm:$0xff]
    %v567 = vld [vmem:[%s1 + $0x190] sm:$0xff]
    %v568 = vld [vmem:[%s1 + $0x198] sm:$0xff]
    %v569 = vld [vmem:[%s1 + $0x1a0] sm:$0xff]
    %v570 = vld [vmem:[%s1 + $0x1a8] sm:$0xff]
    %v571 = vld [vmem:[%s1 + $0x1b0] sm:$0xff]
    %v572 = vld [vmem:[%s1 + $0x1b8] sm:$0xff]
    %v573 = vld [vmem:[%s1 + $0x1c0] sm:$0xff]
    %v574 = vld [vmem:[%s1 + $0x1c8] sm:$0xff]
    %v575 = vld [vmem:[%s1 + $0x1d0] sm:$0xff]
    %v576 = vld [vmem:[%s1 + $0x1d8] sm:$0xff]
    %v577 = vld [vmem:[%s1 + $0x1e0] sm:$0xff]
    %v578 = vld [vmem:[%s1 + $0x1e8] sm:$0xff]
    %v579 = vld [vmem:[%s1 + $0x1f0] sm:$0xff]
    %v580 = vld [vmem:[%s1 + $0x1f8] sm:$0xff]
    %v581 = vld [vmem:[%s1 + $0x200] sm:$0xff]
    %v582 = vld [vmem:[%s1 + $0x208] sm:$0xff]
    %v583 = vld [vmem:[%s1 + $0x210] sm:$0xff]
    %v584 = vld [vmem:[%s1 + $0x218] sm:$0xff]
    %v585 = vld [vmem:[%s1 + $0x220] sm:$0xff]
    %v586 = vld [vmem:[%s1 + $0x228] sm:$0xff]
    %v587 = vld [vmem:[%s1 + $0x230] sm:$0xff]
    %v588 = vld [vmem:[%s1 + $0x238] sm:$0xff]
    %v589 = vld [vmem:[%s1 + $0x240] sm:$0xff]
    %v590 = vld [vmem:[%s1 + $0x248] sm:$0xff]
    %v591 = vld [vmem:[%s1 + $0x250] sm:$0xff]
    %v592 = vld [vmem:[%s1 + $0x258] sm:$0xff]
    %v593 = vld [vmem:[%s1 + $0x260] sm:$0xff]
    %v594 = vld [vmem:[%s1 + $0x268] sm:$0xff]
    %v595 = vld [vmem:[%s1 + $0x270] sm:$0xff]
    %v596 = vld [vmem:[%s1 + $0x278] sm:$0xff]
    %v597 = vld [vmem:[%s1 + $0x280] sm:$0xff]
    %v598 = vld [vmem:[%s1 + $0x288] sm:$0xff]
    %v599 = vld [vmem:[%s1 + $0x290] sm:$0xff]
    %v600 = vld [vmem:[%s1 + $0x298] sm:$0xff]
    %v601 = vld [vmem:[%s1 + $0x2a0] sm:$0xff]
    %v602 = vld [vmem:[%s1 + $0x2a8] sm:$0xff]
    %v603 = vld [vmem:[%s1 + $0x2b0] sm:$0xff]
    %v604 = vld [vmem:[%s1 + $0x2b8] sm:$0xff]
    %v605 = vld [vmem:[%s1 + $0x2c0] sm:$0xff]
    %v606 = vld [vmem:[%s1 + $0x2c8] sm:$0xff]
    %v607 = vld [vmem:[%s1 + $0x2d0] sm:$0xff]
    %v608 = vld [vmem:[%s1 + $0x2d8] sm:$0xff]
    %v609 = vld [vmem:[%s1 + $0x2e0] sm:$0xff]
    %v610 = vld [vmem:[%s1 + $0x2e8] sm:$0xff]
    %v611 = vld [vmem:[%s1 + $0x2f0] sm:$0xff]
    %v612 = vld [vmem:[%s1 + $0x2f8] sm:$0xff]
    %v613 = vld [vmem:[%s1 + $0x300] sm:$0xff]
    %v614 = vld [vmem:[%s1 + $0x308] sm:$0xff]
    %v615 = vld [vmem:[%s1 + $0x310] sm:$0xff]
    %v616 = vld [vmem:[%s1 + $0x318] sm:$0xff]
    %v617 = vld [vmem:[%s1 + $0x320] sm:$0xff]
    %v618 = vld [vmem:[%s1 + $0x328] sm:$0xff]
    %v619 = vld [vmem:[%s1 + $0x330] sm:$0xff]
    %v620 = vld [vmem:[%s1 + $0x338] sm:$0xff]
    %v621 = vld [vmem:[%s1 + $0x340] sm:$0xff]
    %v622 = vld [vmem:[%s1 + $0x348] sm:$0xff]
    %v623 = vld [vmem:[%s1 + $0x350] sm:$0xff]
    %v624 = vld [vmem:[%s1 + $0x358] sm:$0xff]
    %v625 = vld [vmem:[%s1 + $0x360] sm:$0xff]
    %v626 = vld [vmem:[%s1 + $0x368] sm:$0xff]
    %v627 = vld [vmem:[%s1 + $0x370] sm:$0xff]
    %v628 = vld [vmem:[%s1 + $0x378] sm:$0xff]
    %v629 = vld [vmem:[%s1 + $0x380] sm:$0xff]
    %v630 = vld [vmem:[%s1 + $0x388] sm:$0xff]
    %v631 = vld [vmem:[%s1 + $0x390] sm:$0xff]
    %v632 = vld [vmem:[%s1 + $0x398] sm:$0xff]
    %v633 = vld [vmem:[%s1 + $0x3a0] sm:$0xff]
    %v634 = vld [vmem:[%s1 + $0x3a8] sm:$0xff]
    %v635 = vld [vmem:[%s1 + $0x3b0] sm:$0xff]
    %v636 = vld [vmem:[%s1 + $0x3b8] sm:$0xff]
    %v637 = vld [vmem:[%s1 + $0x3c0] sm:$0xff]
    %v638 = vld [vmem:[%s1 + $0x3c8] sm:$0xff]
    %v639 = vld [vmem:[%s1 + $0x3d0] sm:$0xff]
    %v640 = vld [vmem:[%s1 + $0x3d8] sm:$0xff]
    %v641 = vld [vmem:[%s1 + $0x3e0] sm:$0xff]
    %v642 = vld [vmem:[%s1 + $0x3e8] sm:$0xff]
    %v643 = vld [vmem:[%s1 + $0x3f0] sm:$0xff]
    %v644 = vld [vmem:[%s1 + $0x3f8] sm:$0xff]
    %v645 = vld [vmem:[%s1 + $0x400] sm:$0xff]
    %v646 = vld [vmem:[%s1 + $0x408] sm:$0xff]
    %v647 = vld [vmem:[%s1 + $0x410] sm:$0xff]
    %v648 = vld [vmem:[%s1 + $0x418] sm:$0xff]
    %v649 = vld [vmem:[%s1 + $0x420] sm:$0xff]
    %v650 = vld [vmem:[%s1 + $0x428] sm:$0xff]
    %v651 = vld [vmem:[%s1 + $0x430] sm:$0xff]
    %v652 = vld [vmem:[%s1 + $0x438] sm:$0xff]
    %v653 = vld [vmem:[%s1 + $0x440] sm:$0xff]
    %v654 = vld [vmem:[%s1 + $0x448] sm:$0xff]
    %v655 = vld [vmem:[%s1 + $0x450] sm:$0xff]
    %v656 = vld [vmem:[%s1 + $0x458] sm:$0xff]
    %v657 = vld [vmem:[%s1 + $0x460] sm:$0xff]
    %v658 = vld [vmem:[%s1 + $0x468] sm:$0xff]
    %v659 = vld [vmem:[%s1 + $0x470] sm:$0xff]
    %v660 = vld [vmem:[%s1 + $0x478] sm:$0xff]
    %v661 = vld [vmem:[%s1 + $0x480] sm:$0xff]
    %v662 = vld [vmem:[%s1 + $0x488] sm:$0xff]
    %v663 = vld [vmem:[%s1 + $0x490] sm:$0xff]
    %v664 = vld [vmem:[%s1 + $0x498] sm:$0xff]
    %v665 = vld [vmem:[%s1 + $0x4a0] sm:$0xff]
    %v666 = vld [vmem:[%s1 + $0x4a8] sm:$0xff]
    %v667 = vld [vmem:[%s1 + $0x4b0] sm:$0xff]
    %v668 = vld [vmem:[%s1 + $0x4b8] sm:$0xff]
    %v669 = vld [vmem:[%s1 + $0x4c0] sm:$0xff]
    %v670 = vld [vmem:[%s1 + $0x4c8] sm:$0xff]
    %v671 = vld [vmem:[%s1 + $0x4d0] sm:$0xff]
    %v672 = vld [vmem:[%s1 + $0x4d8] sm:$0xff]
    %v673 = vld [vmem:[%s1 + $0x4e0] sm:$0xff]
    %v674 = vld [vmem:[%s1 + $0x4e8] sm:$0xff]
    %v675 = vld [vmem:[%s1 + $0x4f0] sm:$0xff]
    %v676 = vld [vmem:[%s1 + $0x4f8] sm:$0xff]
    %v677 = vld [vmem:[%s1 + $0x500] sm:$0xff]
    %v678 = vld [vmem:[%s1 + $0x508] sm:$0xff]
    %v679 = vld [vmem:[%s1 + $0x510] sm:$0xff]
    %v680 = vld [vmem:[%s1 + $0x518] sm:$0xff]
    %v681 = vld [vmem:[%s1 + $0x520] sm:$0xff]
    %v682 = vld [vmem:[%s1 + $0x528] sm:$0xff]
    %v683 = vld [vmem:[%s1 + $0x530] sm:$0xff]
    %v684 = vld [vmem:[%s1 + $0x538] sm:$0xff]
    %v685 = vld [vmem:[%s1 + $0x540] sm:$0xff]
    %v686 = vld [vmem:[%s1 + $0x548] sm:$0xff]
    %v687 = vld [vmem:[%s1 + $0x550] sm:$0xff]
    %v688 = vld [vmem:[%s1 + $0x558] sm:$0xff]
    %v689 = vld [vmem:[%s1 + $0x560] sm:$0xff]
    %v690 = vld [vmem:[%s1 + $0x568] sm:$0xff]
    %v691 = vld [vmem:[%s1 + $0x570] sm:$0xff]
    %v692 = vld [vmem:[%s1 + $0x578] sm:$0xff]
    %v693 = vld [vmem:[%s1 + $0x580] sm:$0xff]
    %v694 = vld [vmem:[%s1 + $0x588] sm:$0xff]
    %v695 = vld [vmem:[%s1 + $0x590] sm:$0xff]
    %v696 = vld [vmem:[%s1 + $0x598] sm:$0xff]
    %v697 = vld [vmem:[%s1 + $0x5a0] sm:$0xff]
    %v698 = vld [vmem:[%s1 + $0x5a8] sm:$0xff]
    %v699 = vld [vmem:[%s1 + $0x5b0] sm:$0xff]
    %v700 = vld [vmem:[%s1 + $0x5b8] sm:$0xff]
    %v701 = vld [vmem:[%s1 + $0x5c0] sm:$0xff]
    %v702 = vld [vmem:[%s1 + $0x5c8] sm:$0xff]
    %v703 = vld [vmem:[%s1 + $0x5d0] sm:$0xff]
    %v704 = vld [vmem:[%s1 + $0x5d8] sm:$0xff]
    %v705 = vld [vmem:[%s1 + $0x5e0] sm:$0xff]
    %v706 = vld [vmem:[%s1 + $0x5e8] sm:$0xff]
    %v707 = vld [vmem:[%s1 + $0x5f0] sm:$0xff]
    %v708 = vld [vmem:[%s1 + $0x5f8] sm:$0xff]
    %709 = vmatprep.subr.mxu0 %v608
    %710 = vmatpush1.msra.mxu0 %v607
    %711 = vmatprep.subr.mxu0 %v602
    %712 = vmatpush1.msra.mxu0 %v601
    %713 = vmatprep.subr.mxu0 %v596
    %714 = vmatpush1.msra.mxu0 %v595
    %715 = vmatprep.subr.mxu0 %v590
    %716 = vmatpush1.msra.mxu0 %v589
    %717 = vmatprep.subr.mxu0 %v584
    %718 = vmatpush1.msra.mxu0 %v583
    %719 = vmatprep.subr.mxu0 %v578
    %720 = vmatpush1.msra.mxu0 %v577
    %721 = vmatprep.subr.mxu0 %v572
    %722 = vmatpush1.msra.mxu0 %v571
    %723 = vmatprep.subr.mxu0 %v566
    %724 = vmatpush1.msra.mxu0 %v565
    %725 = vmatprep.subr.mxu0 %v560
    %726 = vmatpush1.msra.mxu0 %v559
    %727 = vmatprep.subr.mxu0 %v554
    %728 = vmatpush1.msra.mxu0 %v553
    %729 = vmatprep.subr.mxu0 %v548
    %730 = vmatpush1.msra.mxu0 %v547
    %731 = vmatprep.subr.mxu0 %v542
    %732 = vmatpush1.msra.mxu0 %v541
    %733 = vmatprep.subr.mxu0 %v536
    %734 = vmatpush1.msra.mxu0 %v535
    %735 = vmatprep.subr.mxu0 %v530
    %736 = vmatpush1.msra.mxu0 %v529
    %737 = vmatprep.subr.mxu0 %v524
    %738 = vmatpush1.msra.mxu0 %v523
    %739 = vmatprep.subr.mxu0 %v518
    %740 = vmatpush1.msra.mxu0 %v517
    %741 = vmatprep.subr.mxu0 %v704
    %742 = vmatpush2.msra.mxu0 %v703
    %743 = vmatprep.subr.mxu0 %v698
    %744 = vmatpush2.msra.mxu0 %v697
    %745 = vmatprep.subr.mxu0 %v692
    %746 = vmatpush2.msra.mxu0 %v691
    %747 = vmatprep.subr.mxu0 %v686
    %748 = vmatpush2.msra.mxu0 %v685
    %749 = vmatprep.subr.mxu0 %v680
    %750 = vmatpush2.msra.mxu0 %v679
    %751 = vmatprep.subr.mxu0 %v674
    %752 = vmatpush2.msra.mxu0 %v673
    %753 = vmatprep.subr.mxu0 %v668
    %754 = vmatpush2.msra.mxu0 %v667
    %755 = vmatprep.subr.mxu0 %v662
    %756 = vmatpush2.msra.mxu0 %v661
    %757 = vmatprep.subr.mxu0 %v656
    %758 = vmatpush2.msra.mxu0 %v655
    %759 = vmatprep.subr.mxu0 %v650
    %760 = vmatpush2.msra.mxu0 %v649
    %761 = vmatprep.subr.mxu0 %v644
    %762 = vmatpush2.msra.mxu0 %v643
    %763 = vmatprep.subr.mxu0 %v638
    %764 = vmatpush2.msra.mxu0 %v637
    %765 = vmatprep.subr.mxu0 %v632
    %766 = vmatpush2.msra.mxu0 %v631
    %767 = vmatprep.subr.mxu0 %v626
    %768 = vmatpush2.msra.mxu0 %v625
    %769 = vmatprep.subr.mxu0 %v620
    %770 = vmatpush2.msra.mxu0 %v619
    %771 = vmatprep.subr.mxu0 %v614
    %772 = vmatpush2.msra.mxu0 %v613
    %773 = vmatprep.mubr.f32.mxu0 %v508
    %774 = vmatmul.mubr.f32.gmra.mxu0 %v486
    %v775 = vpop.f32.mrf.mxu0
    %v776 = vadd.f32 0.0, %v775
    %v777 = vpop.f32.mrf.mxu0
    %v778 = vadd.f32 0.0, %v777
    %779 = vdwg.mxu0
    %780 = vmatprep.subr.mxu0 %v610
    %781 = vmatpush1.msra.mxu0 %v609
    %782 = vmatprep.subr.mxu0 %v604
    %783 = vmatpush1.msra.mxu0 %v603
    %784 = vmatprep.subr.mxu0 %v598
    %785 = vmatpush1.msra.mxu0 %v597
    %786 = vmatprep.subr.mxu0 %v592
    %787 = vmatpush1.msra.mxu0 %v591
    %788 = vmatprep.subr.mxu0 %v586
    %789 = vmatpush1.msra.mxu0 %v585
    %790 = vmatprep.subr.mxu0 %v580
    %791 = vmatpush1.msra.mxu0 %v579
    %792 = vmatprep.subr.mxu0 %v574
    %793 = vmatpush1.msra.mxu0 %v573
    %794 = vmatprep.subr.mxu0 %v568
    %795 = vmatpush1.msra.mxu0 %v567
    %796 = vmatprep.subr.mxu0 %v562
    %797 = vmatpush1.msra.mxu0 %v561
    %798 = vmatprep.subr.mxu0 %v556
    %799 = vmatpush1.msra.mxu0 %v555
    %800 = vmatprep.subr.mxu0 %v550
    %801 = vmatpush1.msra.mxu0 %v549
    %802 = vmatprep.subr.mxu0 %v544
    %803 = vmatpush1.msra.mxu0 %v543
    %804 = vmatprep.subr.mxu0 %v538
    %805 = vmatpush1.msra.mxu0 %v537
    %806 = vmatprep.subr.mxu0 %v532
    %807 = vmatpush1.msra.mxu0 %v531
    %808 = vmatprep.subr.mxu0 %v526
    %809 = vmatpush1.msra.mxu0 %v525
    %810 = vmatprep.subr.mxu0 %v520
    %811 = vmatpush1.msra.mxu0 %v519
    %812 = vmatprep.subr.mxu0 %v706
    %813 = vmatpush2.msra.mxu0 %v705
    %814 = vmatprep.subr.mxu0 %v700
    %815 = vmatpush2.msra.mxu0 %v699
    %816 = vmatprep.subr.mxu0 %v694
    %817 = vmatpush2.msra.mxu0 %v693
    %818 = vmatprep.subr.mxu0 %v688
    %819 = vmatpush2.msra.mxu0 %v687
    %820 = vmatprep.subr.mxu0 %v682
    %821 = vmatpush2.msra.mxu0 %v681
    %822 = vmatprep.subr.mxu0 %v676
    %823 = vmatpush2.msra.mxu0 %v675
    %824 = vmatprep.subr.mxu0 %v670
    %825 = vmatpush2.msra.mxu0 %v669
    %826 = vmatprep.subr.mxu0 %v664
    %827 = vmatpush2.msra.mxu0 %v663
    %828 = vmatprep.subr.mxu0 %v658
    %829 = vmatpush2.msra.mxu0 %v657
    %830 = vmatprep.subr.mxu0 %v652
    %831 = vmatpush2.msra.mxu0 %v651
    %832 = vmatprep.subr.mxu0 %v646
    %833 = vmatpush2.msra.mxu0 %v645
    %834 = vmatprep.subr.mxu0 %v640
    %835 = vmatpush2.msra.mxu0 %v639
    %836 = vmatprep.subr.mxu0 %v634
    %837 = vmatpush2.msra.mxu0 %v633
    %838 = vmatprep.subr.mxu0 %v628
    %839 = vmatpush2.msra.mxu0 %v627
    %840 = vmatprep.subr.mxu0 %v622
    %841 = vmatpush2.msra.mxu0 %v621
    %842 = vmatprep.subr.mxu0 %v616
    %843 = vmatpush2.msra.mxu0 %v615
    %844 = vmatprep.mubr.f32.mxu0 %v508
    %845 = vmatmul.mubr.f32.gmra.mxu0 %v486
    %v846 = vpop.f32.mrf.mxu0
    %v847 = vadd.f32 0.0, %v846
    %v848 = vpop.f32.mrf.mxu0
    %v849 = vadd.f32 0.0, %v848
    %850 = vdwg.mxu0
    %851 = vmatprep.subr.mxu0 %v612
    %852 = vmatpush1.msra.mxu0 %v611
    %853 = vmatprep.subr.mxu0 %v606
    %854 = vmatpush1.msra.mxu0 %v605
    %855 = vmatprep.subr.mxu0 %v600
    %856 = vmatpush1.msra.mxu0 %v599
    %857 = vmatprep.subr.mxu0 %v594
    %858 = vmatpush1.msra.mxu0 %v593
    %859 = vmatprep.subr.mxu0 %v588
    %860 = vmatpush1.msra.mxu0 %v587
    %861 = vmatprep.subr.mxu0 %v582
    %862 = vmatpush1.msra.mxu0 %v581
    %863 = vmatprep.subr.mxu0 %v576
    %864 = vmatpush1.msra.mxu0 %v575
    %865 = vmatprep.subr.mxu0 %v570
    %866 = vmatpush1.msra.mxu0 %v569
    %867 = vmatprep.subr.mxu0 %v564
    %868 = vmatpush1.msra.mxu0 %v563
    %869 = vmatprep.subr.mxu0 %v558
    %870 = vmatpush1.msra.mxu0 %v557
    %871 = vmatprep.subr.mxu0 %v552
    %872 = vmatpush1.msra.mxu0 %v551
    %873 = vmatprep.subr.mxu0 %v546
    %874 = vmatpush1.msra.mxu0 %v545
    %875 = vmatprep.subr.mxu0 %v540
    %876 = vmatpush1.msra.mxu0 %v539
    %877 = vmatprep.subr.mxu0 %v534
    %878 = vmatpush1.msra.mxu0 %v533
    %879 = vmatprep.subr.mxu0 %v528
    %880 = vmatpush1.msra.mxu0 %v527
    %881 = vmatprep.subr.mxu0 %v522
    %882 = vmatpush1.msra.mxu0 %v521
    %883 = vmatprep.subr.mxu0 %v708
    %884 = vmatpush2.msra.mxu0 %v707
    %885 = vmatprep.subr.mxu0 %v702
    %886 = vmatpush2.msra.mxu0 %v701
    %887 = vmatprep.subr.mxu0 %v696
    %888 = vmatpush2.msra.mxu0 %v695
    %889 = vmatprep.subr.mxu0 %v690
    %890 = vmatpush2.msra.mxu0 %v689
    %891 = vmatprep.subr.mxu0 %v684
    %892 = vmatpush2.msra.mxu0 %v683
    %893 = vmatprep.subr.mxu0 %v678
    %894 = vmatpush2.msra.mxu0 %v677
    %895 = vmatprep.subr.mxu0 %v672
    %896 = vmatpush2.msra.mxu0 %v671
    %897 = vmatprep.subr.mxu0 %v666
    %898 = vmatpush2.msra.mxu0 %v665
    %899 = vmatprep.subr.mxu0 %v660
    %900 = vmatpush2.msra.mxu0 %v659
    %901 = vmatprep.subr.mxu0 %v654
    %902 = vmatpush2.msra.mxu0 %v653
    %903 = vmatprep.subr.mxu0 %v648
    %904 = vmatpush2.msra.mxu0 %v647
    %905 = vmatprep.subr.mxu0 %v642
    %906 = vmatpush2.msra.mxu0 %v641
    %907 = vmatprep.subr.mxu0 %v636
    %908 = vmatpush2.msra.mxu0 %v635
    %909 = vmatprep.subr.mxu0 %v630
    %910 = vmatpush2.msra.mxu0 %v629
    %911 = vmatprep.subr.mxu0 %v624
    %912 = vmatpush2.msra.mxu0 %v623
    %913 = vmatprep.subr.mxu0 %v618
    %914 = vmatpush2.msra.mxu0 %v617
    %915 = vmatprep.mubr.f32.mxu0 %v508
    %916 = vmatmul.mubr.f32.gmra.mxu0 %v486
    %v917 = vpop.f32.mrf.mxu0
    %v918 = vadd.f32 0.0, %v917
    %v919 = vpop.f32.mrf.mxu0
    %v920 = vadd.f32 0.0, %v919
    %921 = vdwg.mxu0
    %s922 = smul.u32 1, 6
    %s923 = smul.addr %s922, 8
    %s924 = scalar_lea.vmem %s0, %s923
    %v925 = vld [vmem:[%s924] sm:$0xff]
    %v926 = vld [vmem:[%s924 + $0x8] sm:$0xff]
    %v927 = vld [vmem:[%s924 + $0x10] sm:$0xff]
    %s928 = smul.u32 6, 6
    %s929 = smul.addr %s928, 8
    %s930 = scalar_lea.vmem %s0, %s929
    %v931 = vld [vmem:[%s930 + $0x18] sm:$0xff]
    %v932 = vld [vmem:[%s930 + $0x20] sm:$0xff]
    %v933 = vld [vmem:[%s930 + $0x28] sm:$0xff]
    %v934 = vadd.f32 %v925, %v776
    %v935 = vxor.u32 %v934, 2147483648
    %v936 = vmul.f32 %v935, 1.442695
    %v937 = vpow.pop %v936
    %v938 = vadd.f32 %v937, 1.0
    %v939 = vrcp.pop %v938
    %v940 = vmul.f32 1.0, %v939
    %v941 = vadd.f32 %v926, %v778
    %v942 = vxor.u32 %v941, 2147483648
    %v943 = vmul.f32 %v942, 1.442695
    %v944 = vpow.pop %v943
    %v945 = vadd.f32 %v944, 1.0
    %v946 = vrcp.pop %v945
    %v947 = vmul.f32 1.0, %v946
    %v948 = vadd.f32 %v847, %v39
    %v949 = vmul.f32 %v940, %v948
    %v950 = vadd.f32 %v927, %v949
    %v951 = vtanh.pop %v950
    %v952 = vsub.f32 1.0, %v947
    %v953 = vmul.f32 %v952, %v951
    %v954 = vmul.f32 %v947, %v486
    %v955 = vadd.f32 %v953, %v954
    %v956 = vadd.f32 %v931, %v849
    %v957 = vxor.u32 %v956, 2147483648
    %v958 = vmul.f32 %v957, 1.442695
    %v959 = vpow.pop %v958
    %v960 = vadd.f32 %v959, 1.0
    %v961 = vrcp.pop %v960
    %v962 = vmul.f32 1.0, %v961
    %v963 = vadd.f32 %v932, %v918
    %v964 = vxor.u32 %v963, 2147483648
    %v965 = vmul.f32 %v964, 1.442695
    %v966 = vpow.pop %v965
    %v967 = vadd.f32 %v966, 1.0
    %v968 = vrcp.pop %v967
    %v969 = vmul.f32 1.0, %v968
    %v970 = vadd.f32 %v920, %v46
    %v971 = vmul.f32 %v962, %v970
    %v972 = vadd.f32 %v933, %v971
    %v973 = vtanh.pop %v972
    %v974 = vsub.f32 1.0, %v969
    %v975 = vmul.f32 %v974, %v973
    %v976 = vmul.f32 %v969, %v508
    %v977 = vadd.f32 %v975, %v976
    %s978 = smul.u32 1, 2
    %s979 = smul.addr %s978, 8
    %s980 = scalar_lea.vmem [#allocation2], %s979
    %981 = vst [vmem:[%s980] sm:$0xff] %v955
    %s982 = smul.u32 6, 2
    %s983 = smul.addr %s982, 8
    %s984 = scalar_lea.vmem [#allocation2], %s983
    %985 = vst [vmem:[%s984 + $0x8] sm:$0xff] %v977
    %v986 = vld [vmem:[%s1] sm:$0xff]
    %v987 = vld [vmem:[%s1 + $0x8] sm:$0xff]
    %v988 = vld [vmem:[%s1 + $0x10] sm:$0xff]
    %v989 = vld [vmem:[%s1 + $0x18] sm:$0xff]
    %v990 = vld [vmem:[%s1 + $0x20] sm:$0xff]
    %v991 = vld [vmem:[%s1 + $0x28] sm:$0xff]
    %v992 = vld [vmem:[%s1 + $0x30] sm:$0xff]
    %v993 = vld [vmem:[%s1 + $0x38] sm:$0xff]
    %v994 = vld [vmem:[%s1 + $0x40] sm:$0xff]
    %v995 = vld [vmem:[%s1 + $0x48] sm:$0xff]
    %v996 = vld [vmem:[%s1 + $0x50] sm:$0xff]
    %v997 = vld [vmem:[%s1 + $0x58] sm:$0xff]
    %v998 = vld [vmem:[%s1 + $0x60] sm:$0xff]
    %v999 = vld [vmem:[%s1 + $0x68] sm:$0xff]
    %v1000 = vld [vmem:[%s1 + $0x70] sm:$0xff]
    %v1001 = vld [vmem:[%s1 + $0x78] sm:$0xff]
    %v1002 = vld [vmem:[%s1 + $0x80] sm:$0xff]
    %v1003 = vld [vmem:[%s1 + $0x88] sm:$0xff]
    %v1004 = vld [vmem:[%s1 + $0x90] sm:$0xff]
    %v1005 = vld [vmem:[%s1 + $0x98] sm:$0xff]
    %v1006 = vld [vmem:[%s1 + $0xa0] sm:$0xff]
    %v1007 = vld [vmem:[%s1 + $0xa8] sm:$0xff]
    %v1008 = vld [vmem:[%s1 + $0xb0] sm:$0xff]
    %v1009 = vld [vmem:[%s1 + $0xb8] sm:$0xff]
    %v1010 = vld [vmem:[%s1 + $0xc0] sm:$0xff]
    %v1011 = vld [vmem:[%s1 + $0xc8] sm:$0xff]
    %v1012 = vld [vmem:[%s1 + $0xd0] sm:$0xff]
    %v1013 = vld [vmem:[%s1 + $0xd8] sm:$0xff]
    %v1014 = vld [vmem:[%s1 + $0xe0] sm:$0xff]
    %v1015 = vld [vmem:[%s1 + $0xe8] sm:$0xff]
    %v1016 = vld [vmem:[%s1 + $0xf0] sm:$0xff]
    %v1017 = vld [vmem:[%s1 + $0xf8] sm:$0xff]
    %v1018 = vld [vmem:[%s1 + $0x100] sm:$0xff]
    %v1019 = vld [vmem:[%s1 + $0x108] sm:$0xff]
    %v1020 = vld [vmem:[%s1 + $0x110] sm:$0xff]
    %v1021 = vld [vmem:[%s1 + $0x118] sm:$0xff]
    %v1022 = vld [vmem:[%s1 + $0x120] sm:$0xff]
    %v1023 = vld [vmem:[%s1 + $0x128] sm:$0xff]
    %v1024 = vld [vmem:[%s1 + $0x130] sm:$0xff]
    %v1025 = vld [vmem:[%s1 + $0x138] sm:$0xff]
    %v1026 = vld [vmem:[%s1 + $0x140] sm:$0xff]
    %v1027 = vld [vmem:[%s1 + $0x148] sm:$0xff]
    %v1028 = vld [vmem:[%s1 + $0x150] sm:$0xff]
    %v1029 = vld [vmem:[%s1 + $0x158] sm:$0xff]
    %v1030 = vld [vmem:[%s1 + $0x160] sm:$0xff]
    %v1031 = vld [vmem:[%s1 + $0x168] sm:$0xff]
    %v1032 = vld [vmem:[%s1 + $0x170] sm:$0xff]
    %v1033 = vld [vmem:[%s1 + $0x178] sm:$0xff]
    %v1034 = vld [vmem:[%s1 + $0x180] sm:$0xff]
    %v1035 = vld [vmem:[%s1 + $0x188] sm:$0xff]
    %v1036 = vld [vmem:[%s1 + $0x190] sm:$0xff]
    %v1037 = vld [vmem:[%s1 + $0x198] sm:$0xff]
    %v1038 = vld [vmem:[%s1 + $0x1a0] sm:$0xff]
    %v1039 = vld [vmem:[%s1 + $0x1a8] sm:$0xff]
    %v1040 = vld [vmem:[%s1 + $0x1b0] sm:$0xff]
    %v1041 = vld [vmem:[%s1 + $0x1b8] sm:$0xff]
    %v1042 = vld [vmem:[%s1 + $0x1c0] sm:$0xff]
    %v1043 = vld [vmem:[%s1 + $0x1c8] sm:$0xff]
    %v1044 = vld [vmem:[%s1 + $0x1d0] sm:$0xff]
    %v1045 = vld [vmem:[%s1 + $0x1d8] sm:$0xff]
    %v1046 = vld [vmem:[%s1 + $0x1e0] sm:$0xff]
    %v1047 = vld [vmem:[%s1 + $0x1e8] sm:$0xff]
    %v1048 = vld [vmem:[%s1 + $0x1f0] sm:$0xff]
    %v1049 = vld [vmem:[%s1 + $0x1f8] sm:$0xff]
    %v1050 = vld [vmem:[%s1 + $0x200] sm:$0xff]
    %v1051 = vld [vmem:[%s1 + $0x208] sm:$0xff]
    %v1052 = vld [vmem:[%s1 + $0x210] sm:$0xff]
    %v1053 = vld [vmem:[%s1 + $0x218] sm:$0xff]
    %v1054 = vld [vmem:[%s1 + $0x220] sm:$0xff]
    %v1055 = vld [vmem:[%s1 + $0x228] sm:$0xff]
    %v1056 = vld [vmem:[%s1 + $0x230] sm:$0xff]
    %v1057 = vld [vmem:[%s1 + $0x238] sm:$0xff]
    %v1058 = vld [vmem:[%s1 + $0x240] sm:$0xff]
    %v1059 = vld [vmem:[%s1 + $0x248] sm:$0xff]
    %v1060 = vld [vmem:[%s1 + $0x250] sm:$0xff]
    %v1061 = vld [vmem:[%s1 + $0x258] sm:$0xff]
    %v1062 = vld [vmem:[%s1 + $0x260] sm:$0xff]
    %v1063 = vld [vmem:[%s1 + $0x268] sm:$0xff]
    %v1064 = vld [vmem:[%s1 + $0x270] sm:$0xff]
    %v1065 = vld [vmem:[%s1 + $0x278] sm:$0xff]
    %v1066 = vld [vmem:[%s1 + $0x280] sm:$0xff]
    %v1067 = vld [vmem:[%s1 + $0x288] sm:$0xff]
    %v1068 = vld [vmem:[%s1 + $0x290] sm:$0xff]
    %v1069 = vld [vmem:[%s1 + $0x298] sm:$0xff]
    %v1070 = vld [vmem:[%s1 + $0x2a0] sm:$0xff]
    %v1071 = vld [vmem:[%s1 + $0x2a8] sm:$0xff]
    %v1072 = vld [vmem:[%s1 + $0x2b0] sm:$0xff]
    %v1073 = vld [vmem:[%s1 + $0x2b8] sm:$0xff]
    %v1074 = vld [vmem:[%s1 + $0x2c0] sm:$0xff]
    %v1075 = vld [vmem:[%s1 + $0x2c8] sm:$0xff]
    %v1076 = vld [vmem:[%s1 + $0x2d0] sm:$0xff]
    %v1077 = vld [vmem:[%s1 + $0x2d8] sm:$0xff]
    %v1078 = vld [vmem:[%s1 + $0x2e0] sm:$0xff]
    %v1079 = vld [vmem:[%s1 + $0x2e8] sm:$0xff]
    %v1080 = vld [vmem:[%s1 + $0x2f0] sm:$0xff]
    %v1081 = vld [vmem:[%s1 + $0x2f8] sm:$0xff]
    %v1082 = vld [vmem:[%s1 + $0x300] sm:$0xff]
    %v1083 = vld [vmem:[%s1 + $0x308] sm:$0xff]
    %v1084 = vld [vmem:[%s1 + $0x310] sm:$0xff]
    %v1085 = vld [vmem:[%s1 + $0x318] sm:$0xff]
    %v1086 = vld [vmem:[%s1 + $0x320] sm:$0xff]
    %v1087 = vld [vmem:[%s1 + $0x328] sm:$0xff]
    %v1088 = vld [vmem:[%s1 + $0x330] sm:$0xff]
    %v1089 = vld [vmem:[%s1 + $0x338] sm:$0xff]
    %v1090 = vld [vmem:[%s1 + $0x340] sm:$0xff]
    %v1091 = vld [vmem:[%s1 + $0x348] sm:$0xff]
    %v1092 = vld [vmem:[%s1 + $0x350] sm:$0xff]
    %v1093 = vld [vmem:[%s1 + $0x358] sm:$0xff]
    %v1094 = vld [vmem:[%s1 + $0x360] sm:$0xff]
    %v1095 = vld [vmem:[%s1 + $0x368] sm:$0xff]
    %v1096 = vld [vmem:[%s1 + $0x370] sm:$0xff]
    %v1097 = vld [vmem:[%s1 + $0x378] sm:$0xff]
    %v1098 = vld [vmem:[%s1 + $0x380] sm:$0xff]
    %v1099 = vld [vmem:[%s1 + $0x388] sm:$0xff]
    %v1100 = vld [vmem:[%s1 + $0x390] sm:$0xff]
    %v1101 = vld [vmem:[%s1 + $0x398] sm:$0xff]
    %v1102 = vld [vmem:[%s1 + $0x3a0] sm:$0xff]
    %v1103 = vld [vmem:[%s1 + $0x3a8] sm:$0xff]
    %v1104 = vld [vmem:[%s1 + $0x3b0] sm:$0xff]
    %v1105 = vld [vmem:[%s1 + $0x3b8] sm:$0xff]
    %v1106 = vld [vmem:[%s1 + $0x3c0] sm:$0xff]
    %v1107 = vld [vmem:[%s1 + $0x3c8] sm:$0xff]
    %v1108 = vld [vmem:[%s1 + $0x3d0] sm:$0xff]
    %v1109 = vld [vmem:[%s1 + $0x3d8] sm:$0xff]
    %v1110 = vld [vmem:[%s1 + $0x3e0] sm:$0xff]
    %v1111 = vld [vmem:[%s1 + $0x3e8] sm:$0xff]
    %v1112 = vld [vmem:[%s1 + $0x3f0] sm:$0xff]
    %v1113 = vld [vmem:[%s1 + $0x3f8] sm:$0xff]
    %v1114 = vld [vmem:[%s1 + $0x400] sm:$0xff]
    %v1115 = vld [vmem:[%s1 + $0x408] sm:$0xff]
    %v1116 = vld [vmem:[%s1 + $0x410] sm:$0xff]
    %v1117 = vld [vmem:[%s1 + $0x418] sm:$0xff]
    %v1118 = vld [vmem:[%s1 + $0x420] sm:$0xff]
    %v1119 = vld [vmem:[%s1 + $0x428] sm:$0xff]
    %v1120 = vld [vmem:[%s1 + $0x430] sm:$0xff]
    %v1121 = vld [vmem:[%s1 + $0x438] sm:$0xff]
    %v1122 = vld [vmem:[%s1 + $0x440] sm:$0xff]
    %v1123 = vld [vmem:[%s1 + $0x448] sm:$0xff]
    %v1124 = vld [vmem:[%s1 + $0x450] sm:$0xff]
    %v1125 = vld [vmem:[%s1 + $0x458] sm:$0xff]
    %v1126 = vld [vmem:[%s1 + $0x460] sm:$0xff]
    %v1127 = vld [vmem:[%s1 + $0x468] sm:$0xff]
    %v1128 = vld [vmem:[%s1 + $0x470] sm:$0xff]
    %v1129 = vld [vmem:[%s1 + $0x478] sm:$0xff]
    %v1130 = vld [vmem:[%s1 + $0x480] sm:$0xff]
    %v1131 = vld [vmem:[%s1 + $0x488] sm:$0xff]
    %v1132 = vld [vmem:[%s1 + $0x490] sm:$0xff]
    %v1133 = vld [vmem:[%s1 + $0x498] sm:$0xff]
    %v1134 = vld [vmem:[%s1 + $0x4a0] sm:$0xff]
    %v1135 = vld [vmem:[%s1 + $0x4a8] sm:$0xff]
    %v1136 = vld [vmem:[%s1 + $0x4b0] sm:$0xff]
    %v1137 = vld [vmem:[%s1 + $0x4b8] sm:$0xff]
    %v1138 = vld [vmem:[%s1 + $0x4c0] sm:$0xff]
    %v1139 = vld [vmem:[%s1 + $0x4c8] sm:$0xff]
    %v1140 = vld [vmem:[%s1 + $0x4d0] sm:$0xff]
    %v1141 = vld [vmem:[%s1 + $0x4d8] sm:$0xff]
    %v1142 = vld [vmem:[%s1 + $0x4e0] sm:$0xff]
    %v1143 = vld [vmem:[%s1 + $0x4e8] sm:$0xff]
    %v1144 = vld [vmem:[%s1 + $0x4f0] sm:$0xff]
    %v1145 = vld [vmem:[%s1 + $0x4f8] sm:$0xff]
    %v1146 = vld [vmem:[%s1 + $0x500] sm:$0xff]
    %v1147 = vld [vmem:[%s1 + $0x508] sm:$0xff]
    %v1148 = vld [vmem:[%s1 + $0x510] sm:$0xff]
    %v1149 = vld [vmem:[%s1 + $0x518] sm:$0xff]
    %v1150 = vld [vmem:[%s1 + $0x520] sm:$0xff]
    %v1151 = vld [vmem:[%s1 + $0x528] sm:$0xff]
    %v1152 = vld [vmem:[%s1 + $0x530] sm:$0xff]
    %v1153 = vld [vmem:[%s1 + $0x538] sm:$0xff]
    %v1154 = vld [vmem:[%s1 + $0x540] sm:$0xff]
    %v1155 = vld [vmem:[%s1 + $0x548] sm:$0xff]
    %v1156 = vld [vmem:[%s1 + $0x550] sm:$0xff]
    %v1157 = vld [vmem:[%s1 + $0x558] sm:$0xff]
    %v1158 = vld [vmem:[%s1 + $0x560] sm:$0xff]
    %v1159 = vld [vmem:[%s1 + $0x568] sm:$0xff]
    %v1160 = vld [vmem:[%s1 + $0x570] sm:$0xff]
    %v1161 = vld [vmem:[%s1 + $0x578] sm:$0xff]
    %v1162 = vld [vmem:[%s1 + $0x580] sm:$0xff]
    %v1163 = vld [vmem:[%s1 + $0x588] sm:$0xff]
    %v1164 = vld [vmem:[%s1 + $0x590] sm:$0xff]
    %v1165 = vld [vmem:[%s1 + $0x598] sm:$0xff]
    %v1166 = vld [vmem:[%s1 + $0x5a0] sm:$0xff]
    %v1167 = vld [vmem:[%s1 + $0x5a8] sm:$0xff]
    %v1168 = vld [vmem:[%s1 + $0x5b0] sm:$0xff]
    %v1169 = vld [vmem:[%s1 + $0x5b8] sm:$0xff]
    %v1170 = vld [vmem:[%s1 + $0x5c0] sm:$0xff]
    %v1171 = vld [vmem:[%s1 + $0x5c8] sm:$0xff]
    %v1172 = vld [vmem:[%s1 + $0x5d0] sm:$0xff]
    %v1173 = vld [vmem:[%s1 + $0x5d8] sm:$0xff]
    %v1174 = vld [vmem:[%s1 + $0x5e0] sm:$0xff]
    %v1175 = vld [vmem:[%s1 + $0x5e8] sm:$0xff]
    %v1176 = vld [vmem:[%s1 + $0x5f0] sm:$0xff]
    %v1177 = vld [vmem:[%s1 + $0x5f8] sm:$0xff]
    %1178 = vmatprep.subr.mxu0 %v1077
    %1179 = vmatpush1.msra.mxu0 %v1076
    %1180 = vmatprep.subr.mxu0 %v1071
    %1181 = vmatpush1.msra.mxu0 %v1070
    %1182 = vmatprep.subr.mxu0 %v1065
    %1183 = vmatpush1.msra.mxu0 %v1064
    %1184 = vmatprep.subr.mxu0 %v1059
    %1185 = vmatpush1.msra.mxu0 %v1058
    %1186 = vmatprep.subr.mxu0 %v1053
    %1187 = vmatpush1.msra.mxu0 %v1052
    %1188 = vmatprep.subr.mxu0 %v1047
    %1189 = vmatpush1.msra.mxu0 %v1046
    %1190 = vmatprep.subr.mxu0 %v1041
    %1191 = vmatpush1.msra.mxu0 %v1040
    %1192 = vmatprep.subr.mxu0 %v1035
    %1193 = vmatpush1.msra.mxu0 %v1034
    %1194 = vmatprep.subr.mxu0 %v1029
    %1195 = vmatpush1.msra.mxu0 %v1028
    %1196 = vmatprep.subr.mxu0 %v1023
    %1197 = vmatpush1.msra.mxu0 %v1022
    %1198 = vmatprep.subr.mxu0 %v1017
    %1199 = vmatpush1.msra.mxu0 %v1016
    %1200 = vmatprep.subr.mxu0 %v1011
    %1201 = vmatpush1.msra.mxu0 %v1010
    %1202 = vmatprep.subr.mxu0 %v1005
    %1203 = vmatpush1.msra.mxu0 %v1004
    %1204 = vmatprep.subr.mxu0 %v999
    %1205 = vmatpush1.msra.mxu0 %v998
    %1206 = vmatprep.subr.mxu0 %v993
    %1207 = vmatpush1.msra.mxu0 %v992
    %1208 = vmatprep.subr.mxu0 %v987
    %1209 = vmatpush1.msra.mxu0 %v986
    %1210 = vmatprep.subr.mxu0 %v1173
    %1211 = vmatpush2.msra.mxu0 %v1172
    %1212 = vmatprep.subr.mxu0 %v1167
    %1213 = vmatpush2.msra.mxu0 %v1166
    %1214 = vmatprep.subr.mxu0 %v1161
    %1215 = vmatpush2.msra.mxu0 %v1160
    %1216 = vmatprep.subr.mxu0 %v1155
    %1217 = vmatpush2.msra.mxu0 %v1154
    %1218 = vmatprep.subr.mxu0 %v1149
    %1219 = vmatpush2.msra.mxu0 %v1148
    %1220 = vmatprep.subr.mxu0 %v1143
    %1221 = vmatpush2.msra.mxu0 %v1142
    %1222 = vmatprep.subr.mxu0 %v1137
    %1223 = vmatpush2.msra.mxu0 %v1136
    %1224 = vmatprep.subr.mxu0 %v1131
    %1225 = vmatpush2.msra.mxu0 %v1130
    %1226 = vmatprep.subr.mxu0 %v1125
    %1227 = vmatpush2.msra.mxu0 %v1124
    %1228 = vmatprep.subr.mxu0 %v1119
    %1229 = vmatpush2.msra.mxu0 %v1118
    %1230 = vmatprep.subr.mxu0 %v1113
    %1231 = vmatpush2.msra.mxu0 %v1112
    %1232 = vmatprep.subr.mxu0 %v1107
    %1233 = vmatpush2.msra.mxu0 %v1106
    %1234 = vmatprep.subr.mxu0 %v1101
    %1235 = vmatpush2.msra.mxu0 %v1100
    %1236 = vmatprep.subr.mxu0 %v1095
    %1237 = vmatpush2.msra.mxu0 %v1094
    %1238 = vmatprep.subr.mxu0 %v1089
    %1239 = vmatpush2.msra.mxu0 %v1088
    %1240 = vmatprep.subr.mxu0 %v1083
    %1241 = vmatpush2.msra.mxu0 %v1082
    %1242 = vmatprep.mubr.f32.mxu0 %v977
    %1243 = vmatmul.mubr.f32.gmra.mxu0 %v955
    %v1244 = vpop.f32.mrf.mxu0
    %v1245 = vadd.f32 0.0, %v1244
    %v1246 = vpop.f32.mrf.mxu0
    %v1247 = vadd.f32 0.0, %v1246
    %1248 = vdwg.mxu0
    %1249 = vmatprep.subr.mxu0 %v1079
    %1250 = vmatpush1.msra.mxu0 %v1078
    %1251 = vmatprep.subr.mxu0 %v1073
    %1252 = vmatpush1.msra.mxu0 %v1072
    %1253 = vmatprep.subr.mxu0 %v1067
    %1254 = vmatpush1.msra.mxu0 %v1066
    %1255 = vmatprep.subr.mxu0 %v1061
    %1256 = vmatpush1.msra.mxu0 %v1060
    %1257 = vmatprep.subr.mxu0 %v1055
    %1258 = vmatpush1.msra.mxu0 %v1054
    %1259 = vmatprep.subr.mxu0 %v1049
    %1260 = vmatpush1.msra.mxu0 %v1048
    %1261 = vmatprep.subr.mxu0 %v1043
    %1262 = vmatpush1.msra.mxu0 %v1042
    %1263 = vmatprep.subr.mxu0 %v1037
    %1264 = vmatpush1.msra.mxu0 %v1036
    %1265 = vmatprep.subr.mxu0 %v1031
    %1266 = vmatpush1.msra.mxu0 %v1030
    %1267 = vmatprep.subr.mxu0 %v1025
    %1268 = vmatpush1.msra.mxu0 %v1024
    %1269 = vmatprep.subr.mxu0 %v1019
    %1270 = vmatpush1.msra.mxu0 %v1018
    %1271 = vmatprep.subr.mxu0 %v1013
    %1272 = vmatpush1.msra.mxu0 %v1012
    %1273 = vmatprep.subr.mxu0 %v1007
    %1274 = vmatpush1.msra.mxu0 %v1006
    %1275 = vmatprep.subr.mxu0 %v1001
    %1276 = vmatpush1.msra.mxu0 %v1000
    %1277 = vmatprep.subr.mxu0 %v995
    %1278 = vmatpush1.msra.mxu0 %v994
    %1279 = vmatprep.subr.mxu0 %v989
    %1280 = vmatpush1.msra.mxu0 %v988
    %1281 = vmatprep.subr.mxu0 %v1175
    %1282 = vmatpush2.msra.mxu0 %v1174
    %1283 = vmatprep.subr.mxu0 %v1169
    %1284 = vmatpush2.msra.mxu0 %v1168
    %1285 = vmatprep.subr.mxu0 %v1163
    %1286 = vmatpush2.msra.mxu0 %v1162
    %1287 = vmatprep.subr.mxu0 %v1157
    %1288 = vmatpush2.msra.mxu0 %v1156
    %1289 = vmatprep.subr.mxu0 %v1151
    %1290 = vmatpush2.msra.mxu0 %v1150
    %1291 = vmatprep.subr.mxu0 %v1145
    %1292 = vmatpush2.msra.mxu0 %v1144
    %1293 = vmatprep.subr.mxu0 %v1139
    %1294 = vmatpush2.msra.mxu0 %v1138
    %1295 = vmatprep.subr.mxu0 %v1133
    %1296 = vmatpush2.msra.mxu0 %v1132
    %1297 = vmatprep.subr.mxu0 %v1127
    %1298 = vmatpush2.msra.mxu0 %v1126
    %1299 = vmatprep.subr.mxu0 %v1121
    %1300 = vmatpush2.msra.mxu0 %v1120
    %1301 = vmatprep.subr.mxu0 %v1115
    %1302 = vmatpush2.msra.mxu0 %v1114
    %1303 = vmatprep.subr.mxu0 %v1109
    %1304 = vmatpush2.msra.mxu0 %v1108
    %1305 = vmatprep.subr.mxu0 %v1103
    %1306 = vmatpush2.msra.mxu0 %v1102
    %1307 = vmatprep.subr.mxu0 %v1097
    %1308 = vmatpush2.msra.mxu0 %v1096
    %1309 = vmatprep.subr.mxu0 %v1091
    %1310 = vmatpush2.msra.mxu0 %v1090
    %1311 = vmatprep.subr.mxu0 %v1085
    %1312 = vmatpush2.msra.mxu0 %v1084
    %1313 = vmatprep.mubr.f32.mxu0 %v977
    %1314 = vmatmul.mubr.f32.gmra.mxu0 %v955
    %v1315 = vpop.f32.mrf.mxu0
    %v1316 = vadd.f32 0.0, %v1315
    %v1317 = vpop.f32.mrf.mxu0
    %v1318 = vadd.f32 0.0, %v1317
    %1319 = vdwg.mxu0
    %1320 = vmatprep.subr.mxu0 %v1081
    %1321 = vmatpush1.msra.mxu0 %v1080
    %1322 = vmatprep.subr.mxu0 %v1075
    %1323 = vmatpush1.msra.mxu0 %v1074
    %1324 = vmatprep.subr.mxu0 %v1069
    %1325 = vmatpush1.msra.mxu0 %v1068
    %1326 = vmatprep.subr.mxu0 %v1063
    %1327 = vmatpush1.msra.mxu0 %v1062
    %1328 = vmatprep.subr.mxu0 %v1057
    %1329 = vmatpush1.msra.mxu0 %v1056
    %1330 = vmatprep.subr.mxu0 %v1051
    %1331 = vmatpush1.msra.mxu0 %v1050
    %1332 = vmatprep.subr.mxu0 %v1045
    %1333 = vmatpush1.msra.mxu0 %v1044
    %1334 = vmatprep.subr.mxu0 %v1039
    %1335 = vmatpush1.msra.mxu0 %v1038
    %1336 = vmatprep.subr.mxu0 %v1033
    %1337 = vmatpush1.msra.mxu0 %v1032
    %1338 = vmatprep.subr.mxu0 %v1027
    %1339 = vmatpush1.msra.mxu0 %v1026
    %1340 = vmatprep.subr.mxu0 %v1021
    %1341 = vmatpush1.msra.mxu0 %v1020
    %1342 = vmatprep.subr.mxu0 %v1015
    %1343 = vmatpush1.msra.mxu0 %v1014
    %1344 = vmatprep.subr.mxu0 %v1009
    %1345 = vmatpush1.msra.mxu0 %v1008
    %1346 = vmatprep.subr.mxu0 %v1003
    %1347 = vmatpush1.msra.mxu0 %v1002
    %1348 = vmatprep.subr.mxu0 %v997
    %1349 = vmatpush1.msra.mxu0 %v996
    %1350 = vmatprep.subr.mxu0 %v991
    %1351 = vmatpush1.msra.mxu0 %v990
    %1352 = vmatprep.subr.mxu0 %v1177
    %1353 = vmatpush2.msra.mxu0 %v1176
    %1354 = vmatprep.subr.mxu0 %v1171
    %1355 = vmatpush2.msra.mxu0 %v1170
    %1356 = vmatprep.subr.mxu0 %v1165
    %1357 = vmatpush2.msra.mxu0 %v1164
    %1358 = vmatprep.subr.mxu0 %v1159
    %1359 = vmatpush2.msra.mxu0 %v1158
    %1360 = vmatprep.subr.mxu0 %v1153
    %1361 = vmatpush2.msra.mxu0 %v1152
    %1362 = vmatprep.subr.mxu0 %v1147
    %1363 = vmatpush2.msra.mxu0 %v1146
    %1364 = vmatprep.subr.mxu0 %v1141
    %1365 = vmatpush2.msra.mxu0 %v1140
    %1366 = vmatprep.subr.mxu0 %v1135
    %1367 = vmatpush2.msra.mxu0 %v1134
    %1368 = vmatprep.subr.mxu0 %v1129
    %1369 = vmatpush2.msra.mxu0 %v1128
    %1370 = vmatprep.subr.mxu0 %v1123
    %1371 = vmatpush2.msra.mxu0 %v1122
    %1372 = vmatprep.subr.mxu0 %v1117
    %1373 = vmatpush2.msra.mxu0 %v1116
    %1374 = vmatprep.subr.mxu0 %v1111
    %1375 = vmatpush2.msra.mxu0 %v1110
    %1376 = vmatprep.subr.mxu0 %v1105
    %1377 = vmatpush2.msra.mxu0 %v1104
    %1378 = vmatprep.subr.mxu0 %v1099
    %1379 = vmatpush2.msra.mxu0 %v1098
    %1380 = vmatprep.subr.mxu0 %v1093
    %1381 = vmatpush2.msra.mxu0 %v1092
    %1382 = vmatprep.subr.mxu0 %v1087
    %1383 = vmatpush2.msra.mxu0 %v1086
    %1384 = vmatprep.mubr.f32.mxu0 %v977
    %1385 = vmatmul.mubr.f32.gmra.mxu0 %v955
    %v1386 = vpop.f32.mrf.mxu0
    %v1387 = vadd.f32 0.0, %v1386
    %v1388 = vpop.f32.mrf.mxu0
    %v1389 = vadd.f32 0.0, %v1388
    %1390 = vdwg.mxu0
    %s1391 = smul.u32 2, 6
    %s1392 = smul.addr %s1391, 8
    %s1393 = scalar_lea.vmem %s0, %s1392
    %v1394 = vld [vmem:[%s1393] sm:$0xff]
    %v1395 = vld [vmem:[%s1393 + $0x8] sm:$0xff]
    %v1396 = vld [vmem:[%s1393 + $0x10] sm:$0xff]
    %s1397 = smul.u32 5, 6
    %s1398 = smul.addr %s1397, 8
    %s1399 = scalar_lea.vmem %s0, %s1398
    %v1400 = vld [vmem:[%s1399 + $0x18] sm:$0xff]
    %v1401 = vld [vmem:[%s1399 + $0x20] sm:$0xff]
    %v1402 = vld [vmem:[%s1399 + $0x28] sm:$0xff]
    %v1403 = vadd.f32 %v1394, %v1245
    %v1404 = vxor.u32 %v1403, 2147483648
    %v1405 = vmul.f32 %v1404, 1.442695
    %v1406 = vpow.pop %v1405
    %v1407 = vadd.f32 %v1406, 1.0
    %v1408 = vrcp.pop %v1407
    %v1409 = vmul.f32 1.0, %v1408
    %v1410 = vadd.f32 %v1395, %v1247
    %v1411 = vxor.u32 %v1410, 2147483648
    %v1412 = vmul.f32 %v1411, 1.442695
    %v1413 = vpow.pop %v1412
    %v1414 = vadd.f32 %v1413, 1.0
    %v1415 = vrcp.pop %v1414
    %v1416 = vmul.f32 1.0, %v1415
    %v1417 = vadd.f32 %v1316, %v39
    %v1418 = vmul.f32 %v1409, %v1417
    %v1419 = vadd.f32 %v1396, %v1418
    %v1420 = vtanh.pop %v1419
    %v1421 = vsub.f32 1.0, %v1416
    %v1422 = vmul.f32 %v1421, %v1420
    %v1423 = vmul.f32 %v1416, %v955
    %v1424 = vadd.f32 %v1422, %v1423
    %v1425 = vadd.f32 %v1400, %v1318
    %v1426 = vxor.u32 %v1425, 2147483648
    %v1427 = vmul.f32 %v1426, 1.442695
    %v1428 = vpow.pop %v1427
    %v1429 = vadd.f32 %v1428, 1.0
    %v1430 = vrcp.pop %v1429
    %v1431 = vmul.f32 1.0, %v1430
    %v1432 = vadd.f32 %v1401, %v1387
    %v1433 = vxor.u32 %v1432, 2147483648
    %v1434 = vmul.f32 %v1433, 1.442695
    %v1435 = vpow.pop %v1434
    %v1436 = vadd.f32 %v1435, 1.0
    %v1437 = vrcp.pop %v1436
    %v1438 = vmul.f32 1.0, %v1437
    %v1439 = vadd.f32 %v1389, %v46
    %v1440 = vmul.f32 %v1431, %v1439
    %v1441 = vadd.f32 %v1402, %v1440
    %v1442 = vtanh.pop %v1441
    %v1443 = vsub.f32 1.0, %v1438
    %v1444 = vmul.f32 %v1443, %v1442
    %v1445 = vmul.f32 %v1438, %v977
    %v1446 = vadd.f32 %v1444, %v1445
    %s1447 = smul.u32 2, 2
    %s1448 = smul.addr %s1447, 8
    %s1449 = scalar_lea.vmem [#allocation2], %s1448
    %1450 = vst [vmem:[%s1449] sm:$0xff] %v1424
    %s1451 = smul.u32 5, 2
    %s1452 = smul.addr %s1451, 8
    %s1453 = scalar_lea.vmem [#allocation2], %s1452
    %1454 = vst [vmem:[%s1453 + $0x8] sm:$0xff] %v1446
    %v1455 = vld [vmem:[%s1] sm:$0xff]
    %v1456 = vld [vmem:[%s1 + $0x8] sm:$0xff]
    %v1457 = vld [vmem:[%s1 + $0x10] sm:$0xff]
    %v1458 = vld [vmem:[%s1 + $0x18] sm:$0xff]
    %v1459 = vld [vmem:[%s1 + $0x20] sm:$0xff]
    %v1460 = vld [vmem:[%s1 + $0x28] sm:$0xff]
    %v1461 = vld [vmem:[%s1 + $0x30] sm:$0xff]
    %v1462 = vld [vmem:[%s1 + $0x38] sm:$0xff]
    %v1463 = vld [vmem:[%s1 + $0x40] sm:$0xff]
    %v1464 = vld [vmem:[%s1 + $0x48] sm:$0xff]
    %v1465 = vld [vmem:[%s1 + $0x50] sm:$0xff]
    %v1466 = vld [vmem:[%s1 + $0x58] sm:$0xff]
    %v1467 = vld [vmem:[%s1 + $0x60] sm:$0xff]
    %v1468 = vld [vmem:[%s1 + $0x68] sm:$0xff]
    %v1469 = vld [vmem:[%s1 + $0x70] sm:$0xff]
    %v1470 = vld [vmem:[%s1 + $0x78] sm:$0xff]
    %v1471 = vld [vmem:[%s1 + $0x80] sm:$0xff]
    %v1472 = vld [vmem:[%s1 + $0x88] sm:$0xff]
    %v1473 = vld [vmem:[%s1 + $0x90] sm:$0xff]
    %v1474 = vld [vmem:[%s1 + $0x98] sm:$0xff]
    %v1475 = vld [vmem:[%s1 + $0xa0] sm:$0xff]
    %v1476 = vld [vmem:[%s1 + $0xa8] sm:$0xff]
    %v1477 = vld [vmem:[%s1 + $0xb0] sm:$0xff]
    %v1478 = vld [vmem:[%s1 + $0xb8] sm:$0xff]
    %v1479 = vld [vmem:[%s1 + $0xc0] sm:$0xff]
    %v1480 = vld [vmem:[%s1 + $0xc8] sm:$0xff]
    %v1481 = vld [vmem:[%s1 + $0xd0] sm:$0xff]
    %v1482 = vld [vmem:[%s1 + $0xd8] sm:$0xff]
    %v1483 = vld [vmem:[%s1 + $0xe0] sm:$0xff]
    %v1484 = vld [vmem:[%s1 + $0xe8] sm:$0xff]
    %v1485 = vld [vmem:[%s1 + $0xf0] sm:$0xff]
    %v1486 = vld [vmem:[%s1 + $0xf8] sm:$0xff]
    %v1487 = vld [vmem:[%s1 + $0x100] sm:$0xff]
    %v1488 = vld [vmem:[%s1 + $0x108] sm:$0xff]
    %v1489 = vld [vmem:[%s1 + $0x110] sm:$0xff]
    %v1490 = vld [vmem:[%s1 + $0x118] sm:$0xff]
    %v1491 = vld [vmem:[%s1 + $0x120] sm:$0xff]
    %v1492 = vld [vmem:[%s1 + $0x128] sm:$0xff]
    %v1493 = vld [vmem:[%s1 + $0x130] sm:$0xff]
    %v1494 = vld [vmem:[%s1 + $0x138] sm:$0xff]
    %v1495 = vld [vmem:[%s1 + $0x140] sm:$0xff]
    %v1496 = vld [vmem:[%s1 + $0x148] sm:$0xff]
    %v1497 = vld [vmem:[%s1 + $0x150] sm:$0xff]
    %v1498 = vld [vmem:[%s1 + $0x158] sm:$0xff]
    %v1499 = vld [vmem:[%s1 + $0x160] sm:$0xff]
    %v1500 = vld [vmem:[%s1 + $0x168] sm:$0xff]
    %v1501 = vld [vmem:[%s1 + $0x170] sm:$0xff]
    %v1502 = vld [vmem:[%s1 + $0x178] sm:$0xff]
    %v1503 = vld [vmem:[%s1 + $0x180] sm:$0xff]
    %v1504 = vld [vmem:[%s1 + $0x188] sm:$0xff]
    %v1505 = vld [vmem:[%s1 + $0x190] sm:$0xff]
    %v1506 = vld [vmem:[%s1 + $0x198] sm:$0xff]
    %v1507 = vld [vmem:[%s1 + $0x1a0] sm:$0xff]
    %v1508 = vld [vmem:[%s1 + $0x1a8] sm:$0xff]
    %v1509 = vld [vmem:[%s1 + $0x1b0] sm:$0xff]
    %v1510 = vld [vmem:[%s1 + $0x1b8] sm:$0xff]
    %v1511 = vld [vmem:[%s1 + $0x1c0] sm:$0xff]
    %v1512 = vld [vmem:[%s1 + $0x1c8] sm:$0xff]
    %v1513 = vld [vmem:[%s1 + $0x1d0] sm:$0xff]
    %v1514 = vld [vmem:[%s1 + $0x1d8] sm:$0xff]
    %v1515 = vld [vmem:[%s1 + $0x1e0] sm:$0xff]
    %v1516 = vld [vmem:[%s1 + $0x1e8] sm:$0xff]
    %v1517 = vld [vmem:[%s1 + $0x1f0] sm:$0xff]
    %v1518 = vld [vmem:[%s1 + $0x1f8] sm:$0xff]
    %v1519 = vld [vmem:[%s1 + $0x200] sm:$0xff]
    %v1520 = vld [vmem:[%s1 + $0x208] sm:$0xff]
    %v1521 = vld [vmem:[%s1 + $0x210] sm:$0xff]
    %v1522 = vld [vmem:[%s1 + $0x218] sm:$0xff]
    %v1523 = vld [vmem:[%s1 + $0x220] sm:$0xff]
    %v1524 = vld [vmem:[%s1 + $0x228] sm:$0xff]
    %v1525 = vld [vmem:[%s1 + $0x230] sm:$0xff]
    %v1526 = vld [vmem:[%s1 + $0x238] sm:$0xff]
    %v1527 = vld [vmem:[%s1 + $0x240] sm:$0xff]
    %v1528 = vld [vmem:[%s1 + $0x248] sm:$0xff]
    %v1529 = vld [vmem:[%s1 + $0x250] sm:$0xff]
    %v1530 = vld [vmem:[%s1 + $0x258] sm:$0xff]
    %v1531 = vld [vmem:[%s1 + $0x260] sm:$0xff]
    %v1532 = vld [vmem:[%s1 + $0x268] sm:$0xff]
    %v1533 = vld [vmem:[%s1 + $0x270] sm:$0xff]
    %v1534 = vld [vmem:[%s1 + $0x278] sm:$0xff]
    %v1535 = vld [vmem:[%s1 + $0x280] sm:$0xff]
    %v1536 = vld [vmem:[%s1 + $0x288] sm:$0xff]
    %v1537 = vld [vmem:[%s1 + $0x290] sm:$0xff]
    %v1538 = vld [vmem:[%s1 + $0x298] sm:$0xff]
    %v1539 = vld [vmem:[%s1 + $0x2a0] sm:$0xff]
    %v1540 = vld [vmem:[%s1 + $0x2a8] sm:$0xff]
    %v1541 = vld [vmem:[%s1 + $0x2b0] sm:$0xff]
    %v1542 = vld [vmem:[%s1 + $0x2b8] sm:$0xff]
    %v1543 = vld [vmem:[%s1 + $0x2c0] sm:$0xff]
    %v1544 = vld [vmem:[%s1 + $0x2c8] sm:$0xff]
    %v1545 = vld [vmem:[%s1 + $0x2d0] sm:$0xff]
    %v1546 = vld [vmem:[%s1 + $0x2d8] sm:$0xff]
    %v1547 = vld [vmem:[%s1 + $0x2e0] sm:$0xff]
    %v1548 = vld [vmem:[%s1 + $0x2e8] sm:$0xff]
    %v1549 = vld [vmem:[%s1 + $0x2f0] sm:$0xff]
    %v1550 = vld [vmem:[%s1 + $0x2f8] sm:$0xff]
    %v1551 = vld [vmem:[%s1 + $0x300] sm:$0xff]
    %v1552 = vld [vmem:[%s1 + $0x308] sm:$0xff]
    %v1553 = vld [vmem:[%s1 + $0x310] sm:$0xff]
    %v1554 = vld [vmem:[%s1 + $0x318] sm:$0xff]
    %v1555 = vld [vmem:[%s1 + $0x320] sm:$0xff]
    %v1556 = vld [vmem:[%s1 + $0x328] sm:$0xff]
    %v1557 = vld [vmem:[%s1 + $0x330] sm:$0xff]
    %v1558 = vld [vmem:[%s1 + $0x338] sm:$0xff]
    %v1559 = vld [vmem:[%s1 + $0x340] sm:$0xff]
    %v1560 = vld [vmem:[%s1 + $0x348] sm:$0xff]
    %v1561 = vld [vmem:[%s1 + $0x350] sm:$0xff]
    %v1562 = vld [vmem:[%s1 + $0x358] sm:$0xff]
    %v1563 = vld [vmem:[%s1 + $0x360] sm:$0xff]
    %v1564 = vld [vmem:[%s1 + $0x368] sm:$0xff]
    %v1565 = vld [vmem:[%s1 + $0x370] sm:$0xff]
    %v1566 = vld [vmem:[%s1 + $0x378] sm:$0xff]
    %v1567 = vld [vmem:[%s1 + $0x380] sm:$0xff]
    %v1568 = vld [vmem:[%s1 + $0x388] sm:$0xff]
    %v1569 = vld [vmem:[%s1 + $0x390] sm:$0xff]
    %v1570 = vld [vmem:[%s1 + $0x398] sm:$0xff]
    %v1571 = vld [vmem:[%s1 + $0x3a0] sm:$0xff]
    %v1572 = vld [vmem:[%s1 + $0x3a8] sm:$0xff]
    %v1573 = vld [vmem:[%s1 + $0x3b0] sm:$0xff]
    %v1574 = vld [vmem:[%s1 + $0x3b8] sm:$0xff]
    %v1575 = vld [vmem:[%s1 + $0x3c0] sm:$0xff]
    %v1576 = vld [vmem:[%s1 + $0x3c8] sm:$0xff]
    %v1577 = vld [vmem:[%s1 + $0x3d0] sm:$0xff]
    %v1578 = vld [vmem:[%s1 + $0x3d8] sm:$0xff]
    %v1579 = vld [vmem:[%s1 + $0x3e0] sm:$0xff]
    %v1580 = vld [vmem:[%s1 + $0x3e8] sm:$0xff]
    %v1581 = vld [vmem:[%s1 + $0x3f0] sm:$0xff]
    %v1582 = vld [vmem:[%s1 + $0x3f8] sm:$0xff]
    %v1583 = vld [vmem:[%s1 + $0x400] sm:$0xff]
    %v1584 = vld [vmem:[%s1 + $0x408] sm:$0xff]
    %v1585 = vld [vmem:[%s1 + $0x410] sm:$0xff]
    %v1586 = vld [vmem:[%s1 + $0x418] sm:$0xff]
    %v1587 = vld [vmem:[%s1 + $0x420] sm:$0xff]
    %v1588 = vld [vmem:[%s1 + $0x428] sm:$0xff]
    %v1589 = vld [vmem:[%s1 + $0x430] sm:$0xff]
    %v1590 = vld [vmem:[%s1 + $0x438] sm:$0xff]
    %v1591 = vld [vmem:[%s1 + $0x440] sm:$0xff]
    %v1592 = vld [vmem:[%s1 + $0x448] sm:$0xff]
    %v1593 = vld [vmem:[%s1 + $0x450] sm:$0xff]
    %v1594 = vld [vmem:[%s1 + $0x458] sm:$0xff]
    %v1595 = vld [vmem:[%s1 + $0x460] sm:$0xff]
    %v1596 = vld [vmem:[%s1 + $0x468] sm:$0xff]
    %v1597 = vld [vmem:[%s1 + $0x470] sm:$0xff]
    %v1598 = vld [vmem:[%s1 + $0x478] sm:$0xff]
    %v1599 = vld [vmem:[%s1 + $0x480] sm:$0xff]
    %v1600 = vld [vmem:[%s1 + $0x488] sm:$0xff]
    %v1601 = vld [vmem:[%s1 + $0x490] sm:$0xff]
    %v1602 = vld [vmem:[%s1 + $0x498] sm:$0xff]
    %v1603 = vld [vmem:[%s1 + $0x4a0] sm:$0xff]
    %v1604 = vld [vmem:[%s1 + $0x4a8] sm:$0xff]
    %v1605 = vld [vmem:[%s1 + $0x4b0] sm:$0xff]
    %v1606 = vld [vmem:[%s1 + $0x4b8] sm:$0xff]
    %v1607 = vld [vmem:[%s1 + $0x4c0] sm:$0xff]
    %v1608 = vld [vmem:[%s1 + $0x4c8] sm:$0xff]
    %v1609 = vld [vmem:[%s1 + $0x4d0] sm:$0xff]
    %v1610 = vld [vmem:[%s1 + $0x4d8] sm:$0xff]
    %v1611 = vld [vmem:[%s1 + $0x4e0] sm:$0xff]
    %v1612 = vld [vmem:[%s1 + $0x4e8] sm:$0xff]
    %v1613 = vld [vmem:[%s1 + $0x4f0] sm:$0xff]
    %v1614 = vld [vmem:[%s1 + $0x4f8] sm:$0xff]
    %v1615 = vld [vmem:[%s1 + $0x500] sm:$0xff]
    %v1616 = vld [vmem:[%s1 + $0x508] sm:$0xff]
    %v1617 = vld [vmem:[%s1 + $0x510] sm:$0xff]
    %v1618 = vld [vmem:[%s1 + $0x518] sm:$0xff]
    %v1619 = vld [vmem:[%s1 + $0x520] sm:$0xff]
    %v1620 = vld [vmem:[%s1 + $0x528] sm:$0xff]
    %v1621 = vld [vmem:[%s1 + $0x530] sm:$0xff]
    %v1622 = vld [vmem:[%s1 + $0x538] sm:$0xff]
    %v1623 = vld [vmem:[%s1 + $0x540] sm:$0xff]
    %v1624 = vld [vmem:[%s1 + $0x548] sm:$0xff]
    %v1625 = vld [vmem:[%s1 + $0x550] sm:$0xff]
    %v1626 = vld [vmem:[%s1 + $0x558] sm:$0xff]
    %v1627 = vld [vmem:[%s1 + $0x560] sm:$0xff]
    %v1628 = vld [vmem:[%s1 + $0x568] sm:$0xff]
    %v1629 = vld [vmem:[%s1 + $0x570] sm:$0xff]
    %v1630 = vld [vmem:[%s1 + $0x578] sm:$0xff]
    %v1631 = vld [vmem:[%s1 + $0x580] sm:$0xff]
    %v1632 = vld [vmem:[%s1 + $0x588] sm:$0xff]
    %v1633 = vld [vmem:[%s1 + $0x590] sm:$0xff]
    %v1634 = vld [vmem:[%s1 + $0x598] sm:$0xff]
    %v1635 = vld [vmem:[%s1 + $0x5a0] sm:$0xff]
    %v1636 = vld [vmem:[%s1 + $0x5a8] sm:$0xff]
    %v1637 = vld [vmem:[%s1 + $0x5b0] sm:$0xff]
    %v1638 = vld [vmem:[%s1 + $0x5b8] sm:$0xff]
    %v1639 = vld [vmem:[%s1 + $0x5c0] sm:$0xff]
    %v1640 = vld [vmem:[%s1 + $0x5c8] sm:$0xff]
    %v1641 = vld [vmem:[%s1 + $0x5d0] sm:$0xff]
    %v1642 = vld [vmem:[%s1 + $0x5d8] sm:$0xff]
    %v1643 = vld [vmem:[%s1 + $0x5e0] sm:$0xff]
    %v1644 = vld [vmem:[%s1 + $0x5e8] sm:$0xff]
    %v1645 = vld [vmem:[%s1 + $0x5f0] sm:$0xff]
    %v1646 = vld [vmem:[%s1 + $0x5f8] sm:$0xff]
    %1647 = vmatprep.subr.mxu0 %v1546
    %1648 = vmatpush1.msra.mxu0 %v1545
    %1649 = vmatprep.subr.mxu0 %v1540
    %1650 = vmatpush1.msra.mxu0 %v1539
    %1651 = vmatprep.subr.mxu0 %v1534
    %1652 = vmatpush1.msra.mxu0 %v1533
    %1653 = vmatprep.subr.mxu0 %v1528
    %1654 = vmatpush1.msra.mxu0 %v1527
    %1655 = vmatprep.subr.mxu0 %v1522
    %1656 = vmatpush1.msra.mxu0 %v1521
    %1657 = vmatprep.subr.mxu0 %v1516
    %1658 = vmatpush1.msra.mxu0 %v1515
    %1659 = vmatprep.subr.mxu0 %v1510
    %1660 = vmatpush1.msra.mxu0 %v1509
    %1661 = vmatprep.subr.mxu0 %v1504
    %1662 = vmatpush1.msra.mxu0 %v1503
    %1663 = vmatprep.subr.mxu0 %v1498
    %1664 = vmatpush1.msra.mxu0 %v1497
    %1665 = vmatprep.subr.mxu0 %v1492
    %1666 = vmatpush1.msra.mxu0 %v1491
    %1667 = vmatprep.subr.mxu0 %v1486
    %1668 = vmatpush1.msra.mxu0 %v1485
    %1669 = vmatprep.subr.mxu0 %v1480
    %1670 = vmatpush1.msra.mxu0 %v1479
    %1671 = vmatprep.subr.mxu0 %v1474
    %1672 = vmatpush1.msra.mxu0 %v1473
    %1673 = vmatprep.subr.mxu0 %v1468
    %1674 = vmatpush1.msra.mxu0 %v1467
    %1675 = vmatprep.subr.mxu0 %v1462
    %1676 = vmatpush1.msra.mxu0 %v1461
    %1677 = vmatprep.subr.mxu0 %v1456
    %1678 = vmatpush1.msra.mxu0 %v1455
    %1679 = vmatprep.subr.mxu0 %v1642
    %1680 = vmatpush2.msra.mxu0 %v1641
    %1681 = vmatprep.subr.mxu0 %v1636
    %1682 = vmatpush2.msra.mxu0 %v1635
    %1683 = vmatprep.subr.mxu0 %v1630
    %1684 = vmatpush2.msra.mxu0 %v1629
    %1685 = vmatprep.subr.mxu0 %v1624
    %1686 = vmatpush2.msra.mxu0 %v1623
    %1687 = vmatprep.subr.mxu0 %v1618
    %1688 = vmatpush2.msra.mxu0 %v1617
    %1689 = vmatprep.subr.mxu0 %v1612
    %1690 = vmatpush2.msra.mxu0 %v1611
    %1691 = vmatprep.subr.mxu0 %v1606
    %1692 = vmatpush2.msra.mxu0 %v1605
    %1693 = vmatprep.subr.mxu0 %v1600
    %1694 = vmatpush2.msra.mxu0 %v1599
    %1695 = vmatprep.subr.mxu0 %v1594
    %1696 = vmatpush2.msra.mxu0 %v1593
    %1697 = vmatprep.subr.mxu0 %v1588
    %1698 = vmatpush2.msra.mxu0 %v1587
    %1699 = vmatprep.subr.mxu0 %v1582
    %1700 = vmatpush2.msra.mxu0 %v1581
    %1701 = vmatprep.subr.mxu0 %v1576
    %1702 = vmatpush2.msra.mxu0 %v1575
    %1703 = vmatprep.subr.mxu0 %v1570
    %1704 = vmatpush2.msra.mxu0 %v1569
    %1705 = vmatprep.subr.mxu0 %v1564
    %1706 = vmatpush2.msra.mxu0 %v1563
    %1707 = vmatprep.subr.mxu0 %v1558
    %1708 = vmatpush2.msra.mxu0 %v1557
    %1709 = vmatprep.subr.mxu0 %v1552
    %1710 = vmatpush2.msra.mxu0 %v1551
    %1711 = vmatprep.mubr.f32.mxu0 %v1446
    %1712 = vmatmul.mubr.f32.gmra.mxu0 %v1424
    %v1713 = vpop.f32.mrf.mxu0
    %v1714 = vadd.f32 0.0, %v1713
    %v1715 = vpop.f32.mrf.mxu0
    %v1716 = vadd.f32 0.0, %v1715
    %1717 = vdwg.mxu0
    %1718 = vmatprep.subr.mxu0 %v1548
    %1719 = vmatpush1.msra.mxu0 %v1547
    %1720 = vmatprep.subr.mxu0 %v1542
    %1721 = vmatpush1.msra.mxu0 %v1541
    %1722 = vmatprep.subr.mxu0 %v1536
    %1723 = vmatpush1.msra.mxu0 %v1535
    %1724 = vmatprep.subr.mxu0 %v1530
    %1725 = vmatpush1.msra.mxu0 %v1529
    %1726 = vmatprep.subr.mxu0 %v1524
    %1727 = vmatpush1.msra.mxu0 %v1523
    %1728 = vmatprep.subr.mxu0 %v1518
    %1729 = vmatpush1.msra.mxu0 %v1517
    %1730 = vmatprep.subr.mxu0 %v1512
    %1731 = vmatpush1.msra.mxu0 %v1511
    %1732 = vmatprep.subr.mxu0 %v1506
    %1733 = vmatpush1.msra.mxu0 %v1505
    %1734 = vmatprep.subr.mxu0 %v1500
    %1735 = vmatpush1.msra.mxu0 %v1499
    %1736 = vmatprep.subr.mxu0 %v1494
    %1737 = vmatpush1.msra.mxu0 %v1493
    %1738 = vmatprep.subr.mxu0 %v1488
    %1739 = vmatpush1.msra.mxu0 %v1487
    %1740 = vmatprep.subr.mxu0 %v1482
    %1741 = vmatpush1.msra.mxu0 %v1481
    %1742 = vmatprep.subr.mxu0 %v1476
    %1743 = vmatpush1.msra.mxu0 %v1475
    %1744 = vmatprep.subr.mxu0 %v1470
    %1745 = vmatpush1.msra.mxu0 %v1469
    %1746 = vmatprep.subr.mxu0 %v1464
    %1747 = vmatpush1.msra.mxu0 %v1463
    %1748 = vmatprep.subr.mxu0 %v1458
    %1749 = vmatpush1.msra.mxu0 %v1457
    %1750 = vmatprep.subr.mxu0 %v1644
    %1751 = vmatpush2.msra.mxu0 %v1643
    %1752 = vmatprep.subr.mxu0 %v1638
    %1753 = vmatpush2.msra.mxu0 %v1637
    %1754 = vmatprep.subr.mxu0 %v1632
    %1755 = vmatpush2.msra.mxu0 %v1631
    %1756 = vmatprep.subr.mxu0 %v1626
    %1757 = vmatpush2.msra.mxu0 %v1625
    %1758 = vmatprep.subr.mxu0 %v1620
    %1759 = vmatpush2.msra.mxu0 %v1619
    %1760 = vmatprep.subr.mxu0 %v1614
    %1761 = vmatpush2.msra.mxu0 %v1613
    %1762 = vmatprep.subr.mxu0 %v1608
    %1763 = vmatpush2.msra.mxu0 %v1607
    %1764 = vmatprep.subr.mxu0 %v1602
    %1765 = vmatpush2.msra.mxu0 %v1601
    %1766 = vmatprep.subr.mxu0 %v1596
    %1767 = vmatpush2.msra.mxu0 %v1595
    %1768 = vmatprep.subr.mxu0 %v1590
    %1769 = vmatpush2.msra.mxu0 %v1589
    %1770 = vmatprep.subr.mxu0 %v1584
    %1771 = vmatpush2.msra.mxu0 %v1583
    %1772 = vmatprep.subr.mxu0 %v1578
    %1773 = vmatpush2.msra.mxu0 %v1577
    %1774 = vmatprep.subr.mxu0 %v1572
    %1775 = vmatpush2.msra.mxu0 %v1571
    %1776 = vmatprep.subr.mxu0 %v1566
    %1777 = vmatpush2.msra.mxu0 %v1565
    %1778 = vmatprep.subr.mxu0 %v1560
    %1779 = vmatpush2.msra.mxu0 %v1559
    %1780 = vmatprep.subr.mxu0 %v1554
    %1781 = vmatpush2.msra.mxu0 %v1553
    %1782 = vmatprep.mubr.f32.mxu0 %v1446
    %1783 = vmatmul.mubr.f32.gmra.mxu0 %v1424
    %v1784 = vpop.f32.mrf.mxu0
    %v1785 = vadd.f32 0.0, %v1784
    %v1786 = vpop.f32.mrf.mxu0
    %v1787 = vadd.f32 0.0, %v1786
    %1788 = vdwg.mxu0
    %1789 = vmatprep.subr.mxu0 %v1550
    %1790 = vmatpush1.msra.mxu0 %v1549
    %1791 = vmatprep.subr.mxu0 %v1544
    %1792 = vmatpush1.msra.mxu0 %v1543
    %1793 = vmatprep.subr.mxu0 %v1538
    %1794 = vmatpush1.msra.mxu0 %v1537
    %1795 = vmatprep.subr.mxu0 %v1532
    %1796 = vmatpush1.msra.mxu0 %v1531
    %1797 = vmatprep.subr.mxu0 %v1526
    %1798 = vmatpush1.msra.mxu0 %v1525
    %1799 = vmatprep.subr.mxu0 %v1520
    %1800 = vmatpush1.msra.mxu0 %v1519
    %1801 = vmatprep.subr.mxu0 %v1514
    %1802 = vmatpush1.msra.mxu0 %v1513
    %1803 = vmatprep.subr.mxu0 %v1508
    %1804 = vmatpush1.msra.mxu0 %v1507
    %1805 = vmatprep.subr.mxu0 %v1502
    %1806 = vmatpush1.msra.mxu0 %v1501
    %1807 = vmatprep.subr.mxu0 %v1496
    %1808 = vmatpush1.msra.mxu0 %v1495
    %1809 = vmatprep.subr.mxu0 %v1490
    %1810 = vmatpush1.msra.mxu0 %v1489
    %1811 = vmatprep.subr.mxu0 %v1484
    %1812 = vmatpush1.msra.mxu0 %v1483
    %1813 = vmatprep.subr.mxu0 %v1478
    %1814 = vmatpush1.msra.mxu0 %v1477
    %1815 = vmatprep.subr.mxu0 %v1472
    %1816 = vmatpush1.msra.mxu0 %v1471
    %1817 = vmatprep.subr.mxu0 %v1466
    %1818 = vmatpush1.msra.mxu0 %v1465
    %1819 = vmatprep.subr.mxu0 %v1460
    %1820 = vmatpush1.msra.mxu0 %v1459
    %1821 = vmatprep.subr.mxu0 %v1646
    %1822 = vmatpush2.msra.mxu0 %v1645
    %1823 = vmatprep.subr.mxu0 %v1640
    %1824 = vmatpush2.msra.mxu0 %v1639
    %1825 = vmatprep.subr.mxu0 %v1634
    %1826 = vmatpush2.msra.mxu0 %v1633
    %1827 = vmatprep.subr.mxu0 %v1628
    %1828 = vmatpush2.msra.mxu0 %v1627
    %1829 = vmatprep.subr.mxu0 %v1622
    %1830 = vmatpush2.msra.mxu0 %v1621
    %1831 = vmatprep.subr.mxu0 %v1616
    %1832 = vmatpush2.msra.mxu0 %v1615
    %1833 = vmatprep.subr.mxu0 %v1610
    %1834 = vmatpush2.msra.mxu0 %v1609
    %1835 = vmatprep.subr.mxu0 %v1604
    %1836 = vmatpush2.msra.mxu0 %v1603
    %1837 = vmatprep.subr.mxu0 %v1598
    %1838 = vmatpush2.msra.mxu0 %v1597
    %1839 = vmatprep.subr.mxu0 %v1592
    %1840 = vmatpush2.msra.mxu0 %v1591
    %1841 = vmatprep.subr.mxu0 %v1586
    %1842 = vmatpush2.msra.mxu0 %v1585
    %1843 = vmatprep.subr.mxu0 %v1580
    %1844 = vmatpush2.msra.mxu0 %v1579
    %1845 = vmatprep.subr.mxu0 %v1574
    %1846 = vmatpush2.msra.mxu0 %v1573
    %1847 = vmatprep.subr.mxu0 %v1568
    %1848 = vmatpush2.msra.mxu0 %v1567
    %1849 = vmatprep.subr.mxu0 %v1562
    %1850 = vmatpush2.msra.mxu0 %v1561
    %1851 = vmatprep.subr.mxu0 %v1556
    %1852 = vmatpush2.msra.mxu0 %v1555
    %1853 = vmatprep.mubr.f32.mxu0 %v1446
    %1854 = vmatmul.mubr.f32.gmra.mxu0 %v1424
    %v1855 = vpop.f32.mrf.mxu0
    %v1856 = vadd.f32 0.0, %v1855
    %v1857 = vpop.f32.mrf.mxu0
    %v1858 = vadd.f32 0.0, %v1857
    %1859 = vdwg.mxu0
    %s1860 = smul.u32 3, 6
    %s1861 = smul.addr %s1860, 8
    %s1862 = scalar_lea.vmem %s0, %s1861
    %v1863 = vld [vmem:[%s1862] sm:$0xff]
    %v1864 = vld [vmem:[%s1862 + $0x8] sm:$0xff]
    %v1865 = vld [vmem:[%s1862 + $0x10] sm:$0xff]
    %s1866 = smul.u32 4, 6
    %s1867 = smul.addr %s1866, 8
    %s1868 = scalar_lea.vmem %s0, %s1867
    %v1869 = vld [vmem:[%s1868 + $0x18] sm:$0xff]
    %v1870 = vld [vmem:[%s1868 + $0x20] sm:$0xff]
    %v1871 = vld [vmem:[%s1868 + $0x28] sm:$0xff]
    %v1872 = vadd.f32 %v1863, %v1714
    %v1873 = vxor.u32 %v1872, 2147483648
    %v1874 = vmul.f32 %v1873, 1.442695
    %v1875 = vpow.pop %v1874
    %v1876 = vadd.f32 %v1875, 1.0
    %v1877 = vrcp.pop %v1876
    %v1878 = vmul.f32 1.0, %v1877
    %v1879 = vadd.f32 %v1864, %v1716
    %v1880 = vxor.u32 %v1879, 2147483648
    %v1881 = vmul.f32 %v1880, 1.442695
    %v1882 = vpow.pop %v1881
    %v1883 = vadd.f32 %v1882, 1.0
    %v1884 = vrcp.pop %v1883
    %v1885 = vmul.f32 1.0, %v1884
    %v1886 = vadd.f32 %v1785, %v39
    %v1887 = vmul.f32 %v1878, %v1886
    %v1888 = vadd.f32 %v1865, %v1887
    %v1889 = vtanh.pop %v1888
    %v1890 = vsub.f32 1.0, %v1885
    %v1891 = vmul.f32 %v1890, %v1889
    %v1892 = vmul.f32 %v1885, %v1424
    %v1893 = vadd.f32 %v1891, %v1892
    %v1894 = vadd.f32 %v1869, %v1787
    %v1895 = vxor.u32 %v1894, 2147483648
    %v1896 = vmul.f32 %v1895, 1.442695
    %v1897 = vpow.pop %v1896
    %v1898 = vadd.f32 %v1897, 1.0
    %v1899 = vrcp.pop %v1898
    %v1900 = vmul.f32 1.0, %v1899
    %v1901 = vadd.f32 %v1870, %v1856
    %v1902 = vxor.u32 %v1901, 2147483648
    %v1903 = vmul.f32 %v1902, 1.442695
    %v1904 = vpow.pop %v1903
    %v1905 = vadd.f32 %v1904, 1.0
    %v1906 = vrcp.pop %v1905
    %v1907 = vmul.f32 1.0, %v1906
    %v1908 = vadd.f32 %v1858, %v46
    %v1909 = vmul.f32 %v1900, %v1908
    %v1910 = vadd.f32 %v1871, %v1909
    %v1911 = vtanh.pop %v1910
    %v1912 = vsub.f32 1.0, %v1907
    %v1913 = vmul.f32 %v1912, %v1911
    %v1914 = vmul.f32 %v1907, %v1446
    %v1915 = vadd.f32 %v1913, %v1914
    %s1916 = smul.u32 3, 2
    %s1917 = smul.addr %s1916, 8
    %s1918 = scalar_lea.vmem [#allocation2], %s1917
    %1919 = vst [vmem:[%s1918] sm:$0xff] %v1893
    %s1920 = smul.u32 4, 2
    %s1921 = smul.addr %s1920, 8
    %s1922 = scalar_lea.vmem [#allocation2], %s1921
    %1923 = vst [vmem:[%s1922 + $0x8] sm:$0xff] %v1915
    %v1924 = vld [vmem:[%s1] sm:$0xff]
    %v1925 = vld [vmem:[%s1 + $0x8] sm:$0xff]
    %v1926 = vld [vmem:[%s1 + $0x10] sm:$0xff]
    %v1927 = vld [vmem:[%s1 + $0x18] sm:$0xff]
    %v1928 = vld [vmem:[%s1 + $0x20] sm:$0xff]
    %v1929 = vld [vmem:[%s1 + $0x28] sm:$0xff]
    %v1930 = vld [vmem:[%s1 + $0x30] sm:$0xff]
    %v1931 = vld [vmem:[%s1 + $0x38] sm:$0xff]
    %v1932 = vld [vmem:[%s1 + $0x40] sm:$0xff]
    %v1933 = vld [vmem:[%s1 + $0x48] sm:$0xff]
    %v1934 = vld [vmem:[%s1 + $0x50] sm:$0xff]
    %v1935 = vld [vmem:[%s1 + $0x58] sm:$0xff]
    %v1936 = vld [vmem:[%s1 + $0x60] sm:$0xff]
    %v1937 = vld [vmem:[%s1 + $0x68] sm:$0xff]
    %v1938 = vld [vmem:[%s1 + $0x70] sm:$0xff]
    %v1939 = vld [vmem:[%s1 + $0x78] sm:$0xff]
    %v1940 = vld [vmem:[%s1 + $0x80] sm:$0xff]
    %v1941 = vld [vmem:[%s1 + $0x88] sm:$0xff]
    %v1942 = vld [vmem:[%s1 + $0x90] sm:$0xff]
    %v1943 = vld [vmem:[%s1 + $0x98] sm:$0xff]
    %v1944 = vld [vmem:[%s1 + $0xa0] sm:$0xff]
    %v1945 = vld [vmem:[%s1 + $0xa8] sm:$0xff]
    %v1946 = vld [vmem:[%s1 + $0xb0] sm:$0xff]
    %v1947 = vld [vmem:[%s1 + $0xb8] sm:$0xff]
    %v1948 = vld [vmem:[%s1 + $0xc0] sm:$0xff]
    %v1949 = vld [vmem:[%s1 + $0xc8] sm:$0xff]
    %v1950 = vld [vmem:[%s1 + $0xd0] sm:$0xff]
    %v1951 = vld [vmem:[%s1 + $0xd8] sm:$0xff]
    %v1952 = vld [vmem:[%s1 + $0xe0] sm:$0xff]
    %v1953 = vld [vmem:[%s1 + $0xe8] sm:$0xff]
    %v1954 = vld [vmem:[%s1 + $0xf0] sm:$0xff]
    %v1955 = vld [vmem:[%s1 + $0xf8] sm:$0xff]
    %v1956 = vld [vmem:[%s1 + $0x100] sm:$0xff]
    %v1957 = vld [vmem:[%s1 + $0x108] sm:$0xff]
    %v1958 = vld [vmem:[%s1 + $0x110] sm:$0xff]
    %v1959 = vld [vmem:[%s1 + $0x118] sm:$0xff]
    %v1960 = vld [vmem:[%s1 + $0x120] sm:$0xff]
    %v1961 = vld [vmem:[%s1 + $0x128] sm:$0xff]
    %v1962 = vld [vmem:[%s1 + $0x130] sm:$0xff]
    %v1963 = vld [vmem:[%s1 + $0x138] sm:$0xff]
    %v1964 = vld [vmem:[%s1 + $0x140] sm:$0xff]
    %v1965 = vld [vmem:[%s1 + $0x148] sm:$0xff]
    %v1966 = vld [vmem:[%s1 + $0x150] sm:$0xff]
    %v1967 = vld [vmem:[%s1 + $0x158] sm:$0xff]
    %v1968 = vld [vmem:[%s1 + $0x160] sm:$0xff]
    %v1969 = vld [vmem:[%s1 + $0x168] sm:$0xff]
    %v1970 = vld [vmem:[%s1 + $0x170] sm:$0xff]
    %v1971 = vld [vmem:[%s1 + $0x178] sm:$0xff]
    %v1972 = vld [vmem:[%s1 + $0x180] sm:$0xff]
    %v1973 = vld [vmem:[%s1 + $0x188] sm:$0xff]
    %v1974 = vld [vmem:[%s1 + $0x190] sm:$0xff]
    %v1975 = vld [vmem:[%s1 + $0x198] sm:$0xff]
    %v1976 = vld [vmem:[%s1 + $0x1a0] sm:$0xff]
    %v1977 = vld [vmem:[%s1 + $0x1a8] sm:$0xff]
    %v1978 = vld [vmem:[%s1 + $0x1b0] sm:$0xff]
    %v1979 = vld [vmem:[%s1 + $0x1b8] sm:$0xff]
    %v1980 = vld [vmem:[%s1 + $0x1c0] sm:$0xff]
    %v1981 = vld [vmem:[%s1 + $0x1c8] sm:$0xff]
    %v1982 = vld [vmem:[%s1 + $0x1d0] sm:$0xff]
    %v1983 = vld [vmem:[%s1 + $0x1d8] sm:$0xff]
    %v1984 = vld [vmem:[%s1 + $0x1e0] sm:$0xff]
    %v1985 = vld [vmem:[%s1 + $0x1e8] sm:$0xff]
    %v1986 = vld [vmem:[%s1 + $0x1f0] sm:$0xff]
    %v1987 = vld [vmem:[%s1 + $0x1f8] sm:$0xff]
    %v1988 = vld [vmem:[%s1 + $0x200] sm:$0xff]
    %v1989 = vld [vmem:[%s1 + $0x208] sm:$0xff]
    %v1990 = vld [vmem:[%s1 + $0x210] sm:$0xff]
    %v1991 = vld [vmem:[%s1 + $0x218] sm:$0xff]
    %v1992 = vld [vmem:[%s1 + $0x220] sm:$0xff]
    %v1993 = vld [vmem:[%s1 + $0x228] sm:$0xff]
    %v1994 = vld [vmem:[%s1 + $0x230] sm:$0xff]
    %v1995 = vld [vmem:[%s1 + $0x238] sm:$0xff]
    %v1996 = vld [vmem:[%s1 + $0x240] sm:$0xff]
    %v1997 = vld [vmem:[%s1 + $0x248] sm:$0xff]
    %v1998 = vld [vmem:[%s1 + $0x250] sm:$0xff]
    %v1999 = vld [vmem:[%s1 + $0x258] sm:$0xff]
    %v2000 = vld [vmem:[%s1 + $0x260] sm:$0xff]
    %v2001 = vld [vmem:[%s1 + $0x268] sm:$0xff]
    %v2002 = vld [vmem:[%s1 + $0x270] sm:$0xff]
    %v2003 = vld [vmem:[%s1 + $0x278] sm:$0xff]
    %v2004 = vld [vmem:[%s1 + $0x280] sm:$0xff]
    %v2005 = vld [vmem:[%s1 + $0x288] sm:$0xff]
    %v2006 = vld [vmem:[%s1 + $0x290] sm:$0xff]
    %v2007 = vld [vmem:[%s1 + $0x298] sm:$0xff]
    %v2008 = vld [vmem:[%s1 + $0x2a0] sm:$0xff]
    %v2009 = vld [vmem:[%s1 + $0x2a8] sm:$0xff]
    %v2010 = vld [vmem:[%s1 + $0x2b0] sm:$0xff]
    %v2011 = vld [vmem:[%s1 + $0x2b8] sm:$0xff]
    %v2012 = vld [vmem:[%s1 + $0x2c0] sm:$0xff]
    %v2013 = vld [vmem:[%s1 + $0x2c8] sm:$0xff]
    %v2014 = vld [vmem:[%s1 + $0x2d0] sm:$0xff]
    %v2015 = vld [vmem:[%s1 + $0x2d8] sm:$0xff]
    %v2016 = vld [vmem:[%s1 + $0x2e0] sm:$0xff]
    %v2017 = vld [vmem:[%s1 + $0x2e8] sm:$0xff]
    %v2018 = vld [vmem:[%s1 + $0x2f0] sm:$0xff]
    %v2019 = vld [vmem:[%s1 + $0x2f8] sm:$0xff]
    %v2020 = vld [vmem:[%s1 + $0x300] sm:$0xff]
    %v2021 = vld [vmem:[%s1 + $0x308] sm:$0xff]
    %v2022 = vld [vmem:[%s1 + $0x310] sm:$0xff]
    %v2023 = vld [vmem:[%s1 + $0x318] sm:$0xff]
    %v2024 = vld [vmem:[%s1 + $0x320] sm:$0xff]
    %v2025 = vld [vmem:[%s1 + $0x328] sm:$0xff]
    %v2026 = vld [vmem:[%s1 + $0x330] sm:$0xff]
    %v2027 = vld [vmem:[%s1 + $0x338] sm:$0xff]
    %v2028 = vld [vmem:[%s1 + $0x340] sm:$0xff]
    %v2029 = vld [vmem:[%s1 + $0x348] sm:$0xff]
    %v2030 = vld [vmem:[%s1 + $0x350] sm:$0xff]
    %v2031 = vld [vmem:[%s1 + $0x358] sm:$0xff]
    %v2032 = vld [vmem:[%s1 + $0x360] sm:$0xff]
    %v2033 = vld [vmem:[%s1 + $0x368] sm:$0xff]
    %v2034 = vld [vmem:[%s1 + $0x370] sm:$0xff]
    %v2035 = vld [vmem:[%s1 + $0x378] sm:$0xff]
    %v2036 = vld [vmem:[%s1 + $0x380] sm:$0xff]
    %v2037 = vld [vmem:[%s1 + $0x388] sm:$0xff]
    %v2038 = vld [vmem:[%s1 + $0x390] sm:$0xff]
    %v2039 = vld [vmem:[%s1 + $0x398] sm:$0xff]
    %v2040 = vld [vmem:[%s1 + $0x3a0] sm:$0xff]
    %v2041 = vld [vmem:[%s1 + $0x3a8] sm:$0xff]
    %v2042 = vld [vmem:[%s1 + $0x3b0] sm:$0xff]
    %v2043 = vld [vmem:[%s1 + $0x3b8] sm:$0xff]
    %v2044 = vld [vmem:[%s1 + $0x3c0] sm:$0xff]
    %v2045 = vld [vmem:[%s1 + $0x3c8] sm:$0xff]
    %v2046 = vld [vmem:[%s1 + $0x3d0] sm:$0xff]
    %v2047 = vld [vmem:[%s1 + $0x3d8] sm:$0xff]
    %v2048 = vld [vmem:[%s1 + $0x3e0] sm:$0xff]
    %v2049 = vld [vmem:[%s1 + $0x3e8] sm:$0xff]
    %v2050 = vld [vmem:[%s1 + $0x3f0] sm:$0xff]
    %v2051 = vld [vmem:[%s1 + $0x3f8] sm:$0xff]
    %v2052 = vld [vmem:[%s1 + $0x400] sm:$0xff]
    %v2053 = vld [vmem:[%s1 + $0x408] sm:$0xff]
    %v2054 = vld [vmem:[%s1 + $0x410] sm:$0xff]
    %v2055 = vld [vmem:[%s1 + $0x418] sm:$0xff]
    %v2056 = vld [vmem:[%s1 + $0x420] sm:$0xff]
    %v2057 = vld [vmem:[%s1 + $0x428] sm:$0xff]
    %v2058 = vld [vmem:[%s1 + $0x430] sm:$0xff]
    %v2059 = vld [vmem:[%s1 + $0x438] sm:$0xff]
    %v2060 = vld [vmem:[%s1 + $0x440] sm:$0xff]
    %v2061 = vld [vmem:[%s1 + $0x448] sm:$0xff]
    %v2062 = vld [vmem:[%s1 + $0x450] sm:$0xff]
    %v2063 = vld [vmem:[%s1 + $0x458] sm:$0xff]
    %v2064 = vld [vmem:[%s1 + $0x460] sm:$0xff]
    %v2065 = vld [vmem:[%s1 + $0x468] sm:$0xff]
    %v2066 = vld [vmem:[%s1 + $0x470] sm:$0xff]
    %v2067 = vld [vmem:[%s1 + $0x478] sm:$0xff]
    %v2068 = vld [vmem:[%s1 + $0x480] sm:$0xff]
    %v2069 = vld [vmem:[%s1 + $0x488] sm:$0xff]
    %v2070 = vld [vmem:[%s1 + $0x490] sm:$0xff]
    %v2071 = vld [vmem:[%s1 + $0x498] sm:$0xff]
    %v2072 = vld [vmem:[%s1 + $0x4a0] sm:$0xff]
    %v2073 = vld [vmem:[%s1 + $0x4a8] sm:$0xff]
    %v2074 = vld [vmem:[%s1 + $0x4b0] sm:$0xff]
    %v2075 = vld [vmem:[%s1 + $0x4b8] sm:$0xff]
    %v2076 = vld [vmem:[%s1 + $0x4c0] sm:$0xff]
    %v2077 = vld [vmem:[%s1 + $0x4c8] sm:$0xff]
    %v2078 = vld [vmem:[%s1 + $0x4d0] sm:$0xff]
    %v2079 = vld [vmem:[%s1 + $0x4d8] sm:$0xff]
    %v2080 = vld [vmem:[%s1 + $0x4e0] sm:$0xff]
    %v2081 = vld [vmem:[%s1 + $0x4e8] sm:$0xff]
    %v2082 = vld [vmem:[%s1 + $0x4f0] sm:$0xff]
    %v2083 = vld [vmem:[%s1 + $0x4f8] sm:$0xff]
    %v2084 = vld [vmem:[%s1 + $0x500] sm:$0xff]
    %v2085 = vld [vmem:[%s1 + $0x508] sm:$0xff]
    %v2086 = vld [vmem:[%s1 + $0x510] sm:$0xff]
    %v2087 = vld [vmem:[%s1 + $0x518] sm:$0xff]
    %v2088 = vld [vmem:[%s1 + $0x520] sm:$0xff]
    %v2089 = vld [vmem:[%s1 + $0x528] sm:$0xff]
    %v2090 = vld [vmem:[%s1 + $0x530] sm:$0xff]
    %v2091 = vld [vmem:[%s1 + $0x538] sm:$0xff]
    %v2092 = vld [vmem:[%s1 + $0x540] sm:$0xff]
    %v2093 = vld [vmem:[%s1 + $0x548] sm:$0xff]
    %v2094 = vld [vmem:[%s1 + $0x550] sm:$0xff]
    %v2095 = vld [vmem:[%s1 + $0x558] sm:$0xff]
    %v2096 = vld [vmem:[%s1 + $0x560] sm:$0xff]
    %v2097 = vld [vmem:[%s1 + $0x568] sm:$0xff]
    %v2098 = vld [vmem:[%s1 + $0x570] sm:$0xff]
    %v2099 = vld [vmem:[%s1 + $0x578] sm:$0xff]
    %v2100 = vld [vmem:[%s1 + $0x580] sm:$0xff]
    %v2101 = vld [vmem:[%s1 + $0x588] sm:$0xff]
    %v2102 = vld [vmem:[%s1 + $0x590] sm:$0xff]
    %v2103 = vld [vmem:[%s1 + $0x598] sm:$0xff]
    %v2104 = vld [vmem:[%s1 + $0x5a0] sm:$0xff]
    %v2105 = vld [vmem:[%s1 + $0x5a8] sm:$0xff]
    %v2106 = vld [vmem:[%s1 + $0x5b0] sm:$0xff]
    %v2107 = vld [vmem:[%s1 + $0x5b8] sm:$0xff]
    %v2108 = vld [vmem:[%s1 + $0x5c0] sm:$0xff]
    %v2109 = vld [vmem:[%s1 + $0x5c8] sm:$0xff]
    %v2110 = vld [vmem:[%s1 + $0x5d0] sm:$0xff]
    %v2111 = vld [vmem:[%s1 + $0x5d8] sm:$0xff]
    %v2112 = vld [vmem:[%s1 + $0x5e0] sm:$0xff]
    %v2113 = vld [vmem:[%s1 + $0x5e8] sm:$0xff]
    %v2114 = vld [vmem:[%s1 + $0x5f0] sm:$0xff]
    %v2115 = vld [vmem:[%s1 + $0x5f8] sm:$0xff]
    %2116 = vmatprep.subr.mxu0 %v2015
    %2117 = vmatpush1.msra.mxu0 %v2014
    %2118 = vmatprep.subr.mxu0 %v2009
    %2119 = vmatpush1.msra.mxu0 %v2008
    %2120 = vmatprep.subr.mxu0 %v2003
    %2121 = vmatpush1.msra.mxu0 %v2002
    %2122 = vmatprep.subr.mxu0 %v1997
    %2123 = vmatpush1.msra.mxu0 %v1996
    %2124 = vmatprep.subr.mxu0 %v1991
    %2125 = vmatpush1.msra.mxu0 %v1990
    %2126 = vmatprep.subr.mxu0 %v1985
    %2127 = vmatpush1.msra.mxu0 %v1984
    %2128 = vmatprep.subr.mxu0 %v1979
    %2129 = vmatpush1.msra.mxu0 %v1978
    %2130 = vmatprep.subr.mxu0 %v1973
    %2131 = vmatpush1.msra.mxu0 %v1972
    %2132 = vmatprep.subr.mxu0 %v1967
    %2133 = vmatpush1.msra.mxu0 %v1966
    %2134 = vmatprep.subr.mxu0 %v1961
    %2135 = vmatpush1.msra.mxu0 %v1960
    %2136 = vmatprep.subr.mxu0 %v1955
    %2137 = vmatpush1.msra.mxu0 %v1954
    %2138 = vmatprep.subr.mxu0 %v1949
    %2139 = vmatpush1.msra.mxu0 %v1948
    %2140 = vmatprep.subr.mxu0 %v1943
    %2141 = vmatpush1.msra.mxu0 %v1942
    %2142 = vmatprep.subr.mxu0 %v1937
    %2143 = vmatpush1.msra.mxu0 %v1936
    %2144 = vmatprep.subr.mxu0 %v1931
    %2145 = vmatpush1.msra.mxu0 %v1930
    %2146 = vmatprep.subr.mxu0 %v1925
    %2147 = vmatpush1.msra.mxu0 %v1924
    %2148 = vmatprep.subr.mxu0 %v2111
    %2149 = vmatpush2.msra.mxu0 %v2110
    %2150 = vmatprep.subr.mxu0 %v2105
    %2151 = vmatpush2.msra.mxu0 %v2104
    %2152 = vmatprep.subr.mxu0 %v2099
    %2153 = vmatpush2.msra.mxu0 %v2098
    %2154 = vmatprep.subr.mxu0 %v2093
    %2155 = vmatpush2.msra.mxu0 %v2092
    %2156 = vmatprep.subr.mxu0 %v2087
    %2157 = vmatpush2.msra.mxu0 %v2086
    %2158 = vmatprep.subr.mxu0 %v2081
    %2159 = vmatpush2.msra.mxu0 %v2080
    %2160 = vmatprep.subr.mxu0 %v2075
    %2161 = vmatpush2.msra.mxu0 %v2074
    %2162 = vmatprep.subr.mxu0 %v2069
    %2163 = vmatpush2.msra.mxu0 %v2068
    %2164 = vmatprep.subr.mxu0 %v2063
    %2165 = vmatpush2.msra.mxu0 %v2062
    %2166 = vmatprep.subr.mxu0 %v2057
    %2167 = vmatpush2.msra.mxu0 %v2056
    %2168 = vmatprep.subr.mxu0 %v2051
    %2169 = vmatpush2.msra.mxu0 %v2050
    %2170 = vmatprep.subr.mxu0 %v2045
    %2171 = vmatpush2.msra.mxu0 %v2044
    %2172 = vmatprep.subr.mxu0 %v2039
    %2173 = vmatpush2.msra.mxu0 %v2038
    %2174 = vmatprep.subr.mxu0 %v2033
    %2175 = vmatpush2.msra.mxu0 %v2032
    %2176 = vmatprep.subr.mxu0 %v2027
    %2177 = vmatpush2.msra.mxu0 %v2026
    %2178 = vmatprep.subr.mxu0 %v2021
    %2179 = vmatpush2.msra.mxu0 %v2020
    %2180 = vmatprep.mubr.f32.mxu0 %v1915
    %2181 = vmatmul.mubr.f32.gmra.mxu0 %v1893
    %v2182 = vpop.f32.mrf.mxu0
    %v2183 = vadd.f32 0.0, %v2182
    %v2184 = vpop.f32.mrf.mxu0
    %v2185 = vadd.f32 0.0, %v2184
    %2186 = vdwg.mxu0
    %2187 = vmatprep.subr.mxu0 %v2017
    %2188 = vmatpush1.msra.mxu0 %v2016
    %2189 = vmatprep.subr.mxu0 %v2011
    %2190 = vmatpush1.msra.mxu0 %v2010
    %2191 = vmatprep.subr.mxu0 %v2005
    %2192 = vmatpush1.msra.mxu0 %v2004
    %2193 = vmatprep.subr.mxu0 %v1999
    %2194 = vmatpush1.msra.mxu0 %v1998
    %2195 = vmatprep.subr.mxu0 %v1993
    %2196 = vmatpush1.msra.mxu0 %v1992
    %2197 = vmatprep.subr.mxu0 %v1987
    %2198 = vmatpush1.msra.mxu0 %v1986
    %2199 = vmatprep.subr.mxu0 %v1981
    %2200 = vmatpush1.msra.mxu0 %v1980
    %2201 = vmatprep.subr.mxu0 %v1975
    %2202 = vmatpush1.msra.mxu0 %v1974
    %2203 = vmatprep.subr.mxu0 %v1969
    %2204 = vmatpush1.msra.mxu0 %v1968
    %2205 = vmatprep.subr.mxu0 %v1963
    %2206 = vmatpush1.msra.mxu0 %v1962
    %2207 = vmatprep.subr.mxu0 %v1957
    %2208 = vmatpush1.msra.mxu0 %v1956
    %2209 = vmatprep.subr.mxu0 %v1951
    %2210 = vmatpush1.msra.mxu0 %v1950
    %2211 = vmatprep.subr.mxu0 %v1945
    %2212 = vmatpush1.msra.mxu0 %v1944
    %2213 = vmatprep.subr.mxu0 %v1939
    %2214 = vmatpush1.msra.mxu0 %v1938
    %2215 = vmatprep.subr.mxu0 %v1933
    %2216 = vmatpush1.msra.mxu0 %v1932
    %2217 = vmatprep.subr.mxu0 %v1927
    %2218 = vmatpush1.msra.mxu0 %v1926
    %2219 = vmatprep.subr.mxu0 %v2113
    %2220 = vmatpush2.msra.mxu0 %v2112
    %2221 = vmatprep.subr.mxu0 %v2107
    %2222 = vmatpush2.msra.mxu0 %v2106
    %2223 = vmatprep.subr.mxu0 %v2101
    %2224 = vmatpush2.msra.mxu0 %v2100
    %2225 = vmatprep.subr.mxu0 %v2095
    %2226 = vmatpush2.msra.mxu0 %v2094
    %2227 = vmatprep.subr.mxu0 %v2089
    %2228 = vmatpush2.msra.mxu0 %v2088
    %2229 = vmatprep.subr.mxu0 %v2083
    %2230 = vmatpush2.msra.mxu0 %v2082
    %2231 = vmatprep.subr.mxu0 %v2077
    %2232 = vmatpush2.msra.mxu0 %v2076
    %2233 = vmatprep.subr.mxu0 %v2071
    %2234 = vmatpush2.msra.mxu0 %v2070
    %2235 = vmatprep.subr.mxu0 %v2065
    %2236 = vmatpush2.msra.mxu0 %v2064
    %2237 = vmatprep.subr.mxu0 %v2059
    %2238 = vmatpush2.msra.mxu0 %v2058
    %2239 = vmatprep.subr.mxu0 %v2053
    %2240 = vmatpush2.msra.mxu0 %v2052
    %2241 = vmatprep.subr.mxu0 %v2047
    %2242 = vmatpush2.msra.mxu0 %v2046
    %2243 = vmatprep.subr.mxu0 %v2041
    %2244 = vmatpush2.msra.mxu0 %v2040
    %2245 = vmatprep.subr.mxu0 %v2035
    %2246 = vmatpush2.msra.mxu0 %v2034
    %2247 = vmatprep.subr.mxu0 %v2029
    %2248 = vmatpush2.msra.mxu0 %v2028
    %2249 = vmatprep.subr.mxu0 %v2023
    %2250 = vmatpush2.msra.mxu0 %v2022
    %2251 = vmatprep.mubr.f32.mxu0 %v1915
    %2252 = vmatmul.mubr.f32.gmra.mxu0 %v1893
    %v2253 = vpop.f32.mrf.mxu0
    %v2254 = vadd.f32 0.0, %v2253
    %v2255 = vpop.f32.mrf.mxu0
    %v2256 = vadd.f32 0.0, %v2255
    %2257 = vdwg.mxu0
    %2258 = vmatprep.subr.mxu0 %v2019
    %2259 = vmatpush1.msra.mxu0 %v2018
    %2260 = vmatprep.subr.mxu0 %v2013
    %2261 = vmatpush1.msra.mxu0 %v2012
    %2262 = vmatprep.subr.mxu0 %v2007
    %2263 = vmatpush1.msra.mxu0 %v2006
    %2264 = vmatprep.subr.mxu0 %v2001
    %2265 = vmatpush1.msra.mxu0 %v2000
    %2266 = vmatprep.subr.mxu0 %v1995
    %2267 = vmatpush1.msra.mxu0 %v1994
    %2268 = vmatprep.subr.mxu0 %v1989
    %2269 = vmatpush1.msra.mxu0 %v1988
    %2270 = vmatprep.subr.mxu0 %v1983
    %2271 = vmatpush1.msra.mxu0 %v1982
    %2272 = vmatprep.subr.mxu0 %v1977
    %2273 = vmatpush1.msra.mxu0 %v1976
    %2274 = vmatprep.subr.mxu0 %v1971
    %2275 = vmatpush1.msra.mxu0 %v1970
    %2276 = vmatprep.subr.mxu0 %v1965
    %2277 = vmatpush1.msra.mxu0 %v1964
    %2278 = vmatprep.subr.mxu0 %v1959
    %2279 = vmatpush1.msra.mxu0 %v1958
    %2280 = vmatprep.subr.mxu0 %v1953
    %2281 = vmatpush1.msra.mxu0 %v1952
    %2282 = vmatprep.subr.mxu0 %v1947
    %2283 = vmatpush1.msra.mxu0 %v1946
    %2284 = vmatprep.subr.mxu0 %v1941
    %2285 = vmatpush1.msra.mxu0 %v1940
    %2286 = vmatprep.subr.mxu0 %v1935
    %2287 = vmatpush1.msra.mxu0 %v1934
    %2288 = vmatprep.subr.mxu0 %v1929
    %2289 = vmatpush1.msra.mxu0 %v1928
    %2290 = vmatprep.subr.mxu0 %v2115
    %2291 = vmatpush2.msra.mxu0 %v2114
    %2292 = vmatprep.subr.mxu0 %v2109
    %2293 = vmatpush2.msra.mxu0 %v2108
    %2294 = vmatprep.subr.mxu0 %v2103
    %2295 = vmatpush2.msra.mxu0 %v2102
    %2296 = vmatprep.subr.mxu0 %v2097
    %2297 = vmatpush2.msra.mxu0 %v2096
    %2298 = vmatprep.subr.mxu0 %v2091
    %2299 = vmatpush2.msra.mxu0 %v2090
    %2300 = vmatprep.subr.mxu0 %v2085
    %2301 = vmatpush2.msra.mxu0 %v2084
    %2302 = vmatprep.subr.mxu0 %v2079
    %2303 = vmatpush2.msra.mxu0 %v2078
    %2304 = vmatprep.subr.mxu0 %v2073
    %2305 = vmatpush2.msra.mxu0 %v2072
    %2306 = vmatprep.subr.mxu0 %v2067
    %2307 = vmatpush2.msra.mxu0 %v2066
    %2308 = vmatprep.subr.mxu0 %v2061
    %2309 = vmatpush2.msra.mxu0 %v2060
    %2310 = vmatprep.subr.mxu0 %v2055
    %2311 = vmatpush2.msra.mxu0 %v2054
    %2312 = vmatprep.subr.mxu0 %v2049
    %2313 = vmatpush2.msra.mxu0 %v2048
    %2314 = vmatprep.subr.mxu0 %v2043
    %2315 = vmatpush2.msra.mxu0 %v2042
    %2316 = vmatprep.subr.mxu0 %v2037
    %2317 = vmatpush2.msra.mxu0 %v2036
    %2318 = vmatprep.subr.mxu0 %v2031
    %2319 = vmatpush2.msra.mxu0 %v2030
    %2320 = vmatprep.subr.mxu0 %v2025
    %2321 = vmatpush2.msra.mxu0 %v2024
    %2322 = vmatprep.mubr.f32.mxu0 %v1915
    %2323 = vmatmul.mubr.f32.gmra.mxu0 %v1893
    %v2324 = vpop.f32.mrf.mxu0
    %v2325 = vadd.f32 0.0, %v2324
    %v2326 = vpop.f32.mrf.mxu0
    %v2327 = vadd.f32 0.0, %v2326
    %2328 = vdwg.mxu0
    %v2329 = vld [vmem:[%s1868] sm:$0xff]
    %v2330 = vld [vmem:[%s1868 + $0x8] sm:$0xff]
    %v2331 = vld [vmem:[%s1868 + $0x10] sm:$0xff]
    %v2332 = vld [vmem:[%s1862 + $0x18] sm:$0xff]
    %v2333 = vld [vmem:[%s1862 + $0x20] sm:$0xff]
    %v2334 = vld [vmem:[%s1862 + $0x28] sm:$0xff]
    %v2335 = vadd.f32 %v2329, %v2183
    %v2336 = vxor.u32 %v2335, 2147483648
    %v2337 = vmul.f32 %v2336, 1.442695
    %v2338 = vpow.pop %v2337
    %v2339 = vadd.f32 %v2338, 1.0
    %v2340 = vrcp.pop %v2339
    %v2341 = vmul.f32 1.0, %v2340
    %v2342 = vadd.f32 %v2330, %v2185
    %v2343 = vxor.u32 %v2342, 2147483648
    %v2344 = vmul.f32 %v2343, 1.442695
    %v2345 = vpow.pop %v2344
    %v2346 = vadd.f32 %v2345, 1.0
    %v2347 = vrcp.pop %v2346
    %v2348 = vmul.f32 1.0, %v2347
    %v2349 = vadd.f32 %v2254, %v39
    %v2350 = vmul.f32 %v2341, %v2349
    %v2351 = vadd.f32 %v2331, %v2350
    %v2352 = vtanh.pop %v2351
    %v2353 = vsub.f32 1.0, %v2348
    %v2354 = vmul.f32 %v2353, %v2352
    %v2355 = vmul.f32 %v2348, %v1893
    %v2356 = vadd.f32 %v2354, %v2355
    %v2357 = vadd.f32 %v2332, %v2256
    %v2358 = vxor.u32 %v2357, 2147483648
    %v2359 = vmul.f32 %v2358, 1.442695
    %v2360 = vpow.pop %v2359
    %v2361 = vadd.f32 %v2360, 1.0
    %v2362 = vrcp.pop %v2361
    %v2363 = vmul.f32 1.0, %v2362
    %v2364 = vadd.f32 %v2333, %v2325
    %v2365 = vxor.u32 %v2364, 2147483648
    %v2366 = vmul.f32 %v2365, 1.442695
    %v2367 = vpow.pop %v2366
    %v2368 = vadd.f32 %v2367, 1.0
    %v2369 = vrcp.pop %v2368
    %v2370 = vmul.f32 1.0, %v2369
    %v2371 = vadd.f32 %v2327, %v46
    %v2372 = vmul.f32 %v2363, %v2371
    %v2373 = vadd.f32 %v2334, %v2372
    %v2374 = vtanh.pop %v2373
    %v2375 = vsub.f32 1.0, %v2370
    %v2376 = vmul.f32 %v2375, %v2374
    %v2377 = vmul.f32 %v2370, %v1915
    %v2378 = vadd.f32 %v2376, %v2377
    %2379 = vst [vmem:[%s1922] sm:$0xff] %v2356
    %2380 = vst [vmem:[%s1918 + $0x8] sm:$0xff] %v2378
    %v2381 = vld [vmem:[%s1] sm:$0xff]
    %v2382 = vld [vmem:[%s1 + $0x8] sm:$0xff]
    %v2383 = vld [vmem:[%s1 + $0x10] sm:$0xff]
    %v2384 = vld [vmem:[%s1 + $0x18] sm:$0xff]
    %v2385 = vld [vmem:[%s1 + $0x20] sm:$0xff]
    %v2386 = vld [vmem:[%s1 + $0x28] sm:$0xff]
    %v2387 = vld [vmem:[%s1 + $0x30] sm:$0xff]
    %v2388 = vld [vmem:[%s1 + $0x38] sm:$0xff]
    %v2389 = vld [vmem:[%s1 + $0x40] sm:$0xff]
    %v2390 = vld [vmem:[%s1 + $0x48] sm:$0xff]
    %v2391 = vld [vmem:[%s1 + $0x50] sm:$0xff]
    %v2392 = vld [vmem:[%s1 + $0x58] sm:$0xff]
    %v2393 = vld [vmem:[%s1 + $0x60] sm:$0xff]
    %v2394 = vld [vmem:[%s1 + $0x68] sm:$0xff]
    %v2395 = vld [vmem:[%s1 + $0x70] sm:$0xff]
    %v2396 = vld [vmem:[%s1 + $0x78] sm:$0xff]
    %v2397 = vld [vmem:[%s1 + $0x80] sm:$0xff]
    %v2398 = vld [vmem:[%s1 + $0x88] sm:$0xff]
    %v2399 = vld [vmem:[%s1 + $0x90] sm:$0xff]
    %v2400 = vld [vmem:[%s1 + $0x98] sm:$0xff]
    %v2401 = vld [vmem:[%s1 + $0xa0] sm:$0xff]
    %v2402 = vld [vmem:[%s1 + $0xa8] sm:$0xff]
    %v2403 = vld [vmem:[%s1 + $0xb0] sm:$0xff]
    %v2404 = vld [vmem:[%s1 + $0xb8] sm:$0xff]
    %v2405 = vld [vmem:[%s1 + $0xc0] sm:$0xff]
    %v2406 = vld [vmem:[%s1 + $0xc8] sm:$0xff]
    %v2407 = vld [vmem:[%s1 + $0xd0] sm:$0xff]
    %v2408 = vld [vmem:[%s1 + $0xd8] sm:$0xff]
    %v2409 = vld [vmem:[%s1 + $0xe0] sm:$0xff]
    %v2410 = vld [vmem:[%s1 + $0xe8] sm:$0xff]
    %v2411 = vld [vmem:[%s1 + $0xf0] sm:$0xff]
    %v2412 = vld [vmem:[%s1 + $0xf8] sm:$0xff]
    %v2413 = vld [vmem:[%s1 + $0x100] sm:$0xff]
    %v2414 = vld [vmem:[%s1 + $0x108] sm:$0xff]
    %v2415 = vld [vmem:[%s1 + $0x110] sm:$0xff]
    %v2416 = vld [vmem:[%s1 + $0x118] sm:$0xff]
    %v2417 = vld [vmem:[%s1 + $0x120] sm:$0xff]
    %v2418 = vld [vmem:[%s1 + $0x128] sm:$0xff]
    %v2419 = vld [vmem:[%s1 + $0x130] sm:$0xff]
    %v2420 = vld [vmem:[%s1 + $0x138] sm:$0xff]
    %v2421 = vld [vmem:[%s1 + $0x140] sm:$0xff]
    %v2422 = vld [vmem:[%s1 + $0x148] sm:$0xff]
    %v2423 = vld [vmem:[%s1 + $0x150] sm:$0xff]
    %v2424 = vld [vmem:[%s1 + $0x158] sm:$0xff]
    %v2425 = vld [vmem:[%s1 + $0x160] sm:$0xff]
    %v2426 = vld [vmem:[%s1 + $0x168] sm:$0xff]
    %v2427 = vld [vmem:[%s1 + $0x170] sm:$0xff]
    %v2428 = vld [vmem:[%s1 + $0x178] sm:$0xff]
    %v2429 = vld [vmem:[%s1 + $0x180] sm:$0xff]
    %v2430 = vld [vmem:[%s1 + $0x188] sm:$0xff]
    %v2431 = vld [vmem:[%s1 + $0x190] sm:$0xff]
    %v2432 = vld [vmem:[%s1 + $0x198] sm:$0xff]
    %v2433 = vld [vmem:[%s1 + $0x1a0] sm:$0xff]
    %v2434 = vld [vmem:[%s1 + $0x1a8] sm:$0xff]
    %v2435 = vld [vmem:[%s1 + $0x1b0] sm:$0xff]
    %v2436 = vld [vmem:[%s1 + $0x1b8] sm:$0xff]
    %v2437 = vld [vmem:[%s1 + $0x1c0] sm:$0xff]
    %v2438 = vld [vmem:[%s1 + $0x1c8] sm:$0xff]
    %v2439 = vld [vmem:[%s1 + $0x1d0] sm:$0xff]
    %v2440 = vld [vmem:[%s1 + $0x1d8] sm:$0xff]
    %v2441 = vld [vmem:[%s1 + $0x1e0] sm:$0xff]
    %v2442 = vld [vmem:[%s1 + $0x1e8] sm:$0xff]
    %v2443 = vld [vmem:[%s1 + $0x1f0] sm:$0xff]
    %v2444 = vld [vmem:[%s1 + $0x1f8] sm:$0xff]
    %v2445 = vld [vmem:[%s1 + $0x200] sm:$0xff]
    %v2446 = vld [vmem:[%s1 + $0x208] sm:$0xff]
    %v2447 = vld [vmem:[%s1 + $0x210] sm:$0xff]
    %v2448 = vld [vmem:[%s1 + $0x218] sm:$0xff]
    %v2449 = vld [vmem:[%s1 + $0x220] sm:$0xff]
    %v2450 = vld [vmem:[%s1 + $0x228] sm:$0xff]
    %v2451 = vld [vmem:[%s1 + $0x230] sm:$0xff]
    %v2452 = vld [vmem:[%s1 + $0x238] sm:$0xff]
    %v2453 = vld [vmem:[%s1 + $0x240] sm:$0xff]
    %v2454 = vld [vmem:[%s1 + $0x248] sm:$0xff]
    %v2455 = vld [vmem:[%s1 + $0x250] sm:$0xff]
    %v2456 = vld [vmem:[%s1 + $0x258] sm:$0xff]
    %v2457 = vld [vmem:[%s1 + $0x260] sm:$0xff]
    %v2458 = vld [vmem:[%s1 + $0x268] sm:$0xff]
    %v2459 = vld [vmem:[%s1 + $0x270] sm:$0xff]
    %v2460 = vld [vmem:[%s1 + $0x278] sm:$0xff]
    %v2461 = vld [vmem:[%s1 + $0x280] sm:$0xff]
    %v2462 = vld [vmem:[%s1 + $0x288] sm:$0xff]
    %v2463 = vld [vmem:[%s1 + $0x290] sm:$0xff]
    %v2464 = vld [vmem:[%s1 + $0x298] sm:$0xff]
    %v2465 = vld [vmem:[%s1 + $0x2a0] sm:$0xff]
    %v2466 = vld [vmem:[%s1 + $0x2a8] sm:$0xff]
    %v2467 = vld [vmem:[%s1 + $0x2b0] sm:$0xff]
    %v2468 = vld [vmem:[%s1 + $0x2b8] sm:$0xff]
    %v2469 = vld [vmem:[%s1 + $0x2c0] sm:$0xff]
    %v2470 = vld [vmem:[%s1 + $0x2c8] sm:$0xff]
    %v2471 = vld [vmem:[%s1 + $0x2d0] sm:$0xff]
    %v2472 = vld [vmem:[%s1 + $0x2d8] sm:$0xff]
    %v2473 = vld [vmem:[%s1 + $0x2e0] sm:$0xff]
    %v2474 = vld [vmem:[%s1 + $0x2e8] sm:$0xff]
    %v2475 = vld [vmem:[%s1 + $0x2f0] sm:$0xff]
    %v2476 = vld [vmem:[%s1 + $0x2f8] sm:$0xff]
    %v2477 = vld [vmem:[%s1 + $0x300] sm:$0xff]
    %v2478 = vld [vmem:[%s1 + $0x308] sm:$0xff]
    %v2479 = vld [vmem:[%s1 + $0x310] sm:$0xff]
    %v2480 = vld [vmem:[%s1 + $0x318] sm:$0xff]
    %v2481 = vld [vmem:[%s1 + $0x320] sm:$0xff]
    %v2482 = vld [vmem:[%s1 + $0x328] sm:$0xff]
    %v2483 = vld [vmem:[%s1 + $0x330] sm:$0xff]
    %v2484 = vld [vmem:[%s1 + $0x338] sm:$0xff]
    %v2485 = vld [vmem:[%s1 + $0x340] sm:$0xff]
    %v2486 = vld [vmem:[%s1 + $0x348] sm:$0xff]
    %v2487 = vld [vmem:[%s1 + $0x350] sm:$0xff]
    %v2488 = vld [vmem:[%s1 + $0x358] sm:$0xff]
    %v2489 = vld [vmem:[%s1 + $0x360] sm:$0xff]
    %v2490 = vld [vmem:[%s1 + $0x368] sm:$0xff]
    %v2491 = vld [vmem:[%s1 + $0x370] sm:$0xff]
    %v2492 = vld [vmem:[%s1 + $0x378] sm:$0xff]
    %v2493 = vld [vmem:[%s1 + $0x380] sm:$0xff]
    %v2494 = vld [vmem:[%s1 + $0x388] sm:$0xff]
    %v2495 = vld [vmem:[%s1 + $0x390] sm:$0xff]
    %v2496 = vld [vmem:[%s1 + $0x398] sm:$0xff]
    %v2497 = vld [vmem:[%s1 + $0x3a0] sm:$0xff]
    %v2498 = vld [vmem:[%s1 + $0x3a8] sm:$0xff]
    %v2499 = vld [vmem:[%s1 + $0x3b0] sm:$0xff]
    %v2500 = vld [vmem:[%s1 + $0x3b8] sm:$0xff]
    %v2501 = vld [vmem:[%s1 + $0x3c0] sm:$0xff]
    %v2502 = vld [vmem:[%s1 + $0x3c8] sm:$0xff]
    %v2503 = vld [vmem:[%s1 + $0x3d0] sm:$0xff]
    %v2504 = vld [vmem:[%s1 + $0x3d8] sm:$0xff]
    %v2505 = vld [vmem:[%s1 + $0x3e0] sm:$0xff]
    %v2506 = vld [vmem:[%s1 + $0x3e8] sm:$0xff]
    %v2507 = vld [vmem:[%s1 + $0x3f0] sm:$0xff]
    %v2508 = vld [vmem:[%s1 + $0x3f8] sm:$0xff]
    %v2509 = vld [vmem:[%s1 + $0x400] sm:$0xff]
    %v2510 = vld [vmem:[%s1 + $0x408] sm:$0xff]
    %v2511 = vld [vmem:[%s1 + $0x410] sm:$0xff]
    %v2512 = vld [vmem:[%s1 + $0x418] sm:$0xff]
    %v2513 = vld [vmem:[%s1 + $0x420] sm:$0xff]
    %v2514 = vld [vmem:[%s1 + $0x428] sm:$0xff]
    %v2515 = vld [vmem:[%s1 + $0x430] sm:$0xff]
    %v2516 = vld [vmem:[%s1 + $0x438] sm:$0xff]
    %v2517 = vld [vmem:[%s1 + $0x440] sm:$0xff]
    %v2518 = vld [vmem:[%s1 + $0x448] sm:$0xff]
    %v2519 = vld [vmem:[%s1 + $0x450] sm:$0xff]
    %v2520 = vld [vmem:[%s1 + $0x458] sm:$0xff]
    %v2521 = vld [vmem:[%s1 + $0x460] sm:$0xff]
    %v2522 = vld [vmem:[%s1 + $0x468] sm:$0xff]
    %v2523 = vld [vmem:[%s1 + $0x470] sm:$0xff]
    %v2524 = vld [vmem:[%s1 + $0x478] sm:$0xff]
    %v2525 = vld [vmem:[%s1 + $0x480] sm:$0xff]
    %v2526 = vld [vmem:[%s1 + $0x488] sm:$0xff]
    %v2527 = vld [vmem:[%s1 + $0x490] sm:$0xff]
    %v2528 = vld [vmem:[%s1 + $0x498] sm:$0xff]
    %v2529 = vld [vmem:[%s1 + $0x4a0] sm:$0xff]
    %v2530 = vld [vmem:[%s1 + $0x4a8] sm:$0xff]
    %v2531 = vld [vmem:[%s1 + $0x4b0] sm:$0xff]
    %v2532 = vld [vmem:[%s1 + $0x4b8] sm:$0xff]
    %v2533 = vld [vmem:[%s1 + $0x4c0] sm:$0xff]
    %v2534 = vld [vmem:[%s1 + $0x4c8] sm:$0xff]
    %v2535 = vld [vmem:[%s1 + $0x4d0] sm:$0xff]
    %v2536 = vld [vmem:[%s1 + $0x4d8] sm:$0xff]
    %v2537 = vld [vmem:[%s1 + $0x4e0] sm:$0xff]
    %v2538 = vld [vmem:[%s1 + $0x4e8] sm:$0xff]
    %v2539 = vld [vmem:[%s1 + $0x4f0] sm:$0xff]
    %v2540 = vld [vmem:[%s1 + $0x4f8] sm:$0xff]
    %v2541 = vld [vmem:[%s1 + $0x500] sm:$0xff]
    %v2542 = vld [vmem:[%s1 + $0x508] sm:$0xff]
    %v2543 = vld [vmem:[%s1 + $0x510] sm:$0xff]
    %v2544 = vld [vmem:[%s1 + $0x518] sm:$0xff]
    %v2545 = vld [vmem:[%s1 + $0x520] sm:$0xff]
    %v2546 = vld [vmem:[%s1 + $0x528] sm:$0xff]
    %v2547 = vld [vmem:[%s1 + $0x530] sm:$0xff]
    %v2548 = vld [vmem:[%s1 + $0x538] sm:$0xff]
    %v2549 = vld [vmem:[%s1 + $0x540] sm:$0xff]
    %v2550 = vld [vmem:[%s1 + $0x548] sm:$0xff]
    %v2551 = vld [vmem:[%s1 + $0x550] sm:$0xff]
    %v2552 = vld [vmem:[%s1 + $0x558] sm:$0xff]
    %v2553 = vld [vmem:[%s1 + $0x560] sm:$0xff]
    %v2554 = vld [vmem:[%s1 + $0x568] sm:$0xff]
    %v2555 = vld [vmem:[%s1 + $0x570] sm:$0xff]
    %v2556 = vld [vmem:[%s1 + $0x578] sm:$0xff]
    %v2557 = vld [vmem:[%s1 + $0x580] sm:$0xff]
    %v2558 = vld [vmem:[%s1 + $0x588] sm:$0xff]
    %v2559 = vld [vmem:[%s1 + $0x590] sm:$0xff]
    %v2560 = vld [vmem:[%s1 + $0x598] sm:$0xff]
    %v2561 = vld [vmem:[%s1 + $0x5a0] sm:$0xff]
    %v2562 = vld [vmem:[%s1 + $0x5a8] sm:$0xff]
    %v2563 = vld [vmem:[%s1 + $0x5b0] sm:$0xff]
    %v2564 = vld [vmem:[%s1 + $0x5b8] sm:$0xff]
    %v2565 = vld [vmem:[%s1 + $0x5c0] sm:$0xff]
    %v2566 = vld [vmem:[%s1 + $0x5c8] sm:$0xff]
    %v2567 = vld [vmem:[%s1 + $0x5d0] sm:$0xff]
    %v2568 = vld [vmem:[%s1 + $0x5d8] sm:$0xff]
    %v2569 = vld [vmem:[%s1 + $0x5e0] sm:$0xff]
    %v2570 = vld [vmem:[%s1 + $0x5e8] sm:$0xff]
    %v2571 = vld [vmem:[%s1 + $0x5f0] sm:$0xff]
    %v2572 = vld [vmem:[%s1 + $0x5f8] sm:$0xff]
    %2573 = vmatprep.subr.mxu0 %v2472
    %2574 = vmatpush1.msra.mxu0 %v2471
    %2575 = vmatprep.subr.mxu0 %v2466
    %2576 = vmatpush1.msra.mxu0 %v2465
    %2577 = vmatprep.subr.mxu0 %v2460
    %2578 = vmatpush1.msra.mxu0 %v2459
    %2579 = vmatprep.subr.mxu0 %v2454
    %2580 = vmatpush1.msra.mxu0 %v2453
    %2581 = vmatprep.subr.mxu0 %v2448
    %2582 = vmatpush1.msra.mxu0 %v2447
    %2583 = vmatprep.subr.mxu0 %v2442
    %2584 = vmatpush1.msra.mxu0 %v2441
    %2585 = vmatprep.subr.mxu0 %v2436
    %2586 = vmatpush1.msra.mxu0 %v2435
    %2587 = vmatprep.subr.mxu0 %v2430
    %2588 = vmatpush1.msra.mxu0 %v2429
    %2589 = vmatprep.subr.mxu0 %v2424
    %2590 = vmatpush1.msra.mxu0 %v2423
    %2591 = vmatprep.subr.mxu0 %v2418
    %2592 = vmatpush1.msra.mxu0 %v2417
    %2593 = vmatprep.subr.mxu0 %v2412
    %2594 = vmatpush1.msra.mxu0 %v2411
    %2595 = vmatprep.subr.mxu0 %v2406
    %2596 = vmatpush1.msra.mxu0 %v2405
    %2597 = vmatprep.subr.mxu0 %v2400
    %2598 = vmatpush1.msra.mxu0 %v2399
    %2599 = vmatprep.subr.mxu0 %v2394
    %2600 = vmatpush1.msra.mxu0 %v2393
    %2601 = vmatprep.subr.mxu0 %v2388
    %2602 = vmatpush1.msra.mxu0 %v2387
    %2603 = vmatprep.subr.mxu0 %v2382
    %2604 = vmatpush1.msra.mxu0 %v2381
    %2605 = vmatprep.subr.mxu0 %v2568
    %2606 = vmatpush2.msra.mxu0 %v2567
    %2607 = vmatprep.subr.mxu0 %v2562
    %2608 = vmatpush2.msra.mxu0 %v2561
    %2609 = vmatprep.subr.mxu0 %v2556
    %2610 = vmatpush2.msra.mxu0 %v2555
    %2611 = vmatprep.subr.mxu0 %v2550
    %2612 = vmatpush2.msra.mxu0 %v2549
    %2613 = vmatprep.subr.mxu0 %v2544
    %2614 = vmatpush2.msra.mxu0 %v2543
    %2615 = vmatprep.subr.mxu0 %v2538
    %2616 = vmatpush2.msra.mxu0 %v2537
    %2617 = vmatprep.subr.mxu0 %v2532
    %2618 = vmatpush2.msra.mxu0 %v2531
    %2619 = vmatprep.subr.mxu0 %v2526
    %2620 = vmatpush2.msra.mxu0 %v2525
    %2621 = vmatprep.subr.mxu0 %v2520
    %2622 = vmatpush2.msra.mxu0 %v2519
    %2623 = vmatprep.subr.mxu0 %v2514
    %2624 = vmatpush2.msra.mxu0 %v2513
    %2625 = vmatprep.subr.mxu0 %v2508
    %2626 = vmatpush2.msra.mxu0 %v2507
    %2627 = vmatprep.subr.mxu0 %v2502
    %2628 = vmatpush2.msra.mxu0 %v2501
    %2629 = vmatprep.subr.mxu0 %v2496
    %2630 = vmatpush2.msra.mxu0 %v2495
    %2631 = vmatprep.subr.mxu0 %v2490
    %2632 = vmatpush2.msra.mxu0 %v2489
    %2633 = vmatprep.subr.mxu0 %v2484
    %2634 = vmatpush2.msra.mxu0 %v2483
    %2635 = vmatprep.subr.mxu0 %v2478
    %2636 = vmatpush2.msra.mxu0 %v2477
    %2637 = vmatprep.mubr.f32.mxu0 %v2378
    %2638 = vmatmul.mubr.f32.gmra.mxu0 %v2356
    %v2639 = vpop.f32.mrf.mxu0
    %v2640 = vadd.f32 0.0, %v2639
    %v2641 = vpop.f32.mrf.mxu0
    %v2642 = vadd.f32 0.0, %v2641
    %2643 = vdwg.mxu0
    %2644 = vmatprep.subr.mxu0 %v2474
    %2645 = vmatpush1.msra.mxu0 %v2473
    %2646 = vmatprep.subr.mxu0 %v2468
    %2647 = vmatpush1.msra.mxu0 %v2467
    %2648 = vmatprep.subr.mxu0 %v2462
    %2649 = vmatpush1.msra.mxu0 %v2461
    %2650 = vmatprep.subr.mxu0 %v2456
    %2651 = vmatpush1.msra.mxu0 %v2455
    %2652 = vmatprep.subr.mxu0 %v2450
    %2653 = vmatpush1.msra.mxu0 %v2449
    %2654 = vmatprep.subr.mxu0 %v2444
    %2655 = vmatpush1.msra.mxu0 %v2443
    %2656 = vmatprep.subr.mxu0 %v2438
    %2657 = vmatpush1.msra.mxu0 %v2437
    %2658 = vmatprep.subr.mxu0 %v2432
    %2659 = vmatpush1.msra.mxu0 %v2431
    %2660 = vmatprep.subr.mxu0 %v2426
    %2661 = vmatpush1.msra.mxu0 %v2425
    %2662 = vmatprep.subr.mxu0 %v2420
    %2663 = vmatpush1.msra.mxu0 %v2419
    %2664 = vmatprep.subr.mxu0 %v2414
    %2665 = vmatpush1.msra.mxu0 %v2413
    %2666 = vmatprep.subr.mxu0 %v2408
    %2667 = vmatpush1.msra.mxu0 %v2407
    %2668 = vmatprep.subr.mxu0 %v2402
    %2669 = vmatpush1.msra.mxu0 %v2401
    %2670 = vmatprep.subr.mxu0 %v2396
    %2671 = vmatpush1.msra.mxu0 %v2395
    %2672 = vmatprep.subr.mxu0 %v2390
    %2673 = vmatpush1.msra.mxu0 %v2389
    %2674 = vmatprep.subr.mxu0 %v2384
    %2675 = vmatpush1.msra.mxu0 %v2383
    %2676 = vmatprep.subr.mxu0 %v2570
    %2677 = vmatpush2.msra.mxu0 %v2569
    %2678 = vmatprep.subr.mxu0 %v2564
    %2679 = vmatpush2.msra.mxu0 %v2563
    %2680 = vmatprep.subr.mxu0 %v2558
    %2681 = vmatpush2.msra.mxu0 %v2557
    %2682 = vmatprep.subr.mxu0 %v2552
    %2683 = vmatpush2.msra.mxu0 %v2551
    %2684 = vmatprep.subr.mxu0 %v2546
    %2685 = vmatpush2.msra.mxu0 %v2545
    %2686 = vmatprep.subr.mxu0 %v2540
    %2687 = vmatpush2.msra.mxu0 %v2539
    %2688 = vmatprep.subr.mxu0 %v2534
    %2689 = vmatpush2.msra.mxu0 %v2533
    %2690 = vmatprep.subr.mxu0 %v2528
    %2691 = vmatpush2.msra.mxu0 %v2527
    %2692 = vmatprep.subr.mxu0 %v2522
    %2693 = vmatpush2.msra.mxu0 %v2521
    %2694 = vmatprep.subr.mxu0 %v2516
    %2695 = vmatpush2.msra.mxu0 %v2515
    %2696 = vmatprep.subr.mxu0 %v2510
    %2697 = vmatpush2.msra.mxu0 %v2509
    %2698 = vmatprep.subr.mxu0 %v2504
    %2699 = vmatpush2.msra.mxu0 %v2503
    %2700 = vmatprep.subr.mxu0 %v2498
    %2701 = vmatpush2.msra.mxu0 %v2497
    %2702 = vmatprep.subr.mxu0 %v2492
    %2703 = vmatpush2.msra.mxu0 %v2491
    %2704 = vmatprep.subr.mxu0 %v2486
    %2705 = vmatpush2.msra.mxu0 %v2485
    %2706 = vmatprep.subr.mxu0 %v2480
    %2707 = vmatpush2.msra.mxu0 %v2479
    %2708 = vmatprep.mubr.f32.mxu0 %v2378
    %2709 = vmatmul.mubr.f32.gmra.mxu0 %v2356
    %v2710 = vpop.f32.mrf.mxu0
    %v2711 = vadd.f32 0.0, %v2710
    %v2712 = vpop.f32.mrf.mxu0
    %v2713 = vadd.f32 0.0, %v2712
    %2714 = vdwg.mxu0
    %2715 = vmatprep.subr.mxu0 %v2476
    %2716 = vmatpush1.msra.mxu0 %v2475
    %2717 = vmatprep.subr.mxu0 %v2470
    %2718 = vmatpush1.msra.mxu0 %v2469
    %2719 = vmatprep.subr.mxu0 %v2464
    %2720 = vmatpush1.msra.mxu0 %v2463
    %2721 = vmatprep.subr.mxu0 %v2458
    %2722 = vmatpush1.msra.mxu0 %v2457
    %2723 = vmatprep.subr.mxu0 %v2452
    %2724 = vmatpush1.msra.mxu0 %v2451
    %2725 = vmatprep.subr.mxu0 %v2446
    %2726 = vmatpush1.msra.mxu0 %v2445
    %2727 = vmatprep.subr.mxu0 %v2440
    %2728 = vmatpush1.msra.mxu0 %v2439
    %2729 = vmatprep.subr.mxu0 %v2434
    %2730 = vmatpush1.msra.mxu0 %v2433
    %2731 = vmatprep.subr.mxu0 %v2428
    %2732 = vmatpush1.msra.mxu0 %v2427
    %2733 = vmatprep.subr.mxu0 %v2422
    %2734 = vmatpush1.msra.mxu0 %v2421
    %2735 = vmatprep.subr.mxu0 %v2416
    %2736 = vmatpush1.msra.mxu0 %v2415
    %2737 = vmatprep.subr.mxu0 %v2410
    %2738 = vmatpush1.msra.mxu0 %v2409
    %2739 = vmatprep.subr.mxu0 %v2404
    %2740 = vmatpush1.msra.mxu0 %v2403
    %2741 = vmatprep.subr.mxu0 %v2398
    %2742 = vmatpush1.msra.mxu0 %v2397
    %2743 = vmatprep.subr.mxu0 %v2392
    %2744 = vmatpush1.msra.mxu0 %v2391
    %2745 = vmatprep.subr.mxu0 %v2386
    %2746 = vmatpush1.msra.mxu0 %v2385
    %2747 = vmatprep.subr.mxu0 %v2572
    %2748 = vmatpush2.msra.mxu0 %v2571
    %2749 = vmatprep.subr.mxu0 %v2566
    %2750 = vmatpush2.msra.mxu0 %v2565
    %2751 = vmatprep.subr.mxu0 %v2560
    %2752 = vmatpush2.msra.mxu0 %v2559
    %2753 = vmatprep.subr.mxu0 %v2554
    %2754 = vmatpush2.msra.mxu0 %v2553
    %2755 = vmatprep.subr.mxu0 %v2548
    %2756 = vmatpush2.msra.mxu0 %v2547
    %2757 = vmatprep.subr.mxu0 %v2542
    %2758 = vmatpush2.msra.mxu0 %v2541
    %2759 = vmatprep.subr.mxu0 %v2536
    %2760 = vmatpush2.msra.mxu0 %v2535
    %2761 = vmatprep.subr.mxu0 %v2530
    %2762 = vmatpush2.msra.mxu0 %v2529
    %2763 = vmatprep.subr.mxu0 %v2524
    %2764 = vmatpush2.msra.mxu0 %v2523
    %2765 = vmatprep.subr.mxu0 %v2518
    %2766 = vmatpush2.msra.mxu0 %v2517
    %2767 = vmatprep.subr.mxu0 %v2512
    %2768 = vmatpush2.msra.mxu0 %v2511
    %2769 = vmatprep.subr.mxu0 %v2506
    %2770 = vmatpush2.msra.mxu0 %v2505
    %2771 = vmatprep.subr.mxu0 %v2500
    %2772 = vmatpush2.msra.mxu0 %v2499
    %2773 = vmatprep.subr.mxu0 %v2494
    %2774 = vmatpush2.msra.mxu0 %v2493
    %2775 = vmatprep.subr.mxu0 %v2488
    %2776 = vmatpush2.msra.mxu0 %v2487
    %2777 = vmatprep.subr.mxu0 %v2482
    %2778 = vmatpush2.msra.mxu0 %v2481
    %2779 = vmatprep.mubr.f32.mxu0 %v2378
    %2780 = vmatmul.mubr.f32.gmra.mxu0 %v2356
    %v2781 = vpop.f32.mrf.mxu0
    %v2782 = vadd.f32 0.0, %v2781
    %v2783 = vpop.f32.mrf.mxu0
    %v2784 = vadd.f32 0.0, %v2783
    %2785 = vdwg.mxu0
    %v2786 = vld [vmem:[%s1399] sm:$0xff]
    %v2787 = vld [vmem:[%s1399 + $0x8] sm:$0xff]
    %v2788 = vld [vmem:[%s1399 + $0x10] sm:$0xff]
    %v2789 = vld [vmem:[%s1393 + $0x18] sm:$0xff]
    %v2790 = vld [vmem:[%s1393 + $0x20] sm:$0xff]
    %v2791 = vld [vmem:[%s1393 + $0x28] sm:$0xff]
    %v2792 = vadd.f32 %v2786, %v2640
    %v2793 = vxor.u32 %v2792, 2147483648
    %v2794 = vmul.f32 %v2793, 1.442695
    %v2795 = vpow.pop %v2794
    %v2796 = vadd.f32 %v2795, 1.0
    %v2797 = vrcp.pop %v2796
    %v2798 = vmul.f32 1.0, %v2797
    %v2799 = vadd.f32 %v2787, %v2642
    %v2800 = vxor.u32 %v2799, 2147483648
    %v2801 = vmul.f32 %v2800, 1.442695
    %v2802 = vpow.pop %v2801
    %v2803 = vadd.f32 %v2802, 1.0
    %v2804 = vrcp.pop %v2803
    %v2805 = vmul.f32 1.0, %v2804
    %v2806 = vadd.f32 %v2711, %v39
    %v2807 = vmul.f32 %v2798, %v2806
    %v2808 = vadd.f32 %v2788, %v2807
    %v2809 = vtanh.pop %v2808
    %v2810 = vsub.f32 1.0, %v2805
    %v2811 = vmul.f32 %v2810, %v2809
    %v2812 = vmul.f32 %v2805, %v2356
    %v2813 = vadd.f32 %v2811, %v2812
    %v2814 = vadd.f32 %v2789, %v2713
    %v2815 = vxor.u32 %v2814, 2147483648
    %v2816 = vmul.f32 %v2815, 1.442695
    %v2817 = vpow.pop %v2816
    %v2818 = vadd.f32 %v2817, 1.0
    %v2819 = vrcp.pop %v2818
    %v2820 = vmul.f32 1.0, %v2819
    %v2821 = vadd.f32 %v2790, %v2782
    %v2822 = vxor.u32 %v2821, 2147483648
    %v2823 = vmul.f32 %v2822, 1.442695
    %v2824 = vpow.pop %v2823
    %v2825 = vadd.f32 %v2824, 1.0
    %v2826 = vrcp.pop %v2825
    %v2827 = vmul.f32 1.0, %v2826
    %v2828 = vadd.f32 %v2784, %v46
    %v2829 = vmul.f32 %v2820, %v2828
    %v2830 = vadd.f32 %v2791, %v2829
    %v2831 = vtanh.pop %v2830
    %v2832 = vsub.f32 1.0, %v2827
    %v2833 = vmul.f32 %v2832, %v2831
    %v2834 = vmul.f32 %v2827, %v2378
    %v2835 = vadd.f32 %v2833, %v2834
    %2836 = vst [vmem:[%s1453] sm:$0xff] %v2813
    %2837 = vst [vmem:[%s1449 + $0x8] sm:$0xff] %v2835
    %v2838 = vld [vmem:[%s1] sm:$0xff]
    %v2839 = vld [vmem:[%s1 + $0x8] sm:$0xff]
    %v2840 = vld [vmem:[%s1 + $0x10] sm:$0xff]
    %v2841 = vld [vmem:[%s1 + $0x18] sm:$0xff]
    %v2842 = vld [vmem:[%s1 + $0x20] sm:$0xff]
    %v2843 = vld [vmem:[%s1 + $0x28] sm:$0xff]
    %v2844 = vld [vmem:[%s1 + $0x30] sm:$0xff]
    %v2845 = vld [vmem:[%s1 + $0x38] sm:$0xff]
    %v2846 = vld [vmem:[%s1 + $0x40] sm:$0xff]
    %v2847 = vld [vmem:[%s1 + $0x48] sm:$0xff]
    %v2848 = vld [vmem:[%s1 + $0x50] sm:$0xff]
    %v2849 = vld [vmem:[%s1 + $0x58] sm:$0xff]
    %v2850 = vld [vmem:[%s1 + $0x60] sm:$0xff]
    %v2851 = vld [vmem:[%s1 + $0x68] sm:$0xff]
    %v2852 = vld [vmem:[%s1 + $0x70] sm:$0xff]
    %v2853 = vld [vmem:[%s1 + $0x78] sm:$0xff]
    %v2854 = vld [vmem:[%s1 + $0x80] sm:$0xff]
    %v2855 = vld [vmem:[%s1 + $0x88] sm:$0xff]
    %v2856 = vld [vmem:[%s1 + $0x90] sm:$0xff]
    %v2857 = vld [vmem:[%s1 + $0x98] sm:$0xff]
    %v2858 = vld [vmem:[%s1 + $0xa0] sm:$0xff]
    %v2859 = vld [vmem:[%s1 + $0xa8] sm:$0xff]
    %v2860 = vld [vmem:[%s1 + $0xb0] sm:$0xff]
    %v2861 = vld [vmem:[%s1 + $0xb8] sm:$0xff]
    %v2862 = vld [vmem:[%s1 + $0xc0] sm:$0xff]
    %v2863 = vld [vmem:[%s1 + $0xc8] sm:$0xff]
    %v2864 = vld [vmem:[%s1 + $0xd0] sm:$0xff]
    %v2865 = vld [vmem:[%s1 + $0xd8] sm:$0xff]
    %v2866 = vld [vmem:[%s1 + $0xe0] sm:$0xff]
    %v2867 = vld [vmem:[%s1 + $0xe8] sm:$0xff]
    %v2868 = vld [vmem:[%s1 + $0xf0] sm:$0xff]
    %v2869 = vld [vmem:[%s1 + $0xf8] sm:$0xff]
    %v2870 = vld [vmem:[%s1 + $0x100] sm:$0xff]
    %v2871 = vld [vmem:[%s1 + $0x108] sm:$0xff]
    %v2872 = vld [vmem:[%s1 + $0x110] sm:$0xff]
    %v2873 = vld [vmem:[%s1 + $0x118] sm:$0xff]
    %v2874 = vld [vmem:[%s1 + $0x120] sm:$0xff]
    %v2875 = vld [vmem:[%s1 + $0x128] sm:$0xff]
    %v2876 = vld [vmem:[%s1 + $0x130] sm:$0xff]
    %v2877 = vld [vmem:[%s1 + $0x138] sm:$0xff]
    %v2878 = vld [vmem:[%s1 + $0x140] sm:$0xff]
    %v2879 = vld [vmem:[%s1 + $0x148] sm:$0xff]
    %v2880 = vld [vmem:[%s1 + $0x150] sm:$0xff]
    %v2881 = vld [vmem:[%s1 + $0x158] sm:$0xff]
    %v2882 = vld [vmem:[%s1 + $0x160] sm:$0xff]
    %v2883 = vld [vmem:[%s1 + $0x168] sm:$0xff]
    %v2884 = vld [vmem:[%s1 + $0x170] sm:$0xff]
    %v2885 = vld [vmem:[%s1 + $0x178] sm:$0xff]
    %v2886 = vld [vmem:[%s1 + $0x180] sm:$0xff]
    %v2887 = vld [vmem:[%s1 + $0x188] sm:$0xff]
    %v2888 = vld [vmem:[%s1 + $0x190] sm:$0xff]
    %v2889 = vld [vmem:[%s1 + $0x198] sm:$0xff]
    %v2890 = vld [vmem:[%s1 + $0x1a0] sm:$0xff]
    %v2891 = vld [vmem:[%s1 + $0x1a8] sm:$0xff]
    %v2892 = vld [vmem:[%s1 + $0x1b0] sm:$0xff]
    %v2893 = vld [vmem:[%s1 + $0x1b8] sm:$0xff]
    %v2894 = vld [vmem:[%s1 + $0x1c0] sm:$0xff]
    %v2895 = vld [vmem:[%s1 + $0x1c8] sm:$0xff]
    %v2896 = vld [vmem:[%s1 + $0x1d0] sm:$0xff]
    %v2897 = vld [vmem:[%s1 + $0x1d8] sm:$0xff]
    %v2898 = vld [vmem:[%s1 + $0x1e0] sm:$0xff]
    %v2899 = vld [vmem:[%s1 + $0x1e8] sm:$0xff]
    %v2900 = vld [vmem:[%s1 + $0x1f0] sm:$0xff]
    %v2901 = vld [vmem:[%s1 + $0x1f8] sm:$0xff]
    %v2902 = vld [vmem:[%s1 + $0x200] sm:$0xff]
    %v2903 = vld [vmem:[%s1 + $0x208] sm:$0xff]
    %v2904 = vld [vmem:[%s1 + $0x210] sm:$0xff]
    %v2905 = vld [vmem:[%s1 + $0x218] sm:$0xff]
    %v2906 = vld [vmem:[%s1 + $0x220] sm:$0xff]
    %v2907 = vld [vmem:[%s1 + $0x228] sm:$0xff]
    %v2908 = vld [vmem:[%s1 + $0x230] sm:$0xff]
    %v2909 = vld [vmem:[%s1 + $0x238] sm:$0xff]
    %v2910 = vld [vmem:[%s1 + $0x240] sm:$0xff]
    %v2911 = vld [vmem:[%s1 + $0x248] sm:$0xff]
    %v2912 = vld [vmem:[%s1 + $0x250] sm:$0xff]
    %v2913 = vld [vmem:[%s1 + $0x258] sm:$0xff]
    %v2914 = vld [vmem:[%s1 + $0x260] sm:$0xff]
    %v2915 = vld [vmem:[%s1 + $0x268] sm:$0xff]
    %v2916 = vld [vmem:[%s1 + $0x270] sm:$0xff]
    %v2917 = vld [vmem:[%s1 + $0x278] sm:$0xff]
    %v2918 = vld [vmem:[%s1 + $0x280] sm:$0xff]
    %v2919 = vld [vmem:[%s1 + $0x288] sm:$0xff]
    %v2920 = vld [vmem:[%s1 + $0x290] sm:$0xff]
    %v2921 = vld [vmem:[%s1 + $0x298] sm:$0xff]
    %v2922 = vld [vmem:[%s1 + $0x2a0] sm:$0xff]
    %v2923 = vld [vmem:[%s1 + $0x2a8] sm:$0xff]
    %v2924 = vld [vmem:[%s1 + $0x2b0] sm:$0xff]
    %v2925 = vld [vmem:[%s1 + $0x2b8] sm:$0xff]
    %v2926 = vld [vmem:[%s1 + $0x2c0] sm:$0xff]
    %v2927 = vld [vmem:[%s1 + $0x2c8] sm:$0xff]
    %v2928 = vld [vmem:[%s1 + $0x2d0] sm:$0xff]
    %v2929 = vld [vmem:[%s1 + $0x2d8] sm:$0xff]
    %v2930 = vld [vmem:[%s1 + $0x2e0] sm:$0xff]
    %v2931 = vld [vmem:[%s1 + $0x2e8] sm:$0xff]
    %v2932 = vld [vmem:[%s1 + $0x2f0] sm:$0xff]
    %v2933 = vld [vmem:[%s1 + $0x2f8] sm:$0xff]
    %v2934 = vld [vmem:[%s1 + $0x300] sm:$0xff]
    %v2935 = vld [vmem:[%s1 + $0x308] sm:$0xff]
    %v2936 = vld [vmem:[%s1 + $0x310] sm:$0xff]
    %v2937 = vld [vmem:[%s1 + $0x318] sm:$0xff]
    %v2938 = vld [vmem:[%s1 + $0x320] sm:$0xff]
    %v2939 = vld [vmem:[%s1 + $0x328] sm:$0xff]
    %v2940 = vld [vmem:[%s1 + $0x330] sm:$0xff]
    %v2941 = vld [vmem:[%s1 + $0x338] sm:$0xff]
    %v2942 = vld [vmem:[%s1 + $0x340] sm:$0xff]
    %v2943 = vld [vmem:[%s1 + $0x348] sm:$0xff]
    %v2944 = vld [vmem:[%s1 + $0x350] sm:$0xff]
    %v2945 = vld [vmem:[%s1 + $0x358] sm:$0xff]
    %v2946 = vld [vmem:[%s1 + $0x360] sm:$0xff]
    %v2947 = vld [vmem:[%s1 + $0x368] sm:$0xff]
    %v2948 = vld [vmem:[%s1 + $0x370] sm:$0xff]
    %v2949 = vld [vmem:[%s1 + $0x378] sm:$0xff]
    %v2950 = vld [vmem:[%s1 + $0x380] sm:$0xff]
    %v2951 = vld [vmem:[%s1 + $0x388] sm:$0xff]
    %v2952 = vld [vmem:[%s1 + $0x390] sm:$0xff]
    %v2953 = vld [vmem:[%s1 + $0x398] sm:$0xff]
    %v2954 = vld [vmem:[%s1 + $0x3a0] sm:$0xff]
    %v2955 = vld [vmem:[%s1 + $0x3a8] sm:$0xff]
    %v2956 = vld [vmem:[%s1 + $0x3b0] sm:$0xff]
    %v2957 = vld [vmem:[%s1 + $0x3b8] sm:$0xff]
    %v2958 = vld [vmem:[%s1 + $0x3c0] sm:$0xff]
    %v2959 = vld [vmem:[%s1 + $0x3c8] sm:$0xff]
    %v2960 = vld [vmem:[%s1 + $0x3d0] sm:$0xff]
    %v2961 = vld [vmem:[%s1 + $0x3d8] sm:$0xff]
    %v2962 = vld [vmem:[%s1 + $0x3e0] sm:$0xff]
    %v2963 = vld [vmem:[%s1 + $0x3e8] sm:$0xff]
    %v2964 = vld [vmem:[%s1 + $0x3f0] sm:$0xff]
    %v2965 = vld [vmem:[%s1 + $0x3f8] sm:$0xff]
    %v2966 = vld [vmem:[%s1 + $0x400] sm:$0xff]
    %v2967 = vld [vmem:[%s1 + $0x408] sm:$0xff]
    %v2968 = vld [vmem:[%s1 + $0x410] sm:$0xff]
    %v2969 = vld [vmem:[%s1 + $0x418] sm:$0xff]
    %v2970 = vld [vmem:[%s1 + $0x420] sm:$0xff]
    %v2971 = vld [vmem:[%s1 + $0x428] sm:$0xff]
    %v2972 = vld [vmem:[%s1 + $0x430] sm:$0xff]
    %v2973 = vld [vmem:[%s1 + $0x438] sm:$0xff]
    %v2974 = vld [vmem:[%s1 + $0x440] sm:$0xff]
    %v2975 = vld [vmem:[%s1 + $0x448] sm:$0xff]
    %v2976 = vld [vmem:[%s1 + $0x450] sm:$0xff]
    %v2977 = vld [vmem:[%s1 + $0x458] sm:$0xff]
    %v2978 = vld [vmem:[%s1 + $0x460] sm:$0xff]
    %v2979 = vld [vmem:[%s1 + $0x468] sm:$0xff]
    %v2980 = vld [vmem:[%s1 + $0x470] sm:$0xff]
    %v2981 = vld [vmem:[%s1 + $0x478] sm:$0xff]
    %v2982 = vld [vmem:[%s1 + $0x480] sm:$0xff]
    %v2983 = vld [vmem:[%s1 + $0x488] sm:$0xff]
    %v2984 = vld [vmem:[%s1 + $0x490] sm:$0xff]
    %v2985 = vld [vmem:[%s1 + $0x498] sm:$0xff]
    %v2986 = vld [vmem:[%s1 + $0x4a0] sm:$0xff]
    %v2987 = vld [vmem:[%s1 + $0x4a8] sm:$0xff]
    %v2988 = vld [vmem:[%s1 + $0x4b0] sm:$0xff]
    %v2989 = vld [vmem:[%s1 + $0x4b8] sm:$0xff]
    %v2990 = vld [vmem:[%s1 + $0x4c0] sm:$0xff]
    %v2991 = vld [vmem:[%s1 + $0x4c8] sm:$0xff]
    %v2992 = vld [vmem:[%s1 + $0x4d0] sm:$0xff]
    %v2993 = vld [vmem:[%s1 + $0x4d8] sm:$0xff]
    %v2994 = vld [vmem:[%s1 + $0x4e0] sm:$0xff]
    %v2995 = vld [vmem:[%s1 + $0x4e8] sm:$0xff]
    %v2996 = vld [vmem:[%s1 + $0x4f0] sm:$0xff]
    %v2997 = vld [vmem:[%s1 + $0x4f8] sm:$0xff]
    %v2998 = vld [vmem:[%s1 + $0x500] sm:$0xff]
    %v2999 = vld [vmem:[%s1 + $0x508] sm:$0xff]
    %v3000 = vld [vmem:[%s1 + $0x510] sm:$0xff]
    %v3001 = vld [vmem:[%s1 + $0x518] sm:$0xff]
    %v3002 = vld [vmem:[%s1 + $0x520] sm:$0xff]
    %v3003 = vld [vmem:[%s1 + $0x528] sm:$0xff]
    %v3004 = vld [vmem:[%s1 + $0x530] sm:$0xff]
    %v3005 = vld [vmem:[%s1 + $0x538] sm:$0xff]
    %v3006 = vld [vmem:[%s1 + $0x540] sm:$0xff]
    %v3007 = vld [vmem:[%s1 + $0x548] sm:$0xff]
    %v3008 = vld [vmem:[%s1 + $0x550] sm:$0xff]
    %v3009 = vld [vmem:[%s1 + $0x558] sm:$0xff]
    %v3010 = vld [vmem:[%s1 + $0x560] sm:$0xff]
    %v3011 = vld [vmem:[%s1 + $0x568] sm:$0xff]
    %v3012 = vld [vmem:[%s1 + $0x570] sm:$0xff]
    %v3013 = vld [vmem:[%s1 + $0x578] sm:$0xff]
    %v3014 = vld [vmem:[%s1 + $0x580] sm:$0xff]
    %v3015 = vld [vmem:[%s1 + $0x588] sm:$0xff]
    %v3016 = vld [vmem:[%s1 + $0x590] sm:$0xff]
    %v3017 = vld [vmem:[%s1 + $0x598] sm:$0xff]
    %v3018 = vld [vmem:[%s1 + $0x5a0] sm:$0xff]
    %v3019 = vld [vmem:[%s1 + $0x5a8] sm:$0xff]
    %v3020 = vld [vmem:[%s1 + $0x5b0] sm:$0xff]
    %v3021 = vld [vmem:[%s1 + $0x5b8] sm:$0xff]
    %v3022 = vld [vmem:[%s1 + $0x5c0] sm:$0xff]
    %v3023 = vld [vmem:[%s1 + $0x5c8] sm:$0xff]
    %v3024 = vld [vmem:[%s1 + $0x5d0] sm:$0xff]
    %v3025 = vld [vmem:[%s1 + $0x5d8] sm:$0xff]
    %v3026 = vld [vmem:[%s1 + $0x5e0] sm:$0xff]
    %v3027 = vld [vmem:[%s1 + $0x5e8] sm:$0xff]
    %v3028 = vld [vmem:[%s1 + $0x5f0] sm:$0xff]
    %v3029 = vld [vmem:[%s1 + $0x5f8] sm:$0xff]
    %3030 = vmatprep.subr.mxu0 %v2929
    %3031 = vmatpush1.msra.mxu0 %v2928
    %3032 = vmatprep.subr.mxu0 %v2923
    %3033 = vmatpush1.msra.mxu0 %v2922
    %3034 = vmatprep.subr.mxu0 %v2917
    %3035 = vmatpush1.msra.mxu0 %v2916
    %3036 = vmatprep.subr.mxu0 %v2911
    %3037 = vmatpush1.msra.mxu0 %v2910
    %3038 = vmatprep.subr.mxu0 %v2905
    %3039 = vmatpush1.msra.mxu0 %v2904
    %3040 = vmatprep.subr.mxu0 %v2899
    %3041 = vmatpush1.msra.mxu0 %v2898
    %3042 = vmatprep.subr.mxu0 %v2893
    %3043 = vmatpush1.msra.mxu0 %v2892
    %3044 = vmatprep.subr.mxu0 %v2887
    %3045 = vmatpush1.msra.mxu0 %v2886
    %3046 = vmatprep.subr.mxu0 %v2881
    %3047 = vmatpush1.msra.mxu0 %v2880
    %3048 = vmatprep.subr.mxu0 %v2875
    %3049 = vmatpush1.msra.mxu0 %v2874
    %3050 = vmatprep.subr.mxu0 %v2869
    %3051 = vmatpush1.msra.mxu0 %v2868
    %3052 = vmatprep.subr.mxu0 %v2863
    %3053 = vmatpush1.msra.mxu0 %v2862
    %3054 = vmatprep.subr.mxu0 %v2857
    %3055 = vmatpush1.msra.mxu0 %v2856
    %3056 = vmatprep.subr.mxu0 %v2851
    %3057 = vmatpush1.msra.mxu0 %v2850
    %3058 = vmatprep.subr.mxu0 %v2845
    %3059 = vmatpush1.msra.mxu0 %v2844
    %3060 = vmatprep.subr.mxu0 %v2839
    %3061 = vmatpush1.msra.mxu0 %v2838
    %3062 = vmatprep.subr.mxu0 %v3025
    %3063 = vmatpush2.msra.mxu0 %v3024
    %3064 = vmatprep.subr.mxu0 %v3019
    %3065 = vmatpush2.msra.mxu0 %v3018
    %3066 = vmatprep.subr.mxu0 %v3013
    %3067 = vmatpush2.msra.mxu0 %v3012
    %3068 = vmatprep.subr.mxu0 %v3007
    %3069 = vmatpush2.msra.mxu0 %v3006
    %3070 = vmatprep.subr.mxu0 %v3001
    %3071 = vmatpush2.msra.mxu0 %v3000
    %3072 = vmatprep.subr.mxu0 %v2995
    %3073 = vmatpush2.msra.mxu0 %v2994
    %3074 = vmatprep.subr.mxu0 %v2989
    %3075 = vmatpush2.msra.mxu0 %v2988
    %3076 = vmatprep.subr.mxu0 %v2983
    %3077 = vmatpush2.msra.mxu0 %v2982
    %3078 = vmatprep.subr.mxu0 %v2977
    %3079 = vmatpush2.msra.mxu0 %v2976
    %3080 = vmatprep.subr.mxu0 %v2971
    %3081 = vmatpush2.msra.mxu0 %v2970
    %3082 = vmatprep.subr.mxu0 %v2965
    %3083 = vmatpush2.msra.mxu0 %v2964
    %3084 = vmatprep.subr.mxu0 %v2959
    %3085 = vmatpush2.msra.mxu0 %v2958
    %3086 = vmatprep.subr.mxu0 %v2953
    %3087 = vmatpush2.msra.mxu0 %v2952
    %3088 = vmatprep.subr.mxu0 %v2947
    %3089 = vmatpush2.msra.mxu0 %v2946
    %3090 = vmatprep.subr.mxu0 %v2941
    %3091 = vmatpush2.msra.mxu0 %v2940
    %3092 = vmatprep.subr.mxu0 %v2935
    %3093 = vmatpush2.msra.mxu0 %v2934
    %3094 = vmatprep.mubr.f32.mxu0 %v2835
    %3095 = vmatmul.mubr.f32.gmra.mxu0 %v2813
    %v3096 = vpop.f32.mrf.mxu0
    %v3097 = vadd.f32 0.0, %v3096
    %v3098 = vpop.f32.mrf.mxu0
    %v3099 = vadd.f32 0.0, %v3098
    %3100 = vdwg.mxu0
    %3101 = vmatprep.subr.mxu0 %v2931
    %3102 = vmatpush1.msra.mxu0 %v2930
    %3103 = vmatprep.subr.mxu0 %v2925
    %3104 = vmatpush1.msra.mxu0 %v2924
    %3105 = vmatprep.subr.mxu0 %v2919
    %3106 = vmatpush1.msra.mxu0 %v2918
    %3107 = vmatprep.subr.mxu0 %v2913
    %3108 = vmatpush1.msra.mxu0 %v2912
    %3109 = vmatprep.subr.mxu0 %v2907
    %3110 = vmatpush1.msra.mxu0 %v2906
    %3111 = vmatprep.subr.mxu0 %v2901
    %3112 = vmatpush1.msra.mxu0 %v2900
    %3113 = vmatprep.subr.mxu0 %v2895
    %3114 = vmatpush1.msra.mxu0 %v2894
    %3115 = vmatprep.subr.mxu0 %v2889
    %3116 = vmatpush1.msra.mxu0 %v2888
    %3117 = vmatprep.subr.mxu0 %v2883
    %3118 = vmatpush1.msra.mxu0 %v2882
    %3119 = vmatprep.subr.mxu0 %v2877
    %3120 = vmatpush1.msra.mxu0 %v2876
    %3121 = vmatprep.subr.mxu0 %v2871
    %3122 = vmatpush1.msra.mxu0 %v2870
    %3123 = vmatprep.subr.mxu0 %v2865
    %3124 = vmatpush1.msra.mxu0 %v2864
    %3125 = vmatprep.subr.mxu0 %v2859
    %3126 = vmatpush1.msra.mxu0 %v2858
    %3127 = vmatprep.subr.mxu0 %v2853
    %3128 = vmatpush1.msra.mxu0 %v2852
    %3129 = vmatprep.subr.mxu0 %v2847
    %3130 = vmatpush1.msra.mxu0 %v2846
    %3131 = vmatprep.subr.mxu0 %v2841
    %3132 = vmatpush1.msra.mxu0 %v2840
    %3133 = vmatprep.subr.mxu0 %v3027
    %3134 = vmatpush2.msra.mxu0 %v3026
    %3135 = vmatprep.subr.mxu0 %v3021
    %3136 = vmatpush2.msra.mxu0 %v3020
    %3137 = vmatprep.subr.mxu0 %v3015
    %3138 = vmatpush2.msra.mxu0 %v3014
    %3139 = vmatprep.subr.mxu0 %v3009
    %3140 = vmatpush2.msra.mxu0 %v3008
    %3141 = vmatprep.subr.mxu0 %v3003
    %3142 = vmatpush2.msra.mxu0 %v3002
    %3143 = vmatprep.subr.mxu0 %v2997
    %3144 = vmatpush2.msra.mxu0 %v2996
    %3145 = vmatprep.subr.mxu0 %v2991
    %3146 = vmatpush2.msra.mxu0 %v2990
    %3147 = vmatprep.subr.mxu0 %v2985
    %3148 = vmatpush2.msra.mxu0 %v2984
    %3149 = vmatprep.subr.mxu0 %v2979
    %3150 = vmatpush2.msra.mxu0 %v2978
    %3151 = vmatprep.subr.mxu0 %v2973
    %3152 = vmatpush2.msra.mxu0 %v2972
    %3153 = vmatprep.subr.mxu0 %v2967
    %3154 = vmatpush2.msra.mxu0 %v2966
    %3155 = vmatprep.subr.mxu0 %v2961
    %3156 = vmatpush2.msra.mxu0 %v2960
    %3157 = vmatprep.subr.mxu0 %v2955
    %3158 = vmatpush2.msra.mxu0 %v2954
    %3159 = vmatprep.subr.mxu0 %v2949
    %3160 = vmatpush2.msra.mxu0 %v2948
    %3161 = vmatprep.subr.mxu0 %v2943
    %3162 = vmatpush2.msra.mxu0 %v2942
    %3163 = vmatprep.subr.mxu0 %v2937
    %3164 = vmatpush2.msra.mxu0 %v2936
    %3165 = vmatprep.mubr.f32.mxu0 %v2835
    %3166 = vmatmul.mubr.f32.gmra.mxu0 %v2813
    %v3167 = vpop.f32.mrf.mxu0
    %v3168 = vadd.f32 0.0, %v3167
    %v3169 = vpop.f32.mrf.mxu0
    %v3170 = vadd.f32 0.0, %v3169
    %3171 = vdwg.mxu0
    %3172 = vmatprep.subr.mxu0 %v2933
    %3173 = vmatpush1.msra.mxu0 %v2932
    %3174 = vmatprep.subr.mxu0 %v2927
    %3175 = vmatpush1.msra.mxu0 %v2926
    %3176 = vmatprep.subr.mxu0 %v2921
    %3177 = vmatpush1.msra.mxu0 %v2920
    %3178 = vmatprep.subr.mxu0 %v2915
    %3179 = vmatpush1.msra.mxu0 %v2914
    %3180 = vmatprep.subr.mxu0 %v2909
    %3181 = vmatpush1.msra.mxu0 %v2908
    %3182 = vmatprep.subr.mxu0 %v2903
    %3183 = vmatpush1.msra.mxu0 %v2902
    %3184 = vmatprep.subr.mxu0 %v2897
    %3185 = vmatpush1.msra.mxu0 %v2896
    %3186 = vmatprep.subr.mxu0 %v2891
    %3187 = vmatpush1.msra.mxu0 %v2890
    %3188 = vmatprep.subr.mxu0 %v2885
    %3189 = vmatpush1.msra.mxu0 %v2884
    %3190 = vmatprep.subr.mxu0 %v2879
    %3191 = vmatpush1.msra.mxu0 %v2878
    %3192 = vmatprep.subr.mxu0 %v2873
    %3193 = vmatpush1.msra.mxu0 %v2872
    %3194 = vmatprep.subr.mxu0 %v2867
    %3195 = vmatpush1.msra.mxu0 %v2866
    %3196 = vmatprep.subr.mxu0 %v2861
    %3197 = vmatpush1.msra.mxu0 %v2860
    %3198 = vmatprep.subr.mxu0 %v2855
    %3199 = vmatpush1.msra.mxu0 %v2854
    %3200 = vmatprep.subr.mxu0 %v2849
    %3201 = vmatpush1.msra.mxu0 %v2848
    %3202 = vmatprep.subr.mxu0 %v2843
    %3203 = vmatpush1.msra.mxu0 %v2842
    %3204 = vmatprep.subr.mxu0 %v3029
    %3205 = vmatpush2.msra.mxu0 %v3028
    %3206 = vmatprep.subr.mxu0 %v3023
    %3207 = vmatpush2.msra.mxu0 %v3022
    %3208 = vmatprep.subr.mxu0 %v3017
    %3209 = vmatpush2.msra.mxu0 %v3016
    %3210 = vmatprep.subr.mxu0 %v3011
    %3211 = vmatpush2.msra.mxu0 %v3010
    %3212 = vmatprep.subr.mxu0 %v3005
    %3213 = vmatpush2.msra.mxu0 %v3004
    %3214 = vmatprep.subr.mxu0 %v2999
    %3215 = vmatpush2.msra.mxu0 %v2998
    %3216 = vmatprep.subr.mxu0 %v2993
    %3217 = vmatpush2.msra.mxu0 %v2992
    %3218 = vmatprep.subr.mxu0 %v2987
    %3219 = vmatpush2.msra.mxu0 %v2986
    %3220 = vmatprep.subr.mxu0 %v2981
    %3221 = vmatpush2.msra.mxu0 %v2980
    %3222 = vmatprep.subr.mxu0 %v2975
    %3223 = vmatpush2.msra.mxu0 %v2974
    %3224 = vmatprep.subr.mxu0 %v2969
    %3225 = vmatpush2.msra.mxu0 %v2968
    %3226 = vmatprep.subr.mxu0 %v2963
    %3227 = vmatpush2.msra.mxu0 %v2962
    %3228 = vmatprep.subr.mxu0 %v2957
    %3229 = vmatpush2.msra.mxu0 %v2956
    %3230 = vmatprep.subr.mxu0 %v2951
    %3231 = vmatpush2.msra.mxu0 %v2950
    %3232 = vmatprep.subr.mxu0 %v2945
    %3233 = vmatpush2.msra.mxu0 %v2944
    %3234 = vmatprep.subr.mxu0 %v2939
    %3235 = vmatpush2.msra.mxu0 %v2938
    %3236 = vmatprep.mubr.f32.mxu0 %v2835
    %3237 = vmatmul.mubr.f32.gmra.mxu0 %v2813
    %v3238 = vpop.f32.mrf.mxu0
    %v3239 = vadd.f32 0.0, %v3238
    %v3240 = vpop.f32.mrf.mxu0
    %v3241 = vadd.f32 0.0, %v3240
    %3242 = vdwg.mxu0
    %v3243 = vld [vmem:[%s930] sm:$0xff]
    %v3244 = vld [vmem:[%s930 + $0x8] sm:$0xff]
    %v3245 = vld [vmem:[%s930 + $0x10] sm:$0xff]
    %v3246 = vld [vmem:[%s924 + $0x18] sm:$0xff]
    %v3247 = vld [vmem:[%s924 + $0x20] sm:$0xff]
    %v3248 = vld [vmem:[%s924 + $0x28] sm:$0xff]
    %v3249 = vadd.f32 %v3243, %v3097
    %v3250 = vxor.u32 %v3249, 2147483648
    %v3251 = vmul.f32 %v3250, 1.442695
    %v3252 = vpow.pop %v3251
    %v3253 = vadd.f32 %v3252, 1.0
    %v3254 = vrcp.pop %v3253
    %v3255 = vmul.f32 1.0, %v3254
    %v3256 = vadd.f32 %v3244, %v3099
    %v3257 = vxor.u32 %v3256, 2147483648
    %v3258 = vmul.f32 %v3257, 1.442695
    %v3259 = vpow.pop %v3258
    %v3260 = vadd.f32 %v3259, 1.0
    %v3261 = vrcp.pop %v3260
    %v3262 = vmul.f32 1.0, %v3261
    %v3263 = vadd.f32 %v3168, %v39
    %v3264 = vmul.f32 %v3255, %v3263
    %v3265 = vadd.f32 %v3245, %v3264
    %v3266 = vtanh.pop %v3265
    %v3267 = vsub.f32 1.0, %v3262
    %v3268 = vmul.f32 %v3267, %v3266
    %v3269 = vmul.f32 %v3262, %v2813
    %v3270 = vadd.f32 %v3268, %v3269
    %v3271 = vadd.f32 %v3246, %v3170
    %v3272 = vxor.u32 %v3271, 2147483648
    %v3273 = vmul.f32 %v3272, 1.442695
    %v3274 = vpow.pop %v3273
    %v3275 = vadd.f32 %v3274, 1.0
    %v3276 = vrcp.pop %v3275
    %v3277 = vmul.f32 1.0, %v3276
    %v3278 = vadd.f32 %v3247, %v3239
    %v3279 = vxor.u32 %v3278, 2147483648
    %v3280 = vmul.f32 %v3279, 1.442695
    %v3281 = vpow.pop %v3280
    %v3282 = vadd.f32 %v3281, 1.0
    %v3283 = vrcp.pop %v3282
    %v3284 = vmul.f32 1.0, %v3283
    %v3285 = vadd.f32 %v3241, %v46
    %v3286 = vmul.f32 %v3277, %v3285
    %v3287 = vadd.f32 %v3248, %v3286
    %v3288 = vtanh.pop %v3287
    %v3289 = vsub.f32 1.0, %v3284
    %v3290 = vmul.f32 %v3289, %v3288
    %v3291 = vmul.f32 %v3284, %v2835
    %v3292 = vadd.f32 %v3290, %v3291
    %3293 = vst [vmem:[%s984] sm:$0xff] %v3270
    %3294 = vst [vmem:[%s980 + $0x8] sm:$0xff] %v3292
    %v3295 = vld [vmem:[%s1] sm:$0xff]
    %v3296 = vld [vmem:[%s1 + $0x8] sm:$0xff]
    %v3297 = vld [vmem:[%s1 + $0x10] sm:$0xff]
    %v3298 = vld [vmem:[%s1 + $0x18] sm:$0xff]
    %v3299 = vld [vmem:[%s1 + $0x20] sm:$0xff]
    %v3300 = vld [vmem:[%s1 + $0x28] sm:$0xff]
    %v3301 = vld [vmem:[%s1 + $0x30] sm:$0xff]
    %v3302 = vld [vmem:[%s1 + $0x38] sm:$0xff]
    %v3303 = vld [vmem:[%s1 + $0x40] sm:$0xff]
    %v3304 = vld [vmem:[%s1 + $0x48] sm:$0xff]
    %v3305 = vld [vmem:[%s1 + $0x50] sm:$0xff]
    %v3306 = vld [vmem:[%s1 + $0x58] sm:$0xff]
    %v3307 = vld [vmem:[%s1 + $0x60] sm:$0xff]
    %v3308 = vld [vmem:[%s1 + $0x68] sm:$0xff]
    %v3309 = vld [vmem:[%s1 + $0x70] sm:$0xff]
    %v3310 = vld [vmem:[%s1 + $0x78] sm:$0xff]
    %v3311 = vld [vmem:[%s1 + $0x80] sm:$0xff]
    %v3312 = vld [vmem:[%s1 + $0x88] sm:$0xff]
    %v3313 = vld [vmem:[%s1 + $0x90] sm:$0xff]
    %v3314 = vld [vmem:[%s1 + $0x98] sm:$0xff]
    %v3315 = vld [vmem:[%s1 + $0xa0] sm:$0xff]
    %v3316 = vld [vmem:[%s1 + $0xa8] sm:$0xff]
    %v3317 = vld [vmem:[%s1 + $0xb0] sm:$0xff]
    %v3318 = vld [vmem:[%s1 + $0xb8] sm:$0xff]
    %v3319 = vld [vmem:[%s1 + $0xc0] sm:$0xff]
    %v3320 = vld [vmem:[%s1 + $0xc8] sm:$0xff]
    %v3321 = vld [vmem:[%s1 + $0xd0] sm:$0xff]
    %v3322 = vld [vmem:[%s1 + $0xd8] sm:$0xff]
    %v3323 = vld [vmem:[%s1 + $0xe0] sm:$0xff]
    %v3324 = vld [vmem:[%s1 + $0xe8] sm:$0xff]
    %v3325 = vld [vmem:[%s1 + $0xf0] sm:$0xff]
    %v3326 = vld [vmem:[%s1 + $0xf8] sm:$0xff]
    %v3327 = vld [vmem:[%s1 + $0x100] sm:$0xff]
    %v3328 = vld [vmem:[%s1 + $0x108] sm:$0xff]
    %v3329 = vld [vmem:[%s1 + $0x110] sm:$0xff]
    %v3330 = vld [vmem:[%s1 + $0x118] sm:$0xff]
    %v3331 = vld [vmem:[%s1 + $0x120] sm:$0xff]
    %v3332 = vld [vmem:[%s1 + $0x128] sm:$0xff]
    %v3333 = vld [vmem:[%s1 + $0x130] sm:$0xff]
    %v3334 = vld [vmem:[%s1 + $0x138] sm:$0xff]
    %v3335 = vld [vmem:[%s1 + $0x140] sm:$0xff]
    %v3336 = vld [vmem:[%s1 + $0x148] sm:$0xff]
    %v3337 = vld [vmem:[%s1 + $0x150] sm:$0xff]
    %v3338 = vld [vmem:[%s1 + $0x158] sm:$0xff]
    %v3339 = vld [vmem:[%s1 + $0x160] sm:$0xff]
    %v3340 = vld [vmem:[%s1 + $0x168] sm:$0xff]
    %v3341 = vld [vmem:[%s1 + $0x170] sm:$0xff]
    %v3342 = vld [vmem:[%s1 + $0x178] sm:$0xff]
    %v3343 = vld [vmem:[%s1 + $0x180] sm:$0xff]
    %v3344 = vld [vmem:[%s1 + $0x188] sm:$0xff]
    %v3345 = vld [vmem:[%s1 + $0x190] sm:$0xff]
    %v3346 = vld [vmem:[%s1 + $0x198] sm:$0xff]
    %v3347 = vld [vmem:[%s1 + $0x1a0] sm:$0xff]
    %v3348 = vld [vmem:[%s1 + $0x1a8] sm:$0xff]
    %v3349 = vld [vmem:[%s1 + $0x1b0] sm:$0xff]
    %v3350 = vld [vmem:[%s1 + $0x1b8] sm:$0xff]
    %v3351 = vld [vmem:[%s1 + $0x1c0] sm:$0xff]
    %v3352 = vld [vmem:[%s1 + $0x1c8] sm:$0xff]
    %v3353 = vld [vmem:[%s1 + $0x1d0] sm:$0xff]
    %v3354 = vld [vmem:[%s1 + $0x1d8] sm:$0xff]
    %v3355 = vld [vmem:[%s1 + $0x1e0] sm:$0xff]
    %v3356 = vld [vmem:[%s1 + $0x1e8] sm:$0xff]
    %v3357 = vld [vmem:[%s1 + $0x1f0] sm:$0xff]
    %v3358 = vld [vmem:[%s1 + $0x1f8] sm:$0xff]
    %v3359 = vld [vmem:[%s1 + $0x200] sm:$0xff]
    %v3360 = vld [vmem:[%s1 + $0x208] sm:$0xff]
    %v3361 = vld [vmem:[%s1 + $0x210] sm:$0xff]
    %v3362 = vld [vmem:[%s1 + $0x218] sm:$0xff]
    %v3363 = vld [vmem:[%s1 + $0x220] sm:$0xff]
    %v3364 = vld [vmem:[%s1 + $0x228] sm:$0xff]
    %v3365 = vld [vmem:[%s1 + $0x230] sm:$0xff]
    %v3366 = vld [vmem:[%s1 + $0x238] sm:$0xff]
    %v3367 = vld [vmem:[%s1 + $0x240] sm:$0xff]
    %v3368 = vld [vmem:[%s1 + $0x248] sm:$0xff]
    %v3369 = vld [vmem:[%s1 + $0x250] sm:$0xff]
    %v3370 = vld [vmem:[%s1 + $0x258] sm:$0xff]
    %v3371 = vld [vmem:[%s1 + $0x260] sm:$0xff]
    %v3372 = vld [vmem:[%s1 + $0x268] sm:$0xff]
    %v3373 = vld [vmem:[%s1 + $0x270] sm:$0xff]
    %v3374 = vld [vmem:[%s1 + $0x278] sm:$0xff]
    %v3375 = vld [vmem:[%s1 + $0x280] sm:$0xff]
    %v3376 = vld [vmem:[%s1 + $0x288] sm:$0xff]
    %v3377 = vld [vmem:[%s1 + $0x290] sm:$0xff]
    %v3378 = vld [vmem:[%s1 + $0x298] sm:$0xff]
    %v3379 = vld [vmem:[%s1 + $0x2a0] sm:$0xff]
    %v3380 = vld [vmem:[%s1 + $0x2a8] sm:$0xff]
    %v3381 = vld [vmem:[%s1 + $0x2b0] sm:$0xff]
    %v3382 = vld [vmem:[%s1 + $0x2b8] sm:$0xff]
    %v3383 = vld [vmem:[%s1 + $0x2c0] sm:$0xff]
    %v3384 = vld [vmem:[%s1 + $0x2c8] sm:$0xff]
    %v3385 = vld [vmem:[%s1 + $0x2d0] sm:$0xff]
    %v3386 = vld [vmem:[%s1 + $0x2d8] sm:$0xff]
    %v3387 = vld [vmem:[%s1 + $0x2e0] sm:$0xff]
    %v3388 = vld [vmem:[%s1 + $0x2e8] sm:$0xff]
    %v3389 = vld [vmem:[%s1 + $0x2f0] sm:$0xff]
    %v3390 = vld [vmem:[%s1 + $0x2f8] sm:$0xff]
    %v3391 = vld [vmem:[%s1 + $0x300] sm:$0xff]
    %v3392 = vld [vmem:[%s1 + $0x308] sm:$0xff]
    %v3393 = vld [vmem:[%s1 + $0x310] sm:$0xff]
    %v3394 = vld [vmem:[%s1 + $0x318] sm:$0xff]
    %v3395 = vld [vmem:[%s1 + $0x320] sm:$0xff]
    %v3396 = vld [vmem:[%s1 + $0x328] sm:$0xff]
    %v3397 = vld [vmem:[%s1 + $0x330] sm:$0xff]
    %v3398 = vld [vmem:[%s1 + $0x338] sm:$0xff]
    %v3399 = vld [vmem:[%s1 + $0x340] sm:$0xff]
    %v3400 = vld [vmem:[%s1 + $0x348] sm:$0xff]
    %v3401 = vld [vmem:[%s1 + $0x350] sm:$0xff]
    %v3402 = vld [vmem:[%s1 + $0x358] sm:$0xff]
    %v3403 = vld [vmem:[%s1 + $0x360] sm:$0xff]
    %v3404 = vld [vmem:[%s1 + $0x368] sm:$0xff]
    %v3405 = vld [vmem:[%s1 + $0x370] sm:$0xff]
    %v3406 = vld [vmem:[%s1 + $0x378] sm:$0xff]
    %v3407 = vld [vmem:[%s1 + $0x380] sm:$0xff]
    %v3408 = vld [vmem:[%s1 + $0x388] sm:$0xff]
    %v3409 = vld [vmem:[%s1 + $0x390] sm:$0xff]
    %v3410 = vld [vmem:[%s1 + $0x398] sm:$0xff]
    %v3411 = vld [vmem:[%s1 + $0x3a0] sm:$0xff]
    %v3412 = vld [vmem:[%s1 + $0x3a8] sm:$0xff]
    %v3413 = vld [vmem:[%s1 + $0x3b0] sm:$0xff]
    %v3414 = vld [vmem:[%s1 + $0x3b8] sm:$0xff]
    %v3415 = vld [vmem:[%s1 + $0x3c0] sm:$0xff]
    %v3416 = vld [vmem:[%s1 + $0x3c8] sm:$0xff]
    %v3417 = vld [vmem:[%s1 + $0x3d0] sm:$0xff]
    %v3418 = vld [vmem:[%s1 + $0x3d8] sm:$0xff]
    %v3419 = vld [vmem:[%s1 + $0x3e0] sm:$0xff]
    %v3420 = vld [vmem:[%s1 + $0x3e8] sm:$0xff]
    %v3421 = vld [vmem:[%s1 + $0x3f0] sm:$0xff]
    %v3422 = vld [vmem:[%s1 + $0x3f8] sm:$0xff]
    %v3423 = vld [vmem:[%s1 + $0x400] sm:$0xff]
    %v3424 = vld [vmem:[%s1 + $0x408] sm:$0xff]
    %v3425 = vld [vmem:[%s1 + $0x410] sm:$0xff]
    %v3426 = vld [vmem:[%s1 + $0x418] sm:$0xff]
    %v3427 = vld [vmem:[%s1 + $0x420] sm:$0xff]
    %v3428 = vld [vmem:[%s1 + $0x428] sm:$0xff]
    %v3429 = vld [vmem:[%s1 + $0x430] sm:$0xff]
    %v3430 = vld [vmem:[%s1 + $0x438] sm:$0xff]
    %v3431 = vld [vmem:[%s1 + $0x440] sm:$0xff]
    %v3432 = vld [vmem:[%s1 + $0x448] sm:$0xff]
    %v3433 = vld [vmem:[%s1 + $0x450] sm:$0xff]
    %v3434 = vld [vmem:[%s1 + $0x458] sm:$0xff]
    %v3435 = vld [vmem:[%s1 + $0x460] sm:$0xff]
    %v3436 = vld [vmem:[%s1 + $0x468] sm:$0xff]
    %v3437 = vld [vmem:[%s1 + $0x470] sm:$0xff]
    %v3438 = vld [vmem:[%s1 + $0x478] sm:$0xff]
    %v3439 = vld [vmem:[%s1 + $0x480] sm:$0xff]
    %v3440 = vld [vmem:[%s1 + $0x488] sm:$0xff]
    %v3441 = vld [vmem:[%s1 + $0x490] sm:$0xff]
    %v3442 = vld [vmem:[%s1 + $0x498] sm:$0xff]
    %v3443 = vld [vmem:[%s1 + $0x4a0] sm:$0xff]
    %v3444 = vld [vmem:[%s1 + $0x4a8] sm:$0xff]
    %v3445 = vld [vmem:[%s1 + $0x4b0] sm:$0xff]
    %v3446 = vld [vmem:[%s1 + $0x4b8] sm:$0xff]
    %v3447 = vld [vmem:[%s1 + $0x4c0] sm:$0xff]
    %v3448 = vld [vmem:[%s1 + $0x4c8] sm:$0xff]
    %v3449 = vld [vmem:[%s1 + $0x4d0] sm:$0xff]
    %v3450 = vld [vmem:[%s1 + $0x4d8] sm:$0xff]
    %v3451 = vld [vmem:[%s1 + $0x4e0] sm:$0xff]
    %v3452 = vld [vmem:[%s1 + $0x4e8] sm:$0xff]
    %v3453 = vld [vmem:[%s1 + $0x4f0] sm:$0xff]
    %v3454 = vld [vmem:[%s1 + $0x4f8] sm:$0xff]
    %v3455 = vld [vmem:[%s1 + $0x500] sm:$0xff]
    %v3456 = vld [vmem:[%s1 + $0x508] sm:$0xff]
    %v3457 = vld [vmem:[%s1 + $0x510] sm:$0xff]
    %v3458 = vld [vmem:[%s1 + $0x518] sm:$0xff]
    %v3459 = vld [vmem:[%s1 + $0x520] sm:$0xff]
    %v3460 = vld [vmem:[%s1 + $0x528] sm:$0xff]
    %v3461 = vld [vmem:[%s1 + $0x530] sm:$0xff]
    %v3462 = vld [vmem:[%s1 + $0x538] sm:$0xff]
    %v3463 = vld [vmem:[%s1 + $0x540] sm:$0xff]
    %v3464 = vld [vmem:[%s1 + $0x548] sm:$0xff]
    %v3465 = vld [vmem:[%s1 + $0x550] sm:$0xff]
    %v3466 = vld [vmem:[%s1 + $0x558] sm:$0xff]
    %v3467 = vld [vmem:[%s1 + $0x560] sm:$0xff]
    %v3468 = vld [vmem:[%s1 + $0x568] sm:$0xff]
    %v3469 = vld [vmem:[%s1 + $0x570] sm:$0xff]
    %v3470 = vld [vmem:[%s1 + $0x578] sm:$0xff]
    %v3471 = vld [vmem:[%s1 + $0x580] sm:$0xff]
    %v3472 = vld [vmem:[%s1 + $0x588] sm:$0xff]
    %v3473 = vld [vmem:[%s1 + $0x590] sm:$0xff]
    %v3474 = vld [vmem:[%s1 + $0x598] sm:$0xff]
    %v3475 = vld [vmem:[%s1 + $0x5a0] sm:$0xff]
    %v3476 = vld [vmem:[%s1 + $0x5a8] sm:$0xff]
    %v3477 = vld [vmem:[%s1 + $0x5b0] sm:$0xff]
    %v3478 = vld [vmem:[%s1 + $0x5b8] sm:$0xff]
    %v3479 = vld [vmem:[%s1 + $0x5c0] sm:$0xff]
    %v3480 = vld [vmem:[%s1 + $0x5c8] sm:$0xff]
    %v3481 = vld [vmem:[%s1 + $0x5d0] sm:$0xff]
    %v3482 = vld [vmem:[%s1 + $0x5d8] sm:$0xff]
    %v3483 = vld [vmem:[%s1 + $0x5e0] sm:$0xff]
    %v3484 = vld [vmem:[%s1 + $0x5e8] sm:$0xff]
    %v3485 = vld [vmem:[%s1 + $0x5f0] sm:$0xff]
    %v3486 = vld [vmem:[%s1 + $0x5f8] sm:$0xff]
    %3487 = vmatprep.subr.mxu0 %v3386
    %3488 = vmatpush1.msra.mxu0 %v3385
    %3489 = vmatprep.subr.mxu0 %v3380
    %3490 = vmatpush1.msra.mxu0 %v3379
    %3491 = vmatprep.subr.mxu0 %v3374
    %3492 = vmatpush1.msra.mxu0 %v3373
    %3493 = vmatprep.subr.mxu0 %v3368
    %3494 = vmatpush1.msra.mxu0 %v3367
    %3495 = vmatprep.subr.mxu0 %v3362
    %3496 = vmatpush1.msra.mxu0 %v3361
    %3497 = vmatprep.subr.mxu0 %v3356
    %3498 = vmatpush1.msra.mxu0 %v3355
    %3499 = vmatprep.subr.mxu0 %v3350
    %3500 = vmatpush1.msra.mxu0 %v3349
    %3501 = vmatprep.subr.mxu0 %v3344
    %3502 = vmatpush1.msra.mxu0 %v3343
    %3503 = vmatprep.subr.mxu0 %v3338
    %3504 = vmatpush1.msra.mxu0 %v3337
    %3505 = vmatprep.subr.mxu0 %v3332
    %3506 = vmatpush1.msra.mxu0 %v3331
    %3507 = vmatprep.subr.mxu0 %v3326
    %3508 = vmatpush1.msra.mxu0 %v3325
    %3509 = vmatprep.subr.mxu0 %v3320
    %3510 = vmatpush1.msra.mxu0 %v3319
    %3511 = vmatprep.subr.mxu0 %v3314
    %3512 = vmatpush1.msra.mxu0 %v3313
    %3513 = vmatprep.subr.mxu0 %v3308
    %3514 = vmatpush1.msra.mxu0 %v3307
    %3515 = vmatprep.subr.mxu0 %v3302
    %3516 = vmatpush1.msra.mxu0 %v3301
    %3517 = vmatprep.subr.mxu0 %v3296
    %3518 = vmatpush1.msra.mxu0 %v3295
    %3519 = vmatprep.subr.mxu0 %v3482
    %3520 = vmatpush2.msra.mxu0 %v3481
    %3521 = vmatprep.subr.mxu0 %v3476
    %3522 = vmatpush2.msra.mxu0 %v3475
    %3523 = vmatprep.subr.mxu0 %v3470
    %3524 = vmatpush2.msra.mxu0 %v3469
    %3525 = vmatprep.subr.mxu0 %v3464
    %3526 = vmatpush2.msra.mxu0 %v3463
    %3527 = vmatprep.subr.mxu0 %v3458
    %3528 = vmatpush2.msra.mxu0 %v3457
    %3529 = vmatprep.subr.mxu0 %v3452
    %3530 = vmatpush2.msra.mxu0 %v3451
    %3531 = vmatprep.subr.mxu0 %v3446
    %3532 = vmatpush2.msra.mxu0 %v3445
    %3533 = vmatprep.subr.mxu0 %v3440
    %3534 = vmatpush2.msra.mxu0 %v3439
    %3535 = vmatprep.subr.mxu0 %v3434
    %3536 = vmatpush2.msra.mxu0 %v3433
    %3537 = vmatprep.subr.mxu0 %v3428
    %3538 = vmatpush2.msra.mxu0 %v3427
    %3539 = vmatprep.subr.mxu0 %v3422
    %3540 = vmatpush2.msra.mxu0 %v3421
    %3541 = vmatprep.subr.mxu0 %v3416
    %3542 = vmatpush2.msra.mxu0 %v3415
    %3543 = vmatprep.subr.mxu0 %v3410
    %3544 = vmatpush2.msra.mxu0 %v3409
    %3545 = vmatprep.subr.mxu0 %v3404
    %3546 = vmatpush2.msra.mxu0 %v3403
    %3547 = vmatprep.subr.mxu0 %v3398
    %3548 = vmatpush2.msra.mxu0 %v3397
    %3549 = vmatprep.subr.mxu0 %v3392
    %3550 = vmatpush2.msra.mxu0 %v3391
    %3551 = vmatprep.mubr.f32.mxu0 %v3292
    %3552 = vmatmul.mubr.f32.gmra.mxu0 %v3270
    %v3553 = vpop.f32.mrf.mxu0
    %v3554 = vadd.f32 0.0, %v3553
    %v3555 = vpop.f32.mrf.mxu0
    %v3556 = vadd.f32 0.0, %v3555
    %3557 = vdwg.mxu0
    %3558 = vmatprep.subr.mxu0 %v3388
    %3559 = vmatpush1.msra.mxu0 %v3387
    %3560 = vmatprep.subr.mxu0 %v3382
    %3561 = vmatpush1.msra.mxu0 %v3381
    %3562 = vmatprep.subr.mxu0 %v3376
    %3563 = vmatpush1.msra.mxu0 %v3375
    %3564 = vmatprep.subr.mxu0 %v3370
    %3565 = vmatpush1.msra.mxu0 %v3369
    %3566 = vmatprep.subr.mxu0 %v3364
    %3567 = vmatpush1.msra.mxu0 %v3363
    %3568 = vmatprep.subr.mxu0 %v3358
    %3569 = vmatpush1.msra.mxu0 %v3357
    %3570 = vmatprep.subr.mxu0 %v3352
    %3571 = vmatpush1.msra.mxu0 %v3351
    %3572 = vmatprep.subr.mxu0 %v3346
    %3573 = vmatpush1.msra.mxu0 %v3345
    %3574 = vmatprep.subr.mxu0 %v3340
    %3575 = vmatpush1.msra.mxu0 %v3339
    %3576 = vmatprep.subr.mxu0 %v3334
    %3577 = vmatpush1.msra.mxu0 %v3333
    %3578 = vmatprep.subr.mxu0 %v3328
    %3579 = vmatpush1.msra.mxu0 %v3327
    %3580 = vmatprep.subr.mxu0 %v3322
    %3581 = vmatpush1.msra.mxu0 %v3321
    %3582 = vmatprep.subr.mxu0 %v3316
    %3583 = vmatpush1.msra.mxu0 %v3315
    %3584 = vmatprep.subr.mxu0 %v3310
    %3585 = vmatpush1.msra.mxu0 %v3309
    %3586 = vmatprep.subr.mxu0 %v3304
    %3587 = vmatpush1.msra.mxu0 %v3303
    %3588 = vmatprep.subr.mxu0 %v3298
    %3589 = vmatpush1.msra.mxu0 %v3297
    %3590 = vmatprep.subr.mxu0 %v3484
    %3591 = vmatpush2.msra.mxu0 %v3483
    %3592 = vmatprep.subr.mxu0 %v3478
    %3593 = vmatpush2.msra.mxu0 %v3477
    %3594 = vmatprep.subr.mxu0 %v3472
    %3595 = vmatpush2.msra.mxu0 %v3471
    %3596 = vmatprep.subr.mxu0 %v3466
    %3597 = vmatpush2.msra.mxu0 %v3465
    %3598 = vmatprep.subr.mxu0 %v3460
    %3599 = vmatpush2.msra.mxu0 %v3459
    %3600 = vmatprep.subr.mxu0 %v3454
    %3601 = vmatpush2.msra.mxu0 %v3453
    %3602 = vmatprep.subr.mxu0 %v3448
    %3603 = vmatpush2.msra.mxu0 %v3447
    %3604 = vmatprep.subr.mxu0 %v3442
    %3605 = vmatpush2.msra.mxu0 %v3441
    %3606 = vmatprep.subr.mxu0 %v3436
    %3607 = vmatpush2.msra.mxu0 %v3435
    %3608 = vmatprep.subr.mxu0 %v3430
    %3609 = vmatpush2.msra.mxu0 %v3429
    %3610 = vmatprep.subr.mxu0 %v3424
    %3611 = vmatpush2.msra.mxu0 %v3423
    %3612 = vmatprep.subr.mxu0 %v3418
    %3613 = vmatpush2.msra.mxu0 %v3417
    %3614 = vmatprep.subr.mxu0 %v3412
    %3615 = vmatpush2.msra.mxu0 %v3411
    %3616 = vmatprep.subr.mxu0 %v3406
    %3617 = vmatpush2.msra.mxu0 %v3405
    %3618 = vmatprep.subr.mxu0 %v3400
    %3619 = vmatpush2.msra.mxu0 %v3399
    %3620 = vmatprep.subr.mxu0 %v3394
    %3621 = vmatpush2.msra.mxu0 %v3393
    %3622 = vmatprep.mubr.f32.mxu0 %v3292
    %3623 = vmatmul.mubr.f32.gmra.mxu0 %v3270
    %v3624 = vpop.f32.mrf.mxu0
    %v3625 = vadd.f32 0.0, %v3624
    %v3626 = vpop.f32.mrf.mxu0
    %v3627 = vadd.f32 0.0, %v3626
    %3628 = vdwg.mxu0
    %3629 = vmatprep.subr.mxu0 %v3390
    %3630 = vmatpush1.msra.mxu0 %v3389
    %3631 = vmatprep.subr.mxu0 %v3384
    %3632 = vmatpush1.msra.mxu0 %v3383
    %3633 = vmatprep.subr.mxu0 %v3378
    %3634 = vmatpush1.msra.mxu0 %v3377
    %3635 = vmatprep.subr.mxu0 %v3372
    %3636 = vmatpush1.msra.mxu0 %v3371
    %3637 = vmatprep.subr.mxu0 %v3366
    %3638 = vmatpush1.msra.mxu0 %v3365
    %3639 = vmatprep.subr.mxu0 %v3360
    %3640 = vmatpush1.msra.mxu0 %v3359
    %3641 = vmatprep.subr.mxu0 %v3354
    %3642 = vmatpush1.msra.mxu0 %v3353
    %3643 = vmatprep.subr.mxu0 %v3348
    %3644 = vmatpush1.msra.mxu0 %v3347
    %3645 = vmatprep.subr.mxu0 %v3342
    %3646 = vmatpush1.msra.mxu0 %v3341
    %3647 = vmatprep.subr.mxu0 %v3336
    %3648 = vmatpush1.msra.mxu0 %v3335
    %3649 = vmatprep.subr.mxu0 %v3330
    %3650 = vmatpush1.msra.mxu0 %v3329
    %3651 = vmatprep.subr.mxu0 %v3324
    %3652 = vmatpush1.msra.mxu0 %v3323
    %3653 = vmatprep.subr.mxu0 %v3318
    %3654 = vmatpush1.msra.mxu0 %v3317
    %3655 = vmatprep.subr.mxu0 %v3312
    %3656 = vmatpush1.msra.mxu0 %v3311
    %3657 = vmatprep.subr.mxu0 %v3306
    %3658 = vmatpush1.msra.mxu0 %v3305
    %3659 = vmatprep.subr.mxu0 %v3300
    %3660 = vmatpush1.msra.mxu0 %v3299
    %3661 = vmatprep.subr.mxu0 %v3486
    %3662 = vmatpush2.msra.mxu0 %v3485
    %3663 = vmatprep.subr.mxu0 %v3480
    %3664 = vmatpush2.msra.mxu0 %v3479
    %3665 = vmatprep.subr.mxu0 %v3474
    %3666 = vmatpush2.msra.mxu0 %v3473
    %3667 = vmatprep.subr.mxu0 %v3468
    %3668 = vmatpush2.msra.mxu0 %v3467
    %3669 = vmatprep.subr.mxu0 %v3462
    %3670 = vmatpush2.msra.mxu0 %v3461
    %3671 = vmatprep.subr.mxu0 %v3456
    %3672 = vmatpush2.msra.mxu0 %v3455
    %3673 = vmatprep.subr.mxu0 %v3450
    %3674 = vmatpush2.msra.mxu0 %v3449
    %3675 = vmatprep.subr.mxu0 %v3444
    %3676 = vmatpush2.msra.mxu0 %v3443
    %3677 = vmatprep.subr.mxu0 %v3438
    %3678 = vmatpush2.msra.mxu0 %v3437
    %3679 = vmatprep.subr.mxu0 %v3432
    %3680 = vmatpush2.msra.mxu0 %v3431
    %3681 = vmatprep.subr.mxu0 %v3426
    %3682 = vmatpush2.msra.mxu0 %v3425
    %3683 = vmatprep.subr.mxu0 %v3420
    %3684 = vmatpush2.msra.mxu0 %v3419
    %3685 = vmatprep.subr.mxu0 %v3414
    %3686 = vmatpush2.msra.mxu0 %v3413
    %3687 = vmatprep.subr.mxu0 %v3408
    %3688 = vmatpush2.msra.mxu0 %v3407
    %3689 = vmatprep.subr.mxu0 %v3402
    %3690 = vmatpush2.msra.mxu0 %v3401
    %3691 = vmatprep.subr.mxu0 %v3396
    %3692 = vmatpush2.msra.mxu0 %v3395
    %3693 = vmatprep.mubr.f32.mxu0 %v3292
    %3694 = vmatmul.mubr.f32.gmra.mxu0 %v3270
    %v3695 = vpop.f32.mrf.mxu0
    %v3696 = vadd.f32 0.0, %v3695
    %v3697 = vpop.f32.mrf.mxu0
    %v3698 = vadd.f32 0.0, %v3697
    %3699 = vdwg.mxu0
    %v3700 = vld [vmem:[%s461] sm:$0xff]
    %v3701 = vld [vmem:[%s461 + $0x8] sm:$0xff]
    %v3702 = vld [vmem:[%s461 + $0x10] sm:$0xff]
    %v3703 = vld [vmem:[%s455 + $0x18] sm:$0xff]
    %v3704 = vld [vmem:[%s455 + $0x20] sm:$0xff]
    %v3705 = vld [vmem:[%s455 + $0x28] sm:$0xff]
    %v3706 = vadd.f32 %v3700, %v3554
    %v3707 = vxor.u32 %v3706, 2147483648
    %v3708 = vmul.f32 %v3707, 1.442695
    %v3709 = vpow.pop %v3708
    %v3710 = vadd.f32 %v3709, 1.0
    %v3711 = vrcp.pop %v3710
    %v3712 = vmul.f32 1.0, %v3711
    %v3713 = vadd.f32 %v3701, %v3556
    %v3714 = vxor.u32 %v3713, 2147483648
    %v3715 = vmul.f32 %v3714, 1.442695
    %v3716 = vpow.pop %v3715
    %v3717 = vadd.f32 %v3716, 1.0
    %v3718 = vrcp.pop %v3717
    %v3719 = vmul.f32 1.0, %v3718
    %v3720 = vadd.f32 %v3625, %v39
    %v3721 = vmul.f32 %v3712, %v3720
    %v3722 = vadd.f32 %v3702, %v3721
    %v3723 = vtanh.pop %v3722
    %v3724 = vsub.f32 1.0, %v3719
    %v3725 = vmul.f32 %v3724, %v3723
    %v3726 = vmul.f32 %v3719, %v3270
    %v3727 = vadd.f32 %v3725, %v3726
    %v3728 = vadd.f32 %v3703, %v3627
    %v3729 = vxor.u32 %v3728, 2147483648
    %v3730 = vmul.f32 %v3729, 1.442695
    %v3731 = vpow.pop %v3730
    %v3732 = vadd.f32 %v3731, 1.0
    %v3733 = vrcp.pop %v3732
    %v3734 = vmul.f32 1.0, %v3733
    %v3735 = vadd.f32 %v3704, %v3696
    %v3736 = vxor.u32 %v3735, 2147483648
    %v3737 = vmul.f32 %v3736, 1.442695
    %v3738 = vpow.pop %v3737
    %v3739 = vadd.f32 %v3738, 1.0
    %v3740 = vrcp.pop %v3739
    %v3741 = vmul.f32 1.0, %v3740
    %v3742 = vadd.f32 %v3698, %v46
    %v3743 = vmul.f32 %v3734, %v3742
    %v3744 = vadd.f32 %v3705, %v3743
    %v3745 = vtanh.pop %v3744
    %v3746 = vsub.f32 1.0, %v3741
    %v3747 = vmul.f32 %v3746, %v3745
    %v3748 = vmul.f32 %v3741, %v3292
    %v3749 = vadd.f32 %v3747, %v3748
    %3750 = vst [vmem:[%s515] sm:$0xff] %v3727
    %3751 = vst [vmem:[%s511 + $0x8] sm:$0xff] %v3749
    %v3752 = vld [vmem:[#allocation2] sm:$0xff]
    %v3753 = vld [vmem:[#allocation2 + $0x8] sm:$0xff]
    %v3754 = vld [vmem:[#allocation2 + $0x10] sm:$0xff]
    %v3755 = vld [vmem:[#allocation2 + $0x18] sm:$0xff]
    %v3756 = vld [vmem:[#allocation2 + $0x20] sm:$0xff]
    %v3757 = vld [vmem:[#allocation2 + $0x28] sm:$0xff]
    %v3758 = vld [vmem:[#allocation2 + $0x30] sm:$0xff]
    %v3759 = vld [vmem:[#allocation2 + $0x38] sm:$0xff]
    %v3760 = vld [vmem:[#allocation2 + $0x40] sm:$0xff]
    %v3761 = vld [vmem:[#allocation2 + $0x48] sm:$0xff]
    %v3762 = vld [vmem:[#allocation2 + $0x50] sm:$0xff]
    %v3763 = vld [vmem:[#allocation2 + $0x58] sm:$0xff]
    %v3764 = vld [vmem:[#allocation2 + $0x60] sm:$0xff]
    %v3765 = vld [vmem:[#allocation2 + $0x68] sm:$0xff]
    %v3766 = vld [vmem:[#allocation2 + $0x70] sm:$0xff]
    %v3767 = vld [vmem:[#allocation2 + $0x78] sm:$0xff]
    %v3768 = vld [vmem:[#allocation3] sm:$0xff]
    %v3769 = vld [vmem:[#allocation3 + $0x8] sm:$0xff]
    %v3770 = vld [vmem:[#allocation3 + $0x10] sm:$0xff]
    %v3771 = vld [vmem:[#allocation3 + $0x18] sm:$0xff]
    %v3772 = vld [vmem:[#allocation3 + $0x20] sm:$0xff]
    %v3773 = vld [vmem:[#allocation3 + $0x28] sm:$0xff]
    %v3774 = vld [vmem:[#allocation3 + $0x30] sm:$0xff]
    %v3775 = vld [vmem:[#allocation3 + $0x38] sm:$0xff]
    %v3776 = vld [vmem:[#allocation3 + $0x40] sm:$0xff]
    %v3777 = vld [vmem:[#allocation3 + $0x48] sm:$0xff]
    %v3778 = vld [vmem:[#allocation3 + $0x50] sm:$0xff]
    %v3779 = vld [vmem:[#allocation3 + $0x58] sm:$0xff]
    %v3780 = vld [vmem:[#allocation3 + $0x60] sm:$0xff]
    %v3781 = vld [vmem:[#allocation3 + $0x68] sm:$0xff]
    %v3782 = vld [vmem:[#allocation3 + $0x70] sm:$0xff]
    %v3783 = vld [vmem:[#allocation3 + $0x78] sm:$0xff]
    %v3784 = vld [vmem:[#allocation3 + $0x80] sm:$0xff]
    %v3785 = vld [vmem:[#allocation3 + $0x88] sm:$0xff]
    %v3786 = vld [vmem:[#allocation3 + $0x90] sm:$0xff]
    %v3787 = vld [vmem:[#allocation3 + $0x98] sm:$0xff]
    %v3788 = vld [vmem:[#allocation3 + $0xa0] sm:$0xff]
    %v3789 = vld [vmem:[#allocation3 + $0xa8] sm:$0xff]
    %v3790 = vld [vmem:[#allocation3 + $0xb0] sm:$0xff]
    %v3791 = vld [vmem:[#allocation3 + $0xb8] sm:$0xff]
    %v3792 = vld [vmem:[#allocation3 + $0xc0] sm:$0xff]
    %v3793 = vld [vmem:[#allocation3 + $0xc8] sm:$0xff]
    %v3794 = vld [vmem:[#allocation3 + $0xd0] sm:$0xff]
    %v3795 = vld [vmem:[#allocation3 + $0xd8] sm:$0xff]
    %v3796 = vld [vmem:[#allocation3 + $0xe0] sm:$0xff]
    %v3797 = vld [vmem:[#allocation3 + $0xe8] sm:$0xff]
    %v3798 = vld [vmem:[#allocation3 + $0xf0] sm:$0xff]
    %v3799 = vld [vmem:[#allocation3 + $0xf8] sm:$0xff]
    %v3800 = vld [vmem:[%s4] sm:$0x1]
    %v3802 = vlaneseq
    %v3803 = vshrl.u32 %v3802, 7
    %v3804 = vsub.s32 0, %v3803
    %v3805 = vrot.slane %v3800, %v3804
    %3807 = vmatprep.subr.mxu0 0.0
    %3808 = vmatpush1.msra.mxu0 %v3783
    %3809 = vmatprep.subr.mxu0 0.0
    %3810 = vmatpush1.msra.mxu0 %v3782
    %3811 = vmatprep.subr.mxu0 0.0
    %3812 = vmatpush1.msra.mxu0 %v3781
    %3813 = vmatprep.subr.mxu0 0.0
    %3814 = vmatpush1.msra.mxu0 %v3780
    %3815 = vmatprep.subr.mxu0 0.0
    %3816 = vmatpush1.msra.mxu0 %v3779
    %3817 = vmatprep.subr.mxu0 0.0
    %3818 = vmatpush1.msra.mxu0 %v3778
    %3819 = vmatprep.subr.mxu0 0.0
    %3820 = vmatpush1.msra.mxu0 %v3777
    %3821 = vmatprep.subr.mxu0 0.0
    %3822 = vmatpush1.msra.mxu0 %v3776
    %3823 = vmatprep.subr.mxu0 0.0
    %3824 = vmatpush1.msra.mxu0 %v3775
    %3825 = vmatprep.subr.mxu0 0.0
    %3826 = vmatpush1.msra.mxu0 %v3774
    %3827 = vmatprep.subr.mxu0 0.0
    %3828 = vmatpush1.msra.mxu0 %v3773
    %3829 = vmatprep.subr.mxu0 0.0
    %3830 = vmatpush1.msra.mxu0 %v3772
    %3831 = vmatprep.subr.mxu0 0.0
    %3832 = vmatpush1.msra.mxu0 %v3771
    %3833 = vmatprep.subr.mxu0 0.0
    %3834 = vmatpush1.msra.mxu0 %v3770
    %3835 = vmatprep.subr.mxu0 0.0
    %3836 = vmatpush1.msra.mxu0 %v3769
    %3837 = vmatprep.subr.mxu0 0.0
    %3838 = vmatpush1.msra.mxu0 %v3768
    %3839 = vmatprep.subr.mxu0 0.0
    %3840 = vmatpush2.msra.mxu0 %v3799
    %3841 = vmatprep.subr.mxu0 0.0
    %3842 = vmatpush2.msra.mxu0 %v3798
    %3843 = vmatprep.subr.mxu0 0.0
    %3844 = vmatpush2.msra.mxu0 %v3797
    %3845 = vmatprep.subr.mxu0 0.0
    %3846 = vmatpush2.msra.mxu0 %v3796
    %3847 = vmatprep.subr.mxu0 0.0
    %3848 = vmatpush2.msra.mxu0 %v3795
    %3849 = vmatprep.subr.mxu0 0.0
    %3850 = vmatpush2.msra.mxu0 %v3794
    %3851 = vmatprep.subr.mxu0 0.0
    %3852 = vmatpush2.msra.mxu0 %v3793
    %3853 = vmatprep.subr.mxu0 0.0
    %3854 = vmatpush2.msra.mxu0 %v3792
    %3855 = vmatprep.subr.mxu0 0.0
    %3856 = vmatpush2.msra.mxu0 %v3791
    %3857 = vmatprep.subr.mxu0 0.0
    %3858 = vmatpush2.msra.mxu0 %v3790
    %3859 = vmatprep.subr.mxu0 0.0
    %3860 = vmatpush2.msra.mxu0 %v3789
    %3861 = vmatprep.subr.mxu0 0.0
    %3862 = vmatpush2.msra.mxu0 %v3788
    %3863 = vmatprep.subr.mxu0 0.0
    %3864 = vmatpush2.msra.mxu0 %v3787
    %3865 = vmatprep.subr.mxu0 0.0
    %3866 = vmatpush2.msra.mxu0 %v3786
    %3867 = vmatprep.subr.mxu0 0.0
    %3868 = vmatpush2.msra.mxu0 %v3785
    %3869 = vmatprep.subr.mxu0 0.0
    %3870 = vmatpush2.msra.mxu0 %v3784
    %3871 = vmatprep.mubr.f32.mxu0 %v3753
    %3872 = vmatmul.mubr.f32.gmra.mxu0 %v3752
    %v3873 = vpop.f32.mrf.mxu0
    %v3874 = vadd.f32 %v3805, %v3873
    %v3875 = vpop.f32.mrf.mxu0
    %3876 = vmatprep.mubr.f32.mxu0 %v3755
    %3877 = vmatmul.mubr.f32.gmra.mxu0 %v3754
    %v3878 = vpop.f32.mrf.mxu0
    %v3879 = vadd.f32 %v3805, %v3878
    %v3880 = vpop.f32.mrf.mxu0
    %3881 = vmatprep.mubr.f32.mxu0 %v3757
    %3882 = vmatmul.mubr.f32.gmra.mxu0 %v3756
    %v3883 = vpop.f32.mrf.mxu0
    %v3884 = vadd.f32 %v3805, %v3883
    %v3885 = vpop.f32.mrf.mxu0
    %3886 = vmatprep.mubr.f32.mxu0 %v3759
    %3887 = vmatmul.mubr.f32.gmra.mxu0 %v3758
    %v3888 = vpop.f32.mrf.mxu0
    %v3889 = vadd.f32 %v3805, %v3888
    %v3890 = vpop.f32.mrf.mxu0
    %3891 = vmatprep.mubr.f32.mxu0 %v3761
    %3892 = vmatmul.mubr.f32.gmra.mxu0 %v3760
    %v3893 = vpop.f32.mrf.mxu0
    %v3894 = vadd.f32 %v3805, %v3893
    %v3895 = vpop.f32.mrf.mxu0
    %3896 = vmatprep.mubr.f32.mxu0 %v3763
    %3897 = vmatmul.mubr.f32.gmra.mxu0 %v3762
    %v3898 = vpop.f32.mrf.mxu0
    %v3899 = vadd.f32 %v3805, %v3898
    %v3900 = vpop.f32.mrf.mxu0
    %3901 = vmatprep.mubr.f32.mxu0 %v3765
    %3902 = vmatmul.mubr.f32.gmra.mxu0 %v3764
    %v3903 = vpop.f32.mrf.mxu0
    %v3904 = vadd.f32 %v3805, %v3903
    %v3905 = vpop.f32.mrf.mxu0
    %3906 = vmatprep.mubr.f32.mxu0 %v3767
    %3907 = vmatmul.mubr.f32.gmra.mxu0 %v3766
    %v3908 = vpop.f32.mrf.mxu0
    %v3909 = vadd.f32 %v3805, %v3908
    %v3910 = vpop.f32.mrf.mxu0
    %3911 = vdwg.mxu0
    %3912 = vst [vmem:[%s5] sm:$0xff] %v3874
    %3913 = vst [vmem:[%s5 + $0x8] sm:$0xff] %v3879
    %3914 = vst [vmem:[%s5 + $0x10] sm:$0xff] %v3884
    %3915 = vst [vmem:[%s5 + $0x18] sm:$0xff] %v3889
    %3916 = vst [vmem:[%s5 + $0x20] sm:$0xff] %v3894
    %3917 = vst [vmem:[%s5 + $0x28] sm:$0xff] %v3899
    %3918 = vst [vmem:[%s5 + $0x30] sm:$0xff] %v3904
    %3919 = vst [vmem:[%s5 + $0x38] sm:$0xff] %v3909
    // Predicated region
    $region26: #{lstm_model_forward.1} parent=1 // pred_check
      _
    $region27: #{lstm_model_forward.1} parent=1 // pred_check_branch
      %3921 = sbr.rel (0) target = $region29
    $region28: #{lstm_model_forward.1} parent=1 // pred_region
      _
    $region29: #{lstm_model_forward.1} parent=1 // pred_fallthru
      _
    // Predicated region
    $region30: #{lstm_model_forward.1} parent=1 // pred_check
      _
    $region31: #{lstm_model_forward.1} parent=1 // pred_check_branch
      %3923 = sbr.rel (0) target = $region33
    $region32: #{lstm_model_forward.1} parent=1 // pred_region
      _
    $region33: #{lstm_model_forward.1} parent=1 // pred_fallthru
      _
    %3924 = vsyncpa [#allocation4], 1

</llo_original>
